<compile_context>
chip_gen: v5e
topology: v5e:2x2
jax: 0.10.0
libtpu: 0.0.40
codegen_flags: <defaults>
</compile_context>

<pallas_src>
import functools

import jax
import jax.numpy as jnp
from jax.experimental import pallas as pl
from jax.experimental.pallas import tpu as pltpu

WIN = 5    # attention window hard-coded in DEC.forward (out[:, i-5:i, :])
SUB = 8    # f32 sublane tile height

VMEM = pl.BlockSpec(memory_space=pltpu.MemorySpace.VMEM)


def _shift_down(a, rows):
    """result[r] = a[r - rows] (zeros for r < rows); `rows` is a static
    multiple of SUB, so both pieces are sublane-aligned."""
    n = a.shape[0]
    return jnp.concatenate(
        [jnp.zeros((rows, a.shape[1]), a.dtype), a[:n - rows, :]], axis=0)


# ----------------------------------------------------------------------------
# Fused kernel: 2x 2-layer GRU (packed) + sliding-window attention + fc +
# dec_outputs + sigmoid.
# ----------------------------------------------------------------------------
def dec_fused_kernel(x_ref, misc_ref, w_hh_ref, w_ih1_ref, w_post_ref,
                     final_ref, out_scr, *, L, H, D, IN, Bp):
    f32 = jnp.float32
    H2, H4, H6, H12 = 2 * H, 4 * H, 6 * H, 12 * H
    N = L * Bp

    # ---- unpack the misc slab (biases + layer-0 input weight, one DMA) ------
    misc = misc_ref[...]                               # (2*SUB, 12H)
    b_in = misc[0:1, :H6]                              # (1, 6H)
    bfc2 = misc[3:4, :H2]                              # (1, 2H)
    bo = misc[3:4, H2:H2 + 1]                          # (1, 1)
    w_in = misc[SUB:SUB + IN, :H6]                     # (IN, 6H)
    # hoisted bias broadcasts (constant across the recurrence)
    b_gh = jnp.zeros((Bp, H12), f32) + misc[1:2, :]    # [b_hh0 | b_hh1]
    b_ih1 = jnp.zeros((Bp, H6), f32) + misc[2:3, :H6]

    # ---------------- phase A: packed 2-layer GRU recurrence -----------------
    # layer-0 input projection for ALL timesteps & both branches at once
    gi0_all = jnp.dot(x_ref[...], w_in, preferred_element_type=f32) + b_in

    w_hh = w_hh_ref[...]                               # (4H, 12H) block-diag
    w_ih1 = w_ih1_ref[...]                             # (2H, 6H)

    def gru_gates(gi, gh, h):
        # packed gate columns: [r_d1 r_d2 | z_d1 z_d2 | n_d1 n_d2]
        r = jax.nn.sigmoid(gi[:, :H2] + gh[:, :H2])
        z = jax.nn.sigmoid(gi[:, H2:H4] + gh[:, H2:H4])
        n = jnp.tanh(gi[:, H4:] + r * gh[:, H4:])
        return (1.0 - z) * n + z * h

    h0 = jnp.zeros((Bp, H2), f32)                      # [h0_d1 | h0_d2]
    h1 = jnp.zeros((Bp, H2), f32)                      # [h1_d1 | h1_d2]
    for t in range(L):                                 # static unroll (L = 12)
        # ONE fused hidden matmul for both layers & both branches (K = 4H)
        h_cat = jnp.concatenate([h0, h1], axis=1)      # (Bp, 4H)
        gh = jnp.dot(h_cat, w_hh, preferred_element_type=f32) + b_gh
        h0 = gru_gates(gi0_all[t * Bp:(t + 1) * Bp, :], gh[:, :H6], h0)
        gi1 = jnp.dot(h0, w_ih1, preferred_element_type=f32) + b_ih1
        h1 = gru_gates(gi1, gh[:, H6:], h1)
        out_scr[t * Bp:(t + 1) * Bp, :] = h1           # sublane-aligned store

    out_all = out_scr[...]                             # (N, 2H), both branches

    # --------- phase B: all post-recurrence projections in ONE matmul --------
    # w_post columns: [wfc_c (2H) | wfc_s (2H) | wa (4) | wo_a (1) | wo_b (1)]
    w_post = w_post_ref[...]
    proj = jnp.dot(out_all, w_post, preferred_element_type=f32)   # (N, 4H+6)
    p_all = proj[:, :H2]                     # context path:  out @ Wfc_c
    q_all = proj[:, H2:H4] + bfc2            # query path:    out @ Wfc_s + bfc
    la_e = proj[:, H4:H4 + 2]                # attention element-logit terms
    la_q = proj[:, H4 + 2:H4 + 4]            # attention query-logit terms

    # --------- phase C: sliding-window softmax + fc, fully vectorized --------
    logits, p_sh = [], []
    for j in range(WIN):
        sh = (WIN - j) * Bp                  # source timestep i-WIN+j for query i
        logits.append(_shift_down(la_e, sh) + la_q)    # (N, 2)
        p_sh.append(_shift_down(p_all, sh))            # (N, 2H)

    m = logits[0]
    for j in range(1, WIN):
        m = jnp.maximum(m, logits[j])
    es = [jnp.exp(lg - m) for lg in logits]
    tot = es[0]
    for j in range(1, WIN):
        tot = tot + es[j]
    inv = pl.reciprocal(tot, approx=True)              # EUP slot, off the VALU

    ctx = jnp.zeros((N, H2), f32)
    for j in range(WIN):
        a = es[j] * inv                                # (N, 2) attention weights
        a_b = jnp.concatenate(
            [jnp.broadcast_to(a[:, 0:1], (N, H)),
             jnp.broadcast_to(a[:, 1:2], (N, H))], axis=1)
        ctx = ctx + a_b * p_sh[j]
    att = ctx + q_all                                  # (N, 2H)

    # copy-through for timesteps < WIN (select full rows)
    row = jax.lax.broadcasted_iota(jnp.int32, (N, H2), 0)
    rnn = jnp.where(row < WIN * Bp, out_all, att)      # packed [rnn1 | rnn2]

    # --------- phase D: dec_outputs ('linear' act) + sigmoid, no scratch -----
    # branch-2 rows are read at timestep i+D (clamped to L-1 with the PyTorch
    # threshold i >= L-D-1); static, sublane-aligned row-block permutation.
    last = rnn[(L - 1) * Bp:, :]
    parts = []
    if L - 1 - D > 0:
        parts.append(rnn[D * Bp:(L - 1) * Bp, :])
    parts.extend([last] * min(D + 1, L))
    rnn_perm = jnp.concatenate(parts, axis=0)          # (N, 2H)

    wo_a = w_post[:, H4 + 4:H4 + 5]                    # [wo1 ; 0]
    wo_b = w_post[:, H4 + 5:H4 + 6]                    # [0 ; wo2]
    o = (jnp.dot(rnn, wo_a, preferred_element_type=f32)
         + jnp.dot(rnn_perm, wo_b, preferred_element_type=f32) + bo)
    final_ref[...] = jax.nn.sigmoid(o)                 # (N, 1)


# ----------------------------------------------------------------------------
# Weight packing helpers (plain JAX, wrapper side).
# ----------------------------------------------------------------------------
def _interleave_gate_cols(wT1, wT2, H):
    """Columns reordered to [r1 r2 | z1 z2 | n1 n2] (branch-packed gates)."""
    return jnp.concatenate([wT1[:, :H], wT2[:, :H],
                            wT1[:, H:2 * H], wT2[:, H:2 * H],
                            wT1[:, 2 * H:], wT2[:, 2 * H:]], axis=1)


def _blockdiag_gate_cols(wT1, wT2, H):
    """Block-diag over branches (rows) with gate-interleaved columns."""
    K = wT1.shape[0]
    z = jnp.zeros((K, H), jnp.float32)
    blocks = []
    for g in range(3):
        c1 = wT1[:, g * H:(g + 1) * H]
        c2 = wT2[:, g * H:(g + 1) * H]
        blocks.append(jnp.concatenate(
            [jnp.concatenate([c1, z], axis=1),     # rows for branch-1 hidden
             jnp.concatenate([z, c2], axis=1)],    # rows for branch-2 hidden
            axis=0))
    return jnp.concatenate(blocks, axis=1)          # (2K, 6H)


def _blockdiag2(m):
    z = jnp.zeros_like(m)
    return jnp.concatenate([jnp.concatenate([m, z], axis=1),
                            jnp.concatenate([z, m], axis=1)], axis=0)


# ----------------------------------------------------------------------------
# Forward wrapper.
# ----------------------------------------------------------------------------
@functools.partial(jax.jit, static_argnums=(2,))
def dec_forward(received, params, D):
    received = received.astype(jnp.float32)             # (B, L, IN)
    B, L, IN = received.shape
    H = params['dec1']['w_hh0'].shape[1]
    H2, H4, H6, H12 = 2 * H, 4 * H, 6 * H, 12 * H
    Bp = max(SUB, ((B + SUB - 1) // SUB) * SUB)          # sublane-padded batch

    d1, d2 = params['dec1'], params['dec2']
    w_in = _interleave_gate_cols(d1['w_ih0'].T, d2['w_ih0'].T, H)   # (IN, 6H)
    b_in = _interleave_gate_cols(d1['b_ih0'], d2['b_ih0'], H)
    w_hh0 = _blockdiag_gate_cols(d1['w_hh0'].T, d2['w_hh0'].T, H)   # (2H, 6H)
    b_hh0 = _interleave_gate_cols(d1['b_hh0'], d2['b_hh0'], H)
    w_ih1 = _blockdiag_gate_cols(d1['w_ih1'].T, d2['w_ih1'].T, H)
    b_ih1 = _interleave_gate_cols(d1['b_ih1'], d2['b_ih1'], H)
    w_hh1 = _blockdiag_gate_cols(d1['w_hh1'].T, d2['w_hh1'].T, H)
    b_hh1 = _interleave_gate_cols(d1['b_hh1'], d2['b_hh1'], H)

    # fused hidden weight: [h0 | h1] @ w_hh -> [gh0 | gh1]   (K = 4H = 128)
    zhh = jnp.zeros((H2, H6), jnp.float32)
    w_hh = jnp.concatenate(
        [jnp.concatenate([w_hh0, zhh], axis=1),
         jnp.concatenate([zhh, w_hh1], axis=1)], axis=0)            # (4H, 12H)

    # attention logit weight (both branches), fc weights, output head — packed
    # into one slab so phase B is a single matmul and a single DMA.
    wa_s = params['wa'][:, :H].T                                    # query term
    wa_e = params['wa'][:, H:].T                                    # element term
    zc = jnp.zeros((H, 1), jnp.float32)
    wa_pack = jnp.concatenate(
        [jnp.concatenate([wa_e, zc, wa_s, zc], axis=1),             # dec1 rows
         jnp.concatenate([zc, wa_e, zc, wa_s], axis=1)], axis=0)    # (2H, 4)
    wfc_c = _blockdiag2(params['wfc'][:, :H].T)                     # (2H, 2H)
    wfc_s = _blockdiag2(params['wfc'][:, H:].T)                     # (2H, 2H)
    wo_a = jnp.concatenate([params['wo'][:, :H].T, zc], axis=0)     # (2H, 1)
    wo_b = jnp.concatenate([zc, params['wo'][:, H:].T], axis=0)     # (2H, 1)
    w_post = jnp.concatenate([wfc_c, wfc_s, wa_pack, wo_a, wo_b], axis=1)

    # misc slab: all bias vectors + the tiny layer-0 input weight -> one DMA
    misc = jnp.zeros((2 * SUB, H12), jnp.float32)
    misc = misc.at[0, :H6].set(b_in[0])
    misc = misc.at[1, :H6].set(b_hh0[0])
    misc = misc.at[1, H6:].set(b_hh1[0])
    misc = misc.at[2, :H6].set(b_ih1[0])
    bfc2 = jnp.concatenate([params['bfc'], params['bfc']], axis=1)  # (1, 2H)
    misc = misc.at[3, :H2].set(bfc2[0])
    misc = misc.at[3, H2].set(params['bo'][0, 0])
    misc = misc.at[SUB:SUB + IN, :H6].set(w_in)

    # time-major input, batch padded to a full sublane tile
    x_tm = jnp.transpose(received, (1, 0, 2))                       # (L, B, IN)
    x = jnp.zeros((L, Bp, IN), jnp.float32).at[:, :B, :].set(x_tm)
    x = x.reshape(L * Bp, IN)

    kernel = functools.partial(dec_fused_kernel, L=L, H=H, D=D, IN=IN, Bp=Bp)
    final = pl.pallas_call(
        kernel,
        out_shape=jax.ShapeDtypeStruct((L * Bp, 1), jnp.float32),
        in_specs=[VMEM] * 5,
        out_specs=VMEM,
        scratch_shapes=[pltpu.VMEM((L * Bp, H2), jnp.float32)],     # GRU outputs
    )(x, misc, w_hh, w_ih1, w_post)

    final = final.reshape(L, Bp, 1)[:, :B, :]
    return jnp.transpose(final, (1, 0, 2))                          # (B, L, 1)


# ----------------------------------------------------------------------------
# Pure-JAX reference (same math) for a correctness check.
# ----------------------------------------------------------------------------
def _gru_ref(x, pp):
    B, L, _ = x.shape
    H = pp['w_hh0'].shape[1]

    def cell(x_t, h, wi, wh, bi, bh):
        gi = x_t @ wi.T + bi[0]
        gh = h @ wh.T + bh[0]
        r = jax.nn.sigmoid(gi[:, :H] + gh[:, :H])
        z = jax.nn.sigmoid(gi[:, H:2 * H] + gh[:, H:2 * H])
        n = jnp.tanh(gi[:, 2 * H:] + r * gh[:, 2 * H:])
        return (1 - z) * n + z * h

    h0 = jnp.zeros((B, H)); h1 = jnp.zeros((B, H)); outs = []
    for t in range(L):
        h0 = cell(x[:, t], h0, pp['w_ih0'], pp['w_hh0'], pp['b_ih0'], pp['b_hh0'])
        h1 = cell(h0, h1, pp['w_ih1'], pp['w_hh1'], pp['b_ih1'], pp['b_hh1'])
        outs.append(h1)
    return jnp.stack(outs, axis=1)


def ref_forward(x, p, D):
    B, L, _ = x.shape
    H = p['dec1']['w_hh0'].shape[1]
    out1, out2 = _gru_ref(x, p['dec1']), _gru_ref(x, p['dec2'])
    wa, wfc, bfc = p['wa'], p['wfc'], p['bfc']

    def attn_fc(out):
        rnn = [out[:, i] for i in range(min(WIN, L))]
        for i in range(WIN, L):
            s = out[:, i]
            win = out[:, i - WIN:i]
            logits = win @ wa[0, H:] + (s @ wa[0, :H])[:, None]
            a = jax.nn.softmax(logits, axis=-1)
            c = jnp.einsum('bj,bjh->bh', a, win)
            rnn.append(c @ wfc[:, :H].T + s @ wfc[:, H:].T + bfc[0])
        return jnp.stack(rnn, axis=1)

    r1, r2 = attn_fc(out1), attn_fc(out2)
    wo, bo = p['wo'], p['bo']
    outs = []
    for i in range(L):
        idx = L - 1 if i >= L - D - 1 else i + D
        o = r1[:, i] @ wo[0, :H] + r2[:, idx] @ wo[0, H:] + bo[0, 0]
        outs.append(o[:, None])
    return jax.nn.sigmoid(jnp.stack(outs, axis=1))


# ----------------------------------------------------------------------------
# Deterministic parameter init + driver
# ----------------------------------------------------------------------------
def _u(key, shape, scale):
    return jax.random.uniform(key, shape, jnp.float32, -scale, scale)


def make_gru_params(key, in_dim, H):
    ks = jax.random.split(key, 8)
    s = 1.0 / (H ** 0.5)
    return dict(
        w_ih0=_u(ks[0], (3 * H, in_dim), s), w_hh0=_u(ks[1], (3 * H, H), s),
        b_ih0=_u(ks[2], (1, 3 * H), s),      b_hh0=_u(ks[3], (1, 3 * H), s),
        w_ih1=_u(ks[4], (3 * H, H), s),      w_hh1=_u(ks[5], (3 * H, H), s),
        b_ih1=_u(ks[6], (1, 3 * H), s),      b_hh1=_u(ks[7], (1, 3 * H), s),
    )


if __name__ == "__main__":
    # args: block_len=12, dec_num_unit=32, code_rate_n/k=3, dec_num_layer=2, D=2
    B, L, H, IN, D = 2, 12, 32, 3, 2
    k = jax.random.split(jax.random.PRNGKey(0), 8)
    s2 = 1.0 / ((2 * H) ** 0.5)
    params = dict(
        dec1=make_gru_params(k[0], IN, H),
        dec2=make_gru_params(k[1], IN, H),
        wa=_u(k[2], (1, 2 * H), s2),         # Attention.attn (no bias)
        wfc=_u(k[3], (H, 2 * H), s2),        # self.fc weight
        bfc=_u(k[4], (1, H), s2),            # self.fc bias
        wo=_u(k[5], (1, 2 * H), s2),         # self.dec_outputs weight
        bo=_u(k[6], (1, 1), s2),             # self.dec_outputs bias
    )
    received = jax.random.normal(k[7], (B, L, IN), jnp.float32)

    out = jax.block_until_ready(dec_forward(received, params, D))
    ref = ref_forward(received, params, D)

    assert out.shape == (B, L, 1), out.shape
    assert bool(jnp.all(jnp.isfinite(out)))
    err = float(jnp.max(jnp.abs(out - ref)))
    assert jnp.allclose(out, ref, atol=1e-3, rtol=1e-3), err
    print("KERNEL_OK")
</pallas_src>

<mosaic_0001>
module attributes {stable_mosaic.version = 11 : i64} {
  func.func @dec_fused_kernel(%arg0: memref<96x3xf32, #tpu.memory_space<vmem>>, %arg1: memref<16x384xf32, #tpu.memory_space<vmem>>, %arg2: memref<128x384xf32, #tpu.memory_space<vmem>>, %arg3: memref<64x192xf32, #tpu.memory_space<vmem>>, %arg4: memref<64x134xf32, #tpu.memory_space<vmem>>, %arg5: memref<96x1xf32, #tpu.memory_space<vmem>>, %arg6: memref<96x64xf32, #tpu.memory_space<vmem>>) attributes {dimension_semantics = [], scalar_prefetch = 0 : i64, scratch_operands = 1 : i64, tpu.core_type = #tpu.core_type<tc>} {
    %c0 = arith.constant 0 : index
    %c0_0 = arith.constant 0 : index
    %0 = vector.load %arg1[%c0, %c0_0] : memref<16x384xf32, #tpu.memory_space<vmem>>, vector<16x384xf32>
    %1 = vector.extract_strided_slice %0 {offsets = [0, 0], sizes = [1, 192], strides = [1, 1]} : vector<16x384xf32> to vector<1x192xf32>
    %2 = vector.extract_strided_slice %0 {offsets = [3, 0], sizes = [1, 64], strides = [1, 1]} : vector<16x384xf32> to vector<1x64xf32>
    %3 = vector.extract_strided_slice %0 {offsets = [3, 64], sizes = [1, 1], strides = [1, 1]} : vector<16x384xf32> to vector<1x1xf32>
    %4 = vector.extract_strided_slice %0 {offsets = [8, 0], sizes = [3, 192], strides = [1, 1]} : vector<16x384xf32> to vector<3x192xf32>
    %cst = arith.constant 0.000000e+00 : f32
    %5 = vector.broadcast %cst : f32 to vector<8x384xf32>
    %6 = vector.extract_strided_slice %0 {offsets = [1, 0], sizes = [1, 384], strides = [1, 1]} : vector<16x384xf32> to vector<1x384xf32>
    %7 = vector.broadcast %6 : vector<1x384xf32> to vector<8x384xf32>
    %8 = arith.addf %5, %7 : vector<8x384xf32>
    %cst_1 = arith.constant 0.000000e+00 : f32
    %9 = vector.broadcast %cst_1 : f32 to vector<8x192xf32>
    %10 = vector.extract_strided_slice %0 {offsets = [2, 0], sizes = [1, 192], strides = [1, 1]} : vector<16x384xf32> to vector<1x192xf32>
    %11 = vector.broadcast %10 : vector<1x192xf32> to vector<8x192xf32>
    %12 = arith.addf %9, %11 : vector<8x192xf32>
    %c0_2 = arith.constant 0 : index
    %c0_3 = arith.constant 0 : index
    %13 = vector.load %arg0[%c0_2, %c0_3] : memref<96x3xf32, #tpu.memory_space<vmem>>, vector<96x3xf32>
    %cst_4 = arith.constant dense<0.000000e+00> : vector<96x192xf32>
    %14 = tpu.matmul %13, %4, %cst_4 {dimension_numbers = #tpu.dot_dimension_numbers<[1], [0], [0], [1], [0, 0, 1, 1], [], []>} : vector<96x3xf32>, vector<3x192xf32>, vector<96x192xf32> -> vector<96x192xf32>
    %15 = vector.broadcast %1 : vector<1x192xf32> to vector<96x192xf32>
    %16 = arith.addf %14, %15 : vector<96x192xf32>
    %c0_5 = arith.constant 0 : index
    %c0_6 = arith.constant 0 : index
    %17 = vector.load %arg2[%c0_5, %c0_6] : memref<128x384xf32, #tpu.memory_space<vmem>>, vector<128x384xf32>
    %c0_7 = arith.constant 0 : index
    %c0_8 = arith.constant 0 : index
    %18 = vector.load %arg3[%c0_7, %c0_8] : memref<64x192xf32, #tpu.memory_space<vmem>>, vector<64x192xf32>
    %cst_9 = arith.constant 0.000000e+00 : f32
    %19 = vector.broadcast %cst_9 : f32 to vector<8x64xf32>
    %cst_10 = arith.constant 0.000000e+00 : f32
    %20 = vector.broadcast %cst_10 : f32 to vector<8x64xf32>
    %21 = tpu.concatenate %19, %20 in 1 : vector<8x64xf32>, vector<8x64xf32> -> vector<8x128xf32>
    %cst_11 = arith.constant dense<0.000000e+00> : vector<8x384xf32>
    %22 = tpu.matmul %21, %17, %cst_11 {dimension_numbers = #tpu.dot_dimension_numbers<[1], [0], [0], [1], [0, 0, 1, 1], [], []>} : vector<8x128xf32>, vector<128x384xf32>, vector<8x384xf32> -> vector<8x384xf32>
    %23 = arith.addf %22, %8 : vector<8x384xf32>
    %24 = vector.extract_strided_slice %16 {offsets = [0, 0], sizes = [8, 192], strides = [1, 1]} : vector<96x192xf32> to vector<8x192xf32>
    %25 = vector.extract_strided_slice %23 {offsets = [0, 0], sizes = [8, 192], strides = [1, 1]} : vector<8x384xf32> to vector<8x192xf32>
    %26 = vector.extract_strided_slice %24 {offsets = [0, 0], sizes = [8, 64], strides = [1, 1]} : vector<8x192xf32> to vector<8x64xf32>
    %27 = vector.extract_strided_slice %25 {offsets = [0, 0], sizes = [8, 64], strides = [1, 1]} : vector<8x192xf32> to vector<8x64xf32>
    %28 = arith.addf %26, %27 : vector<8x64xf32>
    %29 = arith.negf %28 : vector<8x64xf32>
    %30 = math.exp %29 : vector<8x64xf32>
    %cst_12 = arith.constant 1.000000e+00 : f32
    %31 = vector.broadcast %cst_12 : f32 to vector<8x64xf32>
    %32 = arith.addf %31, %30 : vector<8x64xf32>
    %33 = arith.divf %31, %32 : vector<8x64xf32>
    %34 = vector.extract_strided_slice %24 {offsets = [0, 64], sizes = [8, 64], strides = [1, 1]} : vector<8x192xf32> to vector<8x64xf32>
    %35 = vector.extract_strided_slice %25 {offsets = [0, 64], sizes = [8, 64], strides = [1, 1]} : vector<8x192xf32> to vector<8x64xf32>
    %36 = arith.addf %34, %35 : vector<8x64xf32>
    %37 = arith.negf %36 : vector<8x64xf32>
    %38 = math.exp %37 : vector<8x64xf32>
    %cst_13 = arith.constant 1.000000e+00 : f32
    %39 = vector.broadcast %cst_13 : f32 to vector<8x64xf32>
    %40 = arith.addf %39, %38 : vector<8x64xf32>
    %41 = arith.divf %39, %40 : vector<8x64xf32>
    %42 = vector.extract_strided_slice %24 {offsets = [0, 128], sizes = [8, 64], strides = [1, 1]} : vector<8x192xf32> to vector<8x64xf32>
    %43 = vector.extract_strided_slice %25 {offsets = [0, 128], sizes = [8, 64], strides = [1, 1]} : vector<8x192xf32> to vector<8x64xf32>
    %44 = arith.mulf %33, %43 : vector<8x64xf32>
    %45 = arith.addf %42, %44 : vector<8x64xf32>
    %46 = math.tanh %45 : vector<8x64xf32>
    %cst_14 = arith.constant 1.000000e+00 : f32
    %47 = vector.broadcast %cst_14 : f32 to vector<8x64xf32>
    %48 = arith.subf %47, %41 : vector<8x64xf32>
    %49 = arith.mulf %48, %46 : vector<8x64xf32>
    %50 = arith.mulf %41, %19 : vector<8x64xf32>
    %51 = arith.addf %49, %50 : vector<8x64xf32>
    %cst_15 = arith.constant dense<0.000000e+00> : vector<8x192xf32>
    %52 = tpu.matmul %51, %18, %cst_15 {dimension_numbers = #tpu.dot_dimension_numbers<[1], [0], [0], [1], [0, 0, 1, 1], [], []>} : vector<8x64xf32>, vector<64x192xf32>, vector<8x192xf32> -> vector<8x192xf32>
    %53 = arith.addf %52, %12 : vector<8x192xf32>
    %54 = vector.extract_strided_slice %23 {offsets = [0, 192], sizes = [8, 192], strides = [1, 1]} : vector<8x384xf32> to vector<8x192xf32>
    %55 = vector.extract_strided_slice %53 {offsets = [0, 0], sizes = [8, 64], strides = [1, 1]} : vector<8x192xf32> to vector<8x64xf32>
    %56 = vector.extract_strided_slice %54 {offsets = [0, 0], sizes = [8, 64], strides = [1, 1]} : vector<8x192xf32> to vector<8x64xf32>
    %57 = arith.addf %55, %56 : vector<8x64xf32>
    %58 = arith.negf %57 : vector<8x64xf32>
    %59 = math.exp %58 : vector<8x64xf32>
    %cst_16 = arith.constant 1.000000e+00 : f32
    %60 = vector.broadcast %cst_16 : f32 to vector<8x64xf32>
    %61 = arith.addf %60, %59 : vector<8x64xf32>
    %62 = arith.divf %60, %61 : vector<8x64xf32>
    %63 = vector.extract_strided_slice %53 {offsets = [0, 64], sizes = [8, 64], strides = [1, 1]} : vector<8x192xf32> to vector<8x64xf32>
    %64 = vector.extract_strided_slice %54 {offsets = [0, 64], sizes = [8, 64], strides = [1, 1]} : vector<8x192xf32> to vector<8x64xf32>
    %65 = arith.addf %63, %64 : vector<8x64xf32>
    %66 = arith.negf %65 : vector<8x64xf32>
    %67 = math.exp %66 : vector<8x64xf32>
    %cst_17 = arith.constant 1.000000e+00 : f32
    %68 = vector.broadcast %cst_17 : f32 to vector<8x64xf32>
    %69 = arith.addf %68, %67 : vector<8x64xf32>
    %70 = arith.divf %68, %69 : vector<8x64xf32>
    %71 = vector.extract_strided_slice %53 {offsets = [0, 128], sizes = [8, 64], strides = [1, 1]} : vector<8x192xf32> to vector<8x64xf32>
    %72 = vector.extract_strided_slice %54 {offsets = [0, 128], sizes = [8, 64], strides = [1, 1]} : vector<8x192xf32> to vector<8x64xf32>
    %73 = arith.mulf %62, %72 : vector<8x64xf32>
    %74 = arith.addf %71, %73 : vector<8x64xf32>
    %75 = math.tanh %74 : vector<8x64xf32>
    %cst_18 = arith.constant 1.000000e+00 : f32
    %76 = vector.broadcast %cst_18 : f32 to vector<8x64xf32>
    %77 = arith.subf %76, %70 : vector<8x64xf32>
    %78 = arith.mulf %77, %75 : vector<8x64xf32>
    %79 = arith.mulf %70, %20 : vector<8x64xf32>
    %80 = arith.addf %78, %79 : vector<8x64xf32>
    %c0_19 = arith.constant 0 : index
    %c0_20 = arith.constant 0 : index
    %81 = vector.load %arg6[%c0_19, %c0_20] : memref<96x64xf32, #tpu.memory_space<vmem>>, vector<8x64xf32>
    tpu.vector_store %arg6[%c0_19, %c0_20], %80 {strides = array<i32>} : memref<96x64xf32, #tpu.memory_space<vmem>>, vector<8x64xf32>,
    %82 = tpu.concatenate %51, %80 in 1 : vector<8x64xf32>, vector<8x64xf32> -> vector<8x128xf32>
    %cst_21 = arith.constant dense<0.000000e+00> : vector<8x384xf32>
    %83 = tpu.matmul %82, %17, %cst_21 {dimension_numbers = #tpu.dot_dimension_numbers<[1], [0], [0], [1], [0, 0, 1, 1], [], []>} : vector<8x128xf32>, vector<128x384xf32>, vector<8x384xf32> -> vector<8x384xf32>
    %84 = arith.addf %83, %8 : vector<8x384xf32>
    %85 = vector.extract_strided_slice %16 {offsets = [8, 0], sizes = [8, 192], strides = [1, 1]} : vector<96x192xf32> to vector<8x192xf32>
    %86 = vector.extract_strided_slice %84 {offsets = [0, 0], sizes = [8, 192], strides = [1, 1]} : vector<8x384xf32> to vector<8x192xf32>
    %87 = vector.extract_strided_slice %85 {offsets = [0, 0], sizes = [8, 64], strides = [1, 1]} : vector<8x192xf32> to vector<8x64xf32>
    %88 = vector.extract_strided_slice %86 {offsets = [0, 0], sizes = [8, 64], strides = [1, 1]} : vector<8x192xf32> to vector<8x64xf32>
    %89 = arith.addf %87, %88 : vector<8x64xf32>
    %90 = arith.negf %89 : vector<8x64xf32>
    %91 = math.exp %90 : vector<8x64xf32>
    %cst_22 = arith.constant 1.000000e+00 : f32
    %92 = vector.broadcast %cst_22 : f32 to vector<8x64xf32>
    %93 = arith.addf %92, %91 : vector<8x64xf32>
    %94 = arith.divf %92, %93 : vector<8x64xf32>
    %95 = vector.extract_strided_slice %85 {offsets = [0, 64], sizes = [8, 64], strides = [1, 1]} : vector<8x192xf32> to vector<8x64xf32>
    %96 = vector.extract_strided_slice %86 {offsets = [0, 64], sizes = [8, 64], strides = [1, 1]} : vector<8x192xf32> to vector<8x64xf32>
    %97 = arith.addf %95, %96 : vector<8x64xf32>
    %98 = arith.negf %97 : vector<8x64xf32>
    %99 = math.exp %98 : vector<8x64xf32>
    %cst_23 = arith.constant 1.000000e+00 : f32
    %100 = vector.broadcast %cst_23 : f32 to vector<8x64xf32>
    %101 = arith.addf %100, %99 : vector<8x64xf32>
    %102 = arith.divf %100, %101 : vector<8x64xf32>
    %103 = vector.extract_strided_slice %85 {offsets = [0, 128], sizes = [8, 64], strides = [1, 1]} : vector<8x192xf32> to vector<8x64xf32>
    %104 = vector.extract_strided_slice %86 {offsets = [0, 128], sizes = [8, 64], strides = [1, 1]} : vector<8x192xf32> to vector<8x64xf32>
    %105 = arith.mulf %94, %104 : vector<8x64xf32>
    %106 = arith.addf %103, %105 : vector<8x64xf32>
    %107 = math.tanh %106 : vector<8x64xf32>
    %cst_24 = arith.constant 1.000000e+00 : f32
    %108 = vector.broadcast %cst_24 : f32 to vector<8x64xf32>
    %109 = arith.subf %108, %102 : vector<8x64xf32>
    %110 = arith.mulf %109, %107 : vector<8x64xf32>
    %111 = arith.mulf %102, %51 : vector<8x64xf32>
    %112 = arith.addf %110, %111 : vector<8x64xf32>
    %cst_25 = arith.constant dense<0.000000e+00> : vector<8x192xf32>
    %113 = tpu.matmul %112, %18, %cst_25 {dimension_numbers = #tpu.dot_dimension_numbers<[1], [0], [0], [1], [0, 0, 1, 1], [], []>} : vector<8x64xf32>, vector<64x192xf32>, vector<8x192xf32> -> vector<8x192xf32>
    %114 = arith.addf %113, %12 : vector<8x192xf32>
    %115 = vector.extract_strided_slice %84 {offsets = [0, 192], sizes = [8, 192], strides = [1, 1]} : vector<8x384xf32> to vector<8x192xf32>
    %116 = vector.extract_strided_slice %114 {offsets = [0, 0], sizes = [8, 64], strides = [1, 1]} : vector<8x192xf32> to vector<8x64xf32>
    %117 = vector.extract_strided_slice %115 {offsets = [0, 0], sizes = [8, 64], strides = [1, 1]} : vector<8x192xf32> to vector<8x64xf32>
    %118 = arith.addf %116, %117 : vector<8x64xf32>
    %119 = arith.negf %118 : vector<8x64xf32>
    %120 = math.exp %119 : vector<8x64xf32>
    %cst_26 = arith.constant 1.000000e+00 : f32
    %121 = vector.broadcast %cst_26 : f32 to vector<8x64xf32>
    %122 = arith.addf %121, %120 : vector<8x64xf32>
    %123 = arith.divf %121, %122 : vector<8x64xf32>
    %124 = vector.extract_strided_slice %114 {offsets = [0, 64], sizes = [8, 64], strides = [1, 1]} : vector<8x192xf32> to vector<8x64xf32>
    %125 = vector.extract_strided_slice %115 {offsets = [0, 64], sizes = [8, 64], strides = [1, 1]} : vector<8x192xf32> to vector<8x64xf32>
    %126 = arith.addf %124, %125 : vector<8x64xf32>
    %127 = arith.negf %126 : vector<8x64xf32>
    %128 = math.exp %127 : vector<8x64xf32>
    %cst_27 = arith.constant 1.000000e+00 : f32
    %129 = vector.broadcast %cst_27 : f32 to vector<8x64xf32>
    %130 = arith.addf %129, %128 : vector<8x64xf32>
    %131 = arith.divf %129, %130 : vector<8x64xf32>
    %132 = vector.extract_strided_slice %114 {offsets = [0, 128], sizes = [8, 64], strides = [1, 1]} : vector<8x192xf32> to vector<8x64xf32>
    %133 = vector.extract_strided_slice %115 {offsets = [0, 128], sizes = [8, 64], strides = [1, 1]} : vector<8x192xf32> to vector<8x64xf32>
    %134 = arith.mulf %123, %133 : vector<8x64xf32>
    %135 = arith.addf %132, %134 : vector<8x64xf32>
    %136 = math.tanh %135 : vector<8x64xf32>
    %cst_28 = arith.constant 1.000000e+00 : f32
    %137 = vector.broadcast %cst_28 : f32 to vector<8x64xf32>
    %138 = arith.subf %137, %131 : vector<8x64xf32>
    %139 = arith.mulf %138, %136 : vector<8x64xf32>
    %140 = arith.mulf %131, %80 : vector<8x64xf32>
    %141 = arith.addf %139, %140 : vector<8x64xf32>
    %c8 = arith.constant 8 : index
    %c0_29 = arith.constant 0 : index
    %142 = vector.load %arg6[%c8, %c0_29] : memref<96x64xf32, #tpu.memory_space<vmem>>, vector<8x64xf32>
    tpu.vector_store %arg6[%c8, %c0_29], %141 {strides = array<i32>} : memref<96x64xf32, #tpu.memory_space<vmem>>, vector<8x64xf32>,
    %143 = tpu.concatenate %112, %141 in 1 : vector<8x64xf32>, vector<8x64xf32> -> vector<8x128xf32>
    %cst_30 = arith.constant dense<0.000000e+00> : vector<8x384xf32>
    %144 = tpu.matmul %143, %17, %cst_30 {dimension_numbers = #tpu.dot_dimension_numbers<[1], [0], [0], [1], [0, 0, 1, 1], [], []>} : vector<8x128xf32>, vector<128x384xf32>, vector<8x384xf32> -> vector<8x384xf32>
    %145 = arith.addf %144, %8 : vector<8x384xf32>
    %146 = vector.extract_strided_slice %16 {offsets = [16, 0], sizes = [8, 192], strides = [1, 1]} : vector<96x192xf32> to vector<8x192xf32>
    %147 = vector.extract_strided_slice %145 {offsets = [0, 0], sizes = [8, 192], strides = [1, 1]} : vector<8x384xf32> to vector<8x192xf32>
    %148 = vector.extract_strided_slice %146 {offsets = [0, 0], sizes = [8, 64], strides = [1, 1]} : vector<8x192xf32> to vector<8x64xf32>
    %149 = vector.extract_strided_slice %147 {offsets = [0, 0], sizes = [8, 64], strides = [1, 1]} : vector<8x192xf32> to vector<8x64xf32>
    %150 = arith.addf %148, %149 : vector<8x64xf32>
    %151 = arith.negf %150 : vector<8x64xf32>
    %152 = math.exp %151 : vector<8x64xf32>
    %cst_31 = arith.constant 1.000000e+00 : f32
    %153 = vector.broadcast %cst_31 : f32 to vector<8x64xf32>
    %154 = arith.addf %153, %152 : vector<8x64xf32>
    %155 = arith.divf %153, %154 : vector<8x64xf32>
    %156 = vector.extract_strided_slice %146 {offsets = [0, 64], sizes = [8, 64], strides = [1, 1]} : vector<8x192xf32> to vector<8x64xf32>
    %157 = vector.extract_strided_slice %147 {offsets = [0, 64], sizes = [8, 64], strides = [1, 1]} : vector<8x192xf32> to vector<8x64xf32>
    %158 = arith.addf %156, %157 : vector<8x64xf32>
    %159 = arith.negf %158 : vector<8x64xf32>
    %160 = math.exp %159 : vector<8x64xf32>
    %cst_32 = arith.constant 1.000000e+00 : f32
    %161 = vector.broadcast %cst_32 : f32 to vector<8x64xf32>
    %162 = arith.addf %161, %160 : vector<8x64xf32>
    %163 = arith.divf %161, %162 : vector<8x64xf32>
    %164 = vector.extract_strided_slice %146 {offsets = [0, 128], sizes = [8, 64], strides = [1, 1]} : vector<8x192xf32> to vector<8x64xf32>
    %165 = vector.extract_strided_slice %147 {offsets = [0, 128], sizes = [8, 64], strides = [1, 1]} : vector<8x192xf32> to vector<8x64xf32>
    %166 = arith.mulf %155, %165 : vector<8x64xf32>
    %167 = arith.addf %164, %166 : vector<8x64xf32>
    %168 = math.tanh %167 : vector<8x64xf32>
    %cst_33 = arith.constant 1.000000e+00 : f32
    %169 = vector.broadcast %cst_33 : f32 to vector<8x64xf32>
    %170 = arith.subf %169, %163 : vector<8x64xf32>
    %171 = arith.mulf %170, %168 : vector<8x64xf32>
    %172 = arith.mulf %163, %112 : vector<8x64xf32>
    %173 = arith.addf %171, %172 : vector<8x64xf32>
    %cst_34 = arith.constant dense<0.000000e+00> : vector<8x192xf32>
    %174 = tpu.matmul %173, %18, %cst_34 {dimension_numbers = #tpu.dot_dimension_numbers<[1], [0], [0], [1], [0, 0, 1, 1], [], []>} : vector<8x64xf32>, vector<64x192xf32>, vector<8x192xf32> -> vector<8x192xf32>
    %175 = arith.addf %174, %12 : vector<8x192xf32>
    %176 = vector.extract_strided_slice %145 {offsets = [0, 192], sizes = [8, 192], strides = [1, 1]} : vector<8x384xf32> to vector<8x192xf32>
    %177 = vector.extract_strided_slice %175 {offsets = [0, 0], sizes = [8, 64], strides = [1, 1]} : vector<8x192xf32> to vector<8x64xf32>
    %178 = vector.extract_strided_slice %176 {offsets = [0, 0], sizes = [8, 64], strides = [1, 1]} : vector<8x192xf32> to vector<8x64xf32>
    %179 = arith.addf %177, %178 : vector<8x64xf32>
    %180 = arith.negf %179 : vector<8x64xf32>
    %181 = math.exp %180 : vector<8x64xf32>
    %cst_35 = arith.constant 1.000000e+00 : f32
    %182 = vector.broadcast %cst_35 : f32 to vector<8x64xf32>
    %183 = arith.addf %182, %181 : vector<8x64xf32>
    %184 = arith.divf %182, %183 : vector<8x64xf32>
    %185 = vector.extract_strided_slice %175 {offsets = [0, 64], sizes = [8, 64], strides = [1, 1]} : vector<8x192xf32> to vector<8x64xf32>
    %186 = vector.extract_strided_slice %176 {offsets = [0, 64], sizes = [8, 64], strides = [1, 1]} : vector<8x192xf32> to vector<8x64xf32>
    %187 = arith.addf %185, %186 : vector<8x64xf32>
    %188 = arith.negf %187 : vector<8x64xf32>
    %189 = math.exp %188 : vector<8x64xf32>
    %cst_36 = arith.constant 1.000000e+00 : f32
    %190 = vector.broadcast %cst_36 : f32 to vector<8x64xf32>
    %191 = arith.addf %190, %189 : vector<8x64xf32>
    %192 = arith.divf %190, %191 : vector<8x64xf32>
    %193 = vector.extract_strided_slice %175 {offsets = [0, 128], sizes = [8, 64], strides = [1, 1]} : vector<8x192xf32> to vector<8x64xf32>
    %194 = vector.extract_strided_slice %176 {offsets = [0, 128], sizes = [8, 64], strides = [1, 1]} : vector<8x192xf32> to vector<8x64xf32>
    %195 = arith.mulf %184, %194 : vector<8x64xf32>
    %196 = arith.addf %193, %195 : vector<8x64xf32>
    %197 = math.tanh %196 : vector<8x64xf32>
    %cst_37 = arith.constant 1.000000e+00 : f32
    %198 = vector.broadcast %cst_37 : f32 to vector<8x64xf32>
    %199 = arith.subf %198, %192 : vector<8x64xf32>
    %200 = arith.mulf %199, %197 : vector<8x64xf32>
    %201 = arith.mulf %192, %141 : vector<8x64xf32>
    %202 = arith.addf %200, %201 : vector<8x64xf32>
    %c16 = arith.constant 16 : index
    %c0_38 = arith.constant 0 : index
    %203 = vector.load %arg6[%c16, %c0_38] : memref<96x64xf32, #tpu.memory_space<vmem>>, vector<8x64xf32>
    tpu.vector_store %arg6[%c16, %c0_38], %202 {strides = array<i32>} : memref<96x64xf32, #tpu.memory_space<vmem>>, vector<8x64xf32>,
    %204 = tpu.concatenate %173, %202 in 1 : vector<8x64xf32>, vector<8x64xf32> -> vector<8x128xf32>
    %cst_39 = arith.constant dense<0.000000e+00> : vector<8x384xf32>
    %205 = tpu.matmul %204, %17, %cst_39 {dimension_numbers = #tpu.dot_dimension_numbers<[1], [0], [0], [1], [0, 0, 1, 1], [], []>} : vector<8x128xf32>, vector<128x384xf32>, vector<8x384xf32> -> vector<8x384xf32>
    %206 = arith.addf %205, %8 : vector<8x384xf32>
    %207 = vector.extract_strided_slice %16 {offsets = [24, 0], sizes = [8, 192], strides = [1, 1]} : vector<96x192xf32> to vector<8x192xf32>
    %208 = vector.extract_strided_slice %206 {offsets = [0, 0], sizes = [8, 192], strides = [1, 1]} : vector<8x384xf32> to vector<8x192xf32>
    %209 = vector.extract_strided_slice %207 {offsets = [0, 0], sizes = [8, 64], strides = [1, 1]} : vector<8x192xf32> to vector<8x64xf32>
    %210 = vector.extract_strided_slice %208 {offsets = [0, 0], sizes = [8, 64], strides = [1, 1]} : vector<8x192xf32> to vector<8x64xf32>
    %211 = arith.addf %209, %210 : vector<8x64xf32>
    %212 = arith.negf %211 : vector<8x64xf32>
    %213 = math.exp %212 : vector<8x64xf32>
    %cst_40 = arith.constant 1.000000e+00 : f32
    %214 = vector.broadcast %cst_40 : f32 to vector<8x64xf32>
    %215 = arith.addf %214, %213 : vector<8x64xf32>
    %216 = arith.divf %214, %215 : vector<8x64xf32>
    %217 = vector.extract_strided_slice %207 {offsets = [0, 64], sizes = [8, 64], strides = [1, 1]} : vector<8x192xf32> to vector<8x64xf32>
    %218 = vector.extract_strided_slice %208 {offsets = [0, 64], sizes = [8, 64], strides = [1, 1]} : vector<8x192xf32> to vector<8x64xf32>
    %219 = arith.addf %217, %218 : vector<8x64xf32>
    %220 = arith.negf %219 : vector<8x64xf32>
    %221 = math.exp %220 : vector<8x64xf32>
    %cst_41 = arith.constant 1.000000e+00 : f32
    %222 = vector.broadcast %cst_41 : f32 to vector<8x64xf32>
    %223 = arith.addf %222, %221 : vector<8x64xf32>
    %224 = arith.divf %222, %223 : vector<8x64xf32>
    %225 = vector.extract_strided_slice %207 {offsets = [0, 128], sizes = [8, 64], strides = [1, 1]} : vector<8x192xf32> to vector<8x64xf32>
    %226 = vector.extract_strided_slice %208 {offsets = [0, 128], sizes = [8, 64], strides = [1, 1]} : vector<8x192xf32> to vector<8x64xf32>
    %227 = arith.mulf %216, %226 : vector<8x64xf32>
    %228 = arith.addf %225, %227 : vector<8x64xf32>
    %229 = math.tanh %228 : vector<8x64xf32>
    %cst_42 = arith.constant 1.000000e+00 : f32
    %230 = vector.broadcast %cst_42 : f32 to vector<8x64xf32>
    %231 = arith.subf %230, %224 : vector<8x64xf32>
    %232 = arith.mulf %231, %229 : vector<8x64xf32>
    %233 = arith.mulf %224, %173 : vector<8x64xf32>
    %234 = arith.addf %232, %233 : vector<8x64xf32>
    %cst_43 = arith.constant dense<0.000000e+00> : vector<8x192xf32>
    %235 = tpu.matmul %234, %18, %cst_43 {dimension_numbers = #tpu.dot_dimension_numbers<[1], [0], [0], [1], [0, 0, 1, 1], [], []>} : vector<8x64xf32>, vector<64x192xf32>, vector<8x192xf32> -> vector<8x192xf32>
    %236 = arith.addf %235, %12 : vector<8x192xf32>
    %237 = vector.extract_strided_slice %206 {offsets = [0, 192], sizes = [8, 192], strides = [1, 1]} : vector<8x384xf32> to vector<8x192xf32>
    %238 = vector.extract_strided_slice %236 {offsets = [0, 0], sizes = [8, 64], strides = [1, 1]} : vector<8x192xf32> to vector<8x64xf32>
    %239 = vector.extract_strided_slice %237 {offsets = [0, 0], sizes = [8, 64], strides = [1, 1]} : vector<8x192xf32> to vector<8x64xf32>
    %240 = arith.addf %238, %239 : vector<8x64xf32>
    %241 = arith.negf %240 : vector<8x64xf32>
    %242 = math.exp %241 : vector<8x64xf32>
    %cst_44 = arith.constant 1.000000e+00 : f32
    %243 = vector.broadcast %cst_44 : f32 to vector<8x64xf32>
    %244 = arith.addf %243, %242 : vector<8x64xf32>
    %245 = arith.divf %243, %244 : vector<8x64xf32>
    %246 = vector.extract_strided_slice %236 {offsets = [0, 64], sizes = [8, 64], strides = [1, 1]} : vector<8x192xf32> to vector<8x64xf32>
    %247 = vector.extract_strided_slice %237 {offsets = [0, 64], sizes = [8, 64], strides = [1, 1]} : vector<8x192xf32> to vector<8x64xf32>
    %248 = arith.addf %246, %247 : vector<8x64xf32>
    %249 = arith.negf %248 : vector<8x64xf32>
    %250 = math.exp %249 : vector<8x64xf32>
    %cst_45 = arith.constant 1.000000e+00 : f32
    %251 = vector.broadcast %cst_45 : f32 to vector<8x64xf32>
    %252 = arith.addf %251, %250 : vector<8x64xf32>
    %253 = arith.divf %251, %252 : vector<8x64xf32>
    %254 = vector.extract_strided_slice %236 {offsets = [0, 128], sizes = [8, 64], strides = [1, 1]} : vector<8x192xf32> to vector<8x64xf32>
    %255 = vector.extract_strided_slice %237 {offsets = [0, 128], sizes = [8, 64], strides = [1, 1]} : vector<8x192xf32> to vector<8x64xf32>
    %256 = arith.mulf %245, %255 : vector<8x64xf32>
    %257 = arith.addf %254, %256 : vector<8x64xf32>
    %258 = math.tanh %257 : vector<8x64xf32>
    %cst_46 = arith.constant 1.000000e+00 : f32
    %259 = vector.broadcast %cst_46 : f32 to vector<8x64xf32>
    %260 = arith.subf %259, %253 : vector<8x64xf32>
    %261 = arith.mulf %260, %258 : vector<8x64xf32>
    %262 = arith.mulf %253, %202 : vector<8x64xf32>
    %263 = arith.addf %261, %262 : vector<8x64xf32>
    %c24 = arith.constant 24 : index
    %c0_47 = arith.constant 0 : index
    %264 = vector.load %arg6[%c24, %c0_47] : memref<96x64xf32, #tpu.memory_space<vmem>>, vector<8x64xf32>
    tpu.vector_store %arg6[%c24, %c0_47], %263 {strides = array<i32>} : memref<96x64xf32, #tpu.memory_space<vmem>>, vector<8x64xf32>,
    %265 = tpu.concatenate %234, %263 in 1 : vector<8x64xf32>, vector<8x64xf32> -> vector<8x128xf32>
    %cst_48 = arith.constant dense<0.000000e+00> : vector<8x384xf32>
    %266 = tpu.matmul %265, %17, %cst_48 {dimension_numbers = #tpu.dot_dimension_numbers<[1], [0], [0], [1], [0, 0, 1, 1], [], []>} : vector<8x128xf32>, vector<128x384xf32>, vector<8x384xf32> -> vector<8x384xf32>
    %267 = arith.addf %266, %8 : vector<8x384xf32>
    %268 = vector.extract_strided_slice %16 {offsets = [32, 0], sizes = [8, 192], strides = [1, 1]} : vector<96x192xf32> to vector<8x192xf32>
    %269 = vector.extract_strided_slice %267 {offsets = [0, 0], sizes = [8, 192], strides = [1, 1]} : vector<8x384xf32> to vector<8x192xf32>
    %270 = vector.extract_strided_slice %268 {offsets = [0, 0], sizes = [8, 64], strides = [1, 1]} : vector<8x192xf32> to vector<8x64xf32>
    %271 = vector.extract_strided_slice %269 {offsets = [0, 0], sizes = [8, 64], strides = [1, 1]} : vector<8x192xf32> to vector<8x64xf32>
    %272 = arith.addf %270, %271 : vector<8x64xf32>
    %273 = arith.negf %272 : vector<8x64xf32>
    %274 = math.exp %273 : vector<8x64xf32>
    %cst_49 = arith.constant 1.000000e+00 : f32
    %275 = vector.broadcast %cst_49 : f32 to vector<8x64xf32>
    %276 = arith.addf %275, %274 : vector<8x64xf32>
    %277 = arith.divf %275, %276 : vector<8x64xf32>
    %278 = vector.extract_strided_slice %268 {offsets = [0, 64], sizes = [8, 64], strides = [1, 1]} : vector<8x192xf32> to vector<8x64xf32>
    %279 = vector.extract_strided_slice %269 {offsets = [0, 64], sizes = [8, 64], strides = [1, 1]} : vector<8x192xf32> to vector<8x64xf32>
    %280 = arith.addf %278, %279 : vector<8x64xf32>
    %281 = arith.negf %280 : vector<8x64xf32>
    %282 = math.exp %281 : vector<8x64xf32>
    %cst_50 = arith.constant 1.000000e+00 : f32
    %283 = vector.broadcast %cst_50 : f32 to vector<8x64xf32>
    %284 = arith.addf %283, %282 : vector<8x64xf32>
    %285 = arith.divf %283, %284 : vector<8x64xf32>
    %286 = vector.extract_strided_slice %268 {offsets = [0, 128], sizes = [8, 64], strides = [1, 1]} : vector<8x192xf32> to vector<8x64xf32>
    %287 = vector.extract_strided_slice %269 {offsets = [0, 128], sizes = [8, 64], strides = [1, 1]} : vector<8x192xf32> to vector<8x64xf32>
    %288 = arith.mulf %277, %287 : vector<8x64xf32>
    %289 = arith.addf %286, %288 : vector<8x64xf32>
    %290 = math.tanh %289 : vector<8x64xf32>
    %cst_51 = arith.constant 1.000000e+00 : f32
    %291 = vector.broadcast %cst_51 : f32 to vector<8x64xf32>
    %292 = arith.subf %291, %285 : vector<8x64xf32>
    %293 = arith.mulf %292, %290 : vector<8x64xf32>
    %294 = arith.mulf %285, %234 : vector<8x64xf32>
    %295 = arith.addf %293, %294 : vector<8x64xf32>
    %cst_52 = arith.constant dense<0.000000e+00> : vector<8x192xf32>
    %296 = tpu.matmul %295, %18, %cst_52 {dimension_numbers = #tpu.dot_dimension_numbers<[1], [0], [0], [1], [0, 0, 1, 1], [], []>} : vector<8x64xf32>, vector<64x192xf32>, vector<8x192xf32> -> vector<8x192xf32>
    %297 = arith.addf %296, %12 : vector<8x192xf32>
    %298 = vector.extract_strided_slice %267 {offsets = [0, 192], sizes = [8, 192], strides = [1, 1]} : vector<8x384xf32> to vector<8x192xf32>
    %299 = vector.extract_strided_slice %297 {offsets = [0, 0], sizes = [8, 64], strides = [1, 1]} : vector<8x192xf32> to vector<8x64xf32>
    %300 = vector.extract_strided_slice %298 {offsets = [0, 0], sizes = [8, 64], strides = [1, 1]} : vector<8x192xf32> to vector<8x64xf32>
    %301 = arith.addf %299, %300 : vector<8x64xf32>
    %302 = arith.negf %301 : vector<8x64xf32>
    %303 = math.exp %302 : vector<8x64xf32>
    %cst_53 = arith.constant 1.000000e+00 : f32
    %304 = vector.broadcast %cst_53 : f32 to vector<8x64xf32>
    %305 = arith.addf %304, %303 : vector<8x64xf32>
    %306 = arith.divf %304, %305 : vector<8x64xf32>
    %307 = vector.extract_strided_slice %297 {offsets = [0, 64], sizes = [8, 64], strides = [1, 1]} : vector<8x192xf32> to vector<8x64xf32>
    %308 = vector.extract_strided_slice %298 {offsets = [0, 64], sizes = [8, 64], strides = [1, 1]} : vector<8x192xf32> to vector<8x64xf32>
    %309 = arith.addf %307, %308 : vector<8x64xf32>
    %310 = arith.negf %309 : vector<8x64xf32>
    %311 = math.exp %310 : vector<8x64xf32>
    %cst_54 = arith.constant 1.000000e+00 : f32
    %312 = vector.broadcast %cst_54 : f32 to vector<8x64xf32>
    %313 = arith.addf %312, %311 : vector<8x64xf32>
    %314 = arith.divf %312, %313 : vector<8x64xf32>
    %315 = vector.extract_strided_slice %297 {offsets = [0, 128], sizes = [8, 64], strides = [1, 1]} : vector<8x192xf32> to vector<8x64xf32>
    %316 = vector.extract_strided_slice %298 {offsets = [0, 128], sizes = [8, 64], strides = [1, 1]} : vector<8x192xf32> to vector<8x64xf32>
    %317 = arith.mulf %306, %316 : vector<8x64xf32>
    %318 = arith.addf %315, %317 : vector<8x64xf32>
    %319 = math.tanh %318 : vector<8x64xf32>
    %cst_55 = arith.constant 1.000000e+00 : f32
    %320 = vector.broadcast %cst_55 : f32 to vector<8x64xf32>
    %321 = arith.subf %320, %314 : vector<8x64xf32>
    %322 = arith.mulf %321, %319 : vector<8x64xf32>
    %323 = arith.mulf %314, %263 : vector<8x64xf32>
    %324 = arith.addf %322, %323 : vector<8x64xf32>
    %c32 = arith.constant 32 : index
    %c0_56 = arith.constant 0 : index
    %325 = vector.load %arg6[%c32, %c0_56] : memref<96x64xf32, #tpu.memory_space<vmem>>, vector<8x64xf32>
    tpu.vector_store %arg6[%c32, %c0_56], %324 {strides = array<i32>} : memref<96x64xf32, #tpu.memory_space<vmem>>, vector<8x64xf32>,
    %326 = tpu.concatenate %295, %324 in 1 : vector<8x64xf32>, vector<8x64xf32> -> vector<8x128xf32>
    %cst_57 = arith.constant dense<0.000000e+00> : vector<8x384xf32>
    %327 = tpu.matmul %326, %17, %cst_57 {dimension_numbers = #tpu.dot_dimension_numbers<[1], [0], [0], [1], [0, 0, 1, 1], [], []>} : vector<8x128xf32>, vector<128x384xf32>, vector<8x384xf32> -> vector<8x384xf32>
    %328 = arith.addf %327, %8 : vector<8x384xf32>
    %329 = vector.extract_strided_slice %16 {offsets = [40, 0], sizes = [8, 192], strides = [1, 1]} : vector<96x192xf32> to vector<8x192xf32>
    %330 = vector.extract_strided_slice %328 {offsets = [0, 0], sizes = [8, 192], strides = [1, 1]} : vector<8x384xf32> to vector<8x192xf32>
    %331 = vector.extract_strided_slice %329 {offsets = [0, 0], sizes = [8, 64], strides = [1, 1]} : vector<8x192xf32> to vector<8x64xf32>
    %332 = vector.extract_strided_slice %330 {offsets = [0, 0], sizes = [8, 64], strides = [1, 1]} : vector<8x192xf32> to vector<8x64xf32>
    %333 = arith.addf %331, %332 : vector<8x64xf32>
    %334 = arith.negf %333 : vector<8x64xf32>
    %335 = math.exp %334 : vector<8x64xf32>
    %cst_58 = arith.constant 1.000000e+00 : f32
    %336 = vector.broadcast %cst_58 : f32 to vector<8x64xf32>
    %337 = arith.addf %336, %335 : vector<8x64xf32>
    %338 = arith.divf %336, %337 : vector<8x64xf32>
    %339 = vector.extract_strided_slice %329 {offsets = [0, 64], sizes = [8, 64], strides = [1, 1]} : vector<8x192xf32> to vector<8x64xf32>
    %340 = vector.extract_strided_slice %330 {offsets = [0, 64], sizes = [8, 64], strides = [1, 1]} : vector<8x192xf32> to vector<8x64xf32>
    %341 = arith.addf %339, %340 : vector<8x64xf32>
    %342 = arith.negf %341 : vector<8x64xf32>
    %343 = math.exp %342 : vector<8x64xf32>
    %cst_59 = arith.constant 1.000000e+00 : f32
    %344 = vector.broadcast %cst_59 : f32 to vector<8x64xf32>
    %345 = arith.addf %344, %343 : vector<8x64xf32>
    %346 = arith.divf %344, %345 : vector<8x64xf32>
    %347 = vector.extract_strided_slice %329 {offsets = [0, 128], sizes = [8, 64], strides = [1, 1]} : vector<8x192xf32> to vector<8x64xf32>
    %348 = vector.extract_strided_slice %330 {offsets = [0, 128], sizes = [8, 64], strides = [1, 1]} : vector<8x192xf32> to vector<8x64xf32>
    %349 = arith.mulf %338, %348 : vector<8x64xf32>
    %350 = arith.addf %347, %349 : vector<8x64xf32>
    %351 = math.tanh %350 : vector<8x64xf32>
    %cst_60 = arith.constant 1.000000e+00 : f32
    %352 = vector.broadcast %cst_60 : f32 to vector<8x64xf32>
    %353 = arith.subf %352, %346 : vector<8x64xf32>
    %354 = arith.mulf %353, %351 : vector<8x64xf32>
    %355 = arith.mulf %346, %295 : vector<8x64xf32>
    %356 = arith.addf %354, %355 : vector<8x64xf32>
    %cst_61 = arith.constant dense<0.000000e+00> : vector<8x192xf32>
    %357 = tpu.matmul %356, %18, %cst_61 {dimension_numbers = #tpu.dot_dimension_numbers<[1], [0], [0], [1], [0, 0, 1, 1], [], []>} : vector<8x64xf32>, vector<64x192xf32>, vector<8x192xf32> -> vector<8x192xf32>
    %358 = arith.addf %357, %12 : vector<8x192xf32>
    %359 = vector.extract_strided_slice %328 {offsets = [0, 192], sizes = [8, 192], strides = [1, 1]} : vector<8x384xf32> to vector<8x192xf32>
    %360 = vector.extract_strided_slice %358 {offsets = [0, 0], sizes = [8, 64], strides = [1, 1]} : vector<8x192xf32> to vector<8x64xf32>
    %361 = vector.extract_strided_slice %359 {offsets = [0, 0], sizes = [8, 64], strides = [1, 1]} : vector<8x192xf32> to vector<8x64xf32>
    %362 = arith.addf %360, %361 : vector<8x64xf32>
    %363 = arith.negf %362 : vector<8x64xf32>
    %364 = math.exp %363 : vector<8x64xf32>
    %cst_62 = arith.constant 1.000000e+00 : f32
    %365 = vector.broadcast %cst_62 : f32 to vector<8x64xf32>
    %366 = arith.addf %365, %364 : vector<8x64xf32>
    %367 = arith.divf %365, %366 : vector<8x64xf32>
    %368 = vector.extract_strided_slice %358 {offsets = [0, 64], sizes = [8, 64], strides = [1, 1]} : vector<8x192xf32> to vector<8x64xf32>
    %369 = vector.extract_strided_slice %359 {offsets = [0, 64], sizes = [8, 64], strides = [1, 1]} : vector<8x192xf32> to vector<8x64xf32>
    %370 = arith.addf %368, %369 : vector<8x64xf32>
    %371 = arith.negf %370 : vector<8x64xf32>
    %372 = math.exp %371 : vector<8x64xf32>
    %cst_63 = arith.constant 1.000000e+00 : f32
    %373 = vector.broadcast %cst_63 : f32 to vector<8x64xf32>
    %374 = arith.addf %373, %372 : vector<8x64xf32>
    %375 = arith.divf %373, %374 : vector<8x64xf32>
    %376 = vector.extract_strided_slice %358 {offsets = [0, 128], sizes = [8, 64], strides = [1, 1]} : vector<8x192xf32> to vector<8x64xf32>
    %377 = vector.extract_strided_slice %359 {offsets = [0, 128], sizes = [8, 64], strides = [1, 1]} : vector<8x192xf32> to vector<8x64xf32>
    %378 = arith.mulf %367, %377 : vector<8x64xf32>
    %379 = arith.addf %376, %378 : vector<8x64xf32>
    %380 = math.tanh %379 : vector<8x64xf32>
    %cst_64 = arith.constant 1.000000e+00 : f32
    %381 = vector.broadcast %cst_64 : f32 to vector<8x64xf32>
    %382 = arith.subf %381, %375 : vector<8x64xf32>
    %383 = arith.mulf %382, %380 : vector<8x64xf32>
    %384 = arith.mulf %375, %324 : vector<8x64xf32>
    %385 = arith.addf %383, %384 : vector<8x64xf32>
    %c40 = arith.constant 40 : index
    %c0_65 = arith.constant 0 : index
    %386 = vector.load %arg6[%c40, %c0_65] : memref<96x64xf32, #tpu.memory_space<vmem>>, vector<8x64xf32>
    tpu.vector_store %arg6[%c40, %c0_65], %385 {strides = array<i32>} : memref<96x64xf32, #tpu.memory_space<vmem>>, vector<8x64xf32>,
    %387 = tpu.concatenate %356, %385 in 1 : vector<8x64xf32>, vector<8x64xf32> -> vector<8x128xf32>
    %cst_66 = arith.constant dense<0.000000e+00> : vector<8x384xf32>
    %388 = tpu.matmul %387, %17, %cst_66 {dimension_numbers = #tpu.dot_dimension_numbers<[1], [0], [0], [1], [0, 0, 1, 1], [], []>} : vector<8x128xf32>, vector<128x384xf32>, vector<8x384xf32> -> vector<8x384xf32>
    %389 = arith.addf %388, %8 : vector<8x384xf32>
    %390 = vector.extract_strided_slice %16 {offsets = [48, 0], sizes = [8, 192], strides = [1, 1]} : vector<96x192xf32> to vector<8x192xf32>
    %391 = vector.extract_strided_slice %389 {offsets = [0, 0], sizes = [8, 192], strides = [1, 1]} : vector<8x384xf32> to vector<8x192xf32>
    %392 = vector.extract_strided_slice %390 {offsets = [0, 0], sizes = [8, 64], strides = [1, 1]} : vector<8x192xf32> to vector<8x64xf32>
    %393 = vector.extract_strided_slice %391 {offsets = [0, 0], sizes = [8, 64], strides = [1, 1]} : vector<8x192xf32> to vector<8x64xf32>
    %394 = arith.addf %392, %393 : vector<8x64xf32>
    %395 = arith.negf %394 : vector<8x64xf32>
    %396 = math.exp %395 : vector<8x64xf32>
    %cst_67 = arith.constant 1.000000e+00 : f32
    %397 = vector.broadcast %cst_67 : f32 to vector<8x64xf32>
    %398 = arith.addf %397, %396 : vector<8x64xf32>
    %399 = arith.divf %397, %398 : vector<8x64xf32>
    %400 = vector.extract_strided_slice %390 {offsets = [0, 64], sizes = [8, 64], strides = [1, 1]} : vector<8x192xf32> to vector<8x64xf32>
    %401 = vector.extract_strided_slice %391 {offsets = [0, 64], sizes = [8, 64], strides = [1, 1]} : vector<8x192xf32> to vector<8x64xf32>
    %402 = arith.addf %400, %401 : vector<8x64xf32>
    %403 = arith.negf %402 : vector<8x64xf32>
    %404 = math.exp %403 : vector<8x64xf32>
    %cst_68 = arith.constant 1.000000e+00 : f32
    %405 = vector.broadcast %cst_68 : f32 to vector<8x64xf32>
    %406 = arith.addf %405, %404 : vector<8x64xf32>
    %407 = arith.divf %405, %406 : vector<8x64xf32>
    %408 = vector.extract_strided_slice %390 {offsets = [0, 128], sizes = [8, 64], strides = [1, 1]} : vector<8x192xf32> to vector<8x64xf32>
    %409 = vector.extract_strided_slice %391 {offsets = [0, 128], sizes = [8, 64], strides = [1, 1]} : vector<8x192xf32> to vector<8x64xf32>
    %410 = arith.mulf %399, %409 : vector<8x64xf32>
    %411 = arith.addf %408, %410 : vector<8x64xf32>
    %412 = math.tanh %411 : vector<8x64xf32>
    %cst_69 = arith.constant 1.000000e+00 : f32
    %413 = vector.broadcast %cst_69 : f32 to vector<8x64xf32>
    %414 = arith.subf %413, %407 : vector<8x64xf32>
    %415 = arith.mulf %414, %412 : vector<8x64xf32>
    %416 = arith.mulf %407, %356 : vector<8x64xf32>
    %417 = arith.addf %415, %416 : vector<8x64xf32>
    %cst_70 = arith.constant dense<0.000000e+00> : vector<8x192xf32>
    %418 = tpu.matmul %417, %18, %cst_70 {dimension_numbers = #tpu.dot_dimension_numbers<[1], [0], [0], [1], [0, 0, 1, 1], [], []>} : vector<8x64xf32>, vector<64x192xf32>, vector<8x192xf32> -> vector<8x192xf32>
    %419 = arith.addf %418, %12 : vector<8x192xf32>
    %420 = vector.extract_strided_slice %389 {offsets = [0, 192], sizes = [8, 192], strides = [1, 1]} : vector<8x384xf32> to vector<8x192xf32>
    %421 = vector.extract_strided_slice %419 {offsets = [0, 0], sizes = [8, 64], strides = [1, 1]} : vector<8x192xf32> to vector<8x64xf32>
    %422 = vector.extract_strided_slice %420 {offsets = [0, 0], sizes = [8, 64], strides = [1, 1]} : vector<8x192xf32> to vector<8x64xf32>
    %423 = arith.addf %421, %422 : vector<8x64xf32>
    %424 = arith.negf %423 : vector<8x64xf32>
    %425 = math.exp %424 : vector<8x64xf32>
    %cst_71 = arith.constant 1.000000e+00 : f32
    %426 = vector.broadcast %cst_71 : f32 to vector<8x64xf32>
    %427 = arith.addf %426, %425 : vector<8x64xf32>
    %428 = arith.divf %426, %427 : vector<8x64xf32>
    %429 = vector.extract_strided_slice %419 {offsets = [0, 64], sizes = [8, 64], strides = [1, 1]} : vector<8x192xf32> to vector<8x64xf32>
    %430 = vector.extract_strided_slice %420 {offsets = [0, 64], sizes = [8, 64], strides = [1, 1]} : vector<8x192xf32> to vector<8x64xf32>
    %431 = arith.addf %429, %430 : vector<8x64xf32>
    %432 = arith.negf %431 : vector<8x64xf32>
    %433 = math.exp %432 : vector<8x64xf32>
    %cst_72 = arith.constant 1.000000e+00 : f32
    %434 = vector.broadcast %cst_72 : f32 to vector<8x64xf32>
    %435 = arith.addf %434, %433 : vector<8x64xf32>
    %436 = arith.divf %434, %435 : vector<8x64xf32>
    %437 = vector.extract_strided_slice %419 {offsets = [0, 128], sizes = [8, 64], strides = [1, 1]} : vector<8x192xf32> to vector<8x64xf32>
    %438 = vector.extract_strided_slice %420 {offsets = [0, 128], sizes = [8, 64], strides = [1, 1]} : vector<8x192xf32> to vector<8x64xf32>
    %439 = arith.mulf %428, %438 : vector<8x64xf32>
    %440 = arith.addf %437, %439 : vector<8x64xf32>
    %441 = math.tanh %440 : vector<8x64xf32>
    %cst_73 = arith.constant 1.000000e+00 : f32
    %442 = vector.broadcast %cst_73 : f32 to vector<8x64xf32>
    %443 = arith.subf %442, %436 : vector<8x64xf32>
    %444 = arith.mulf %443, %441 : vector<8x64xf32>
    %445 = arith.mulf %436, %385 : vector<8x64xf32>
    %446 = arith.addf %444, %445 : vector<8x64xf32>
    %c48 = arith.constant 48 : index
    %c0_74 = arith.constant 0 : index
    %447 = vector.load %arg6[%c48, %c0_74] : memref<96x64xf32, #tpu.memory_space<vmem>>, vector<8x64xf32>
    tpu.vector_store %arg6[%c48, %c0_74], %446 {strides = array<i32>} : memref<96x64xf32, #tpu.memory_space<vmem>>, vector<8x64xf32>,
    %448 = tpu.concatenate %417, %446 in 1 : vector<8x64xf32>, vector<8x64xf32> -> vector<8x128xf32>
    %cst_75 = arith.constant dense<0.000000e+00> : vector<8x384xf32>
    %449 = tpu.matmul %448, %17, %cst_75 {dimension_numbers = #tpu.dot_dimension_numbers<[1], [0], [0], [1], [0, 0, 1, 1], [], []>} : vector<8x128xf32>, vector<128x384xf32>, vector<8x384xf32> -> vector<8x384xf32>
    %450 = arith.addf %449, %8 : vector<8x384xf32>
    %451 = vector.extract_strided_slice %16 {offsets = [56, 0], sizes = [8, 192], strides = [1, 1]} : vector<96x192xf32> to vector<8x192xf32>
    %452 = vector.extract_strided_slice %450 {offsets = [0, 0], sizes = [8, 192], strides = [1, 1]} : vector<8x384xf32> to vector<8x192xf32>
    %453 = vector.extract_strided_slice %451 {offsets = [0, 0], sizes = [8, 64], strides = [1, 1]} : vector<8x192xf32> to vector<8x64xf32>
    %454 = vector.extract_strided_slice %452 {offsets = [0, 0], sizes = [8, 64], strides = [1, 1]} : vector<8x192xf32> to vector<8x64xf32>
    %455 = arith.addf %453, %454 : vector<8x64xf32>
    %456 = arith.negf %455 : vector<8x64xf32>
    %457 = math.exp %456 : vector<8x64xf32>
    %cst_76 = arith.constant 1.000000e+00 : f32
    %458 = vector.broadcast %cst_76 : f32 to vector<8x64xf32>
    %459 = arith.addf %458, %457 : vector<8x64xf32>
    %460 = arith.divf %458, %459 : vector<8x64xf32>
    %461 = vector.extract_strided_slice %451 {offsets = [0, 64], sizes = [8, 64], strides = [1, 1]} : vector<8x192xf32> to vector<8x64xf32>
    %462 = vector.extract_strided_slice %452 {offsets = [0, 64], sizes = [8, 64], strides = [1, 1]} : vector<8x192xf32> to vector<8x64xf32>
    %463 = arith.addf %461, %462 : vector<8x64xf32>
    %464 = arith.negf %463 : vector<8x64xf32>
    %465 = math.exp %464 : vector<8x64xf32>
    %cst_77 = arith.constant 1.000000e+00 : f32
    %466 = vector.broadcast %cst_77 : f32 to vector<8x64xf32>
    %467 = arith.addf %466, %465 : vector<8x64xf32>
    %468 = arith.divf %466, %467 : vector<8x64xf32>
    %469 = vector.extract_strided_slice %451 {offsets = [0, 128], sizes = [8, 64], strides = [1, 1]} : vector<8x192xf32> to vector<8x64xf32>
    %470 = vector.extract_strided_slice %452 {offsets = [0, 128], sizes = [8, 64], strides = [1, 1]} : vector<8x192xf32> to vector<8x64xf32>
    %471 = arith.mulf %460, %470 : vector<8x64xf32>
    %472 = arith.addf %469, %471 : vector<8x64xf32>
    %473 = math.tanh %472 : vector<8x64xf32>
    %cst_78 = arith.constant 1.000000e+00 : f32
    %474 = vector.broadcast %cst_78 : f32 to vector<8x64xf32>
    %475 = arith.subf %474, %468 : vector<8x64xf32>
    %476 = arith.mulf %475, %473 : vector<8x64xf32>
    %477 = arith.mulf %468, %417 : vector<8x64xf32>
    %478 = arith.addf %476, %477 : vector<8x64xf32>
    %cst_79 = arith.constant dense<0.000000e+00> : vector<8x192xf32>
    %479 = tpu.matmul %478, %18, %cst_79 {dimension_numbers = #tpu.dot_dimension_numbers<[1], [0], [0], [1], [0, 0, 1, 1], [], []>} : vector<8x64xf32>, vector<64x192xf32>, vector<8x192xf32> -> vector<8x192xf32>
    %480 = arith.addf %479, %12 : vector<8x192xf32>
    %481 = vector.extract_strided_slice %450 {offsets = [0, 192], sizes = [8, 192], strides = [1, 1]} : vector<8x384xf32> to vector<8x192xf32>
    %482 = vector.extract_strided_slice %480 {offsets = [0, 0], sizes = [8, 64], strides = [1, 1]} : vector<8x192xf32> to vector<8x64xf32>
    %483 = vector.extract_strided_slice %481 {offsets = [0, 0], sizes = [8, 64], strides = [1, 1]} : vector<8x192xf32> to vector<8x64xf32>
    %484 = arith.addf %482, %483 : vector<8x64xf32>
    %485 = arith.negf %484 : vector<8x64xf32>
    %486 = math.exp %485 : vector<8x64xf32>
    %cst_80 = arith.constant 1.000000e+00 : f32
    %487 = vector.broadcast %cst_80 : f32 to vector<8x64xf32>
    %488 = arith.addf %487, %486 : vector<8x64xf32>
    %489 = arith.divf %487, %488 : vector<8x64xf32>
    %490 = vector.extract_strided_slice %480 {offsets = [0, 64], sizes = [8, 64], strides = [1, 1]} : vector<8x192xf32> to vector<8x64xf32>
    %491 = vector.extract_strided_slice %481 {offsets = [0, 64], sizes = [8, 64], strides = [1, 1]} : vector<8x192xf32> to vector<8x64xf32>
    %492 = arith.addf %490, %491 : vector<8x64xf32>
    %493 = arith.negf %492 : vector<8x64xf32>
    %494 = math.exp %493 : vector<8x64xf32>
    %cst_81 = arith.constant 1.000000e+00 : f32
    %495 = vector.broadcast %cst_81 : f32 to vector<8x64xf32>
    %496 = arith.addf %495, %494 : vector<8x64xf32>
    %497 = arith.divf %495, %496 : vector<8x64xf32>
    %498 = vector.extract_strided_slice %480 {offsets = [0, 128], sizes = [8, 64], strides = [1, 1]} : vector<8x192xf32> to vector<8x64xf32>
    %499 = vector.extract_strided_slice %481 {offsets = [0, 128], sizes = [8, 64], strides = [1, 1]} : vector<8x192xf32> to vector<8x64xf32>
    %500 = arith.mulf %489, %499 : vector<8x64xf32>
    %501 = arith.addf %498, %500 : vector<8x64xf32>
    %502 = math.tanh %501 : vector<8x64xf32>
    %cst_82 = arith.constant 1.000000e+00 : f32
    %503 = vector.broadcast %cst_82 : f32 to vector<8x64xf32>
    %504 = arith.subf %503, %497 : vector<8x64xf32>
    %505 = arith.mulf %504, %502 : vector<8x64xf32>
    %506 = arith.mulf %497, %446 : vector<8x64xf32>
    %507 = arith.addf %505, %506 : vector<8x64xf32>
    %c56 = arith.constant 56 : index
    %c0_83 = arith.constant 0 : index
    %508 = vector.load %arg6[%c56, %c0_83] : memref<96x64xf32, #tpu.memory_space<vmem>>, vector<8x64xf32>
    tpu.vector_store %arg6[%c56, %c0_83], %507 {strides = array<i32>} : memref<96x64xf32, #tpu.memory_space<vmem>>, vector<8x64xf32>,
    %509 = tpu.concatenate %478, %507 in 1 : vector<8x64xf32>, vector<8x64xf32> -> vector<8x128xf32>
    %cst_84 = arith.constant dense<0.000000e+00> : vector<8x384xf32>
    %510 = tpu.matmul %509, %17, %cst_84 {dimension_numbers = #tpu.dot_dimension_numbers<[1], [0], [0], [1], [0, 0, 1, 1], [], []>} : vector<8x128xf32>, vector<128x384xf32>, vector<8x384xf32> -> vector<8x384xf32>
    %511 = arith.addf %510, %8 : vector<8x384xf32>
    %512 = vector.extract_strided_slice %16 {offsets = [64, 0], sizes = [8, 192], strides = [1, 1]} : vector<96x192xf32> to vector<8x192xf32>
    %513 = vector.extract_strided_slice %511 {offsets = [0, 0], sizes = [8, 192], strides = [1, 1]} : vector<8x384xf32> to vector<8x192xf32>
    %514 = vector.extract_strided_slice %512 {offsets = [0, 0], sizes = [8, 64], strides = [1, 1]} : vector<8x192xf32> to vector<8x64xf32>
    %515 = vector.extract_strided_slice %513 {offsets = [0, 0], sizes = [8, 64], strides = [1, 1]} : vector<8x192xf32> to vector<8x64xf32>
    %516 = arith.addf %514, %515 : vector<8x64xf32>
    %517 = arith.negf %516 : vector<8x64xf32>
    %518 = math.exp %517 : vector<8x64xf32>
    %cst_85 = arith.constant 1.000000e+00 : f32
    %519 = vector.broadcast %cst_85 : f32 to vector<8x64xf32>
    %520 = arith.addf %519, %518 : vector<8x64xf32>
    %521 = arith.divf %519, %520 : vector<8x64xf32>
    %522 = vector.extract_strided_slice %512 {offsets = [0, 64], sizes = [8, 64], strides = [1, 1]} : vector<8x192xf32> to vector<8x64xf32>
    %523 = vector.extract_strided_slice %513 {offsets = [0, 64], sizes = [8, 64], strides = [1, 1]} : vector<8x192xf32> to vector<8x64xf32>
    %524 = arith.addf %522, %523 : vector<8x64xf32>
    %525 = arith.negf %524 : vector<8x64xf32>
    %526 = math.exp %525 : vector<8x64xf32>
    %cst_86 = arith.constant 1.000000e+00 : f32
    %527 = vector.broadcast %cst_86 : f32 to vector<8x64xf32>
    %528 = arith.addf %527, %526 : vector<8x64xf32>
    %529 = arith.divf %527, %528 : vector<8x64xf32>
    %530 = vector.extract_strided_slice %512 {offsets = [0, 128], sizes = [8, 64], strides = [1, 1]} : vector<8x192xf32> to vector<8x64xf32>
    %531 = vector.extract_strided_slice %513 {offsets = [0, 128], sizes = [8, 64], strides = [1, 1]} : vector<8x192xf32> to vector<8x64xf32>
    %532 = arith.mulf %521, %531 : vector<8x64xf32>
    %533 = arith.addf %530, %532 : vector<8x64xf32>
    %534 = math.tanh %533 : vector<8x64xf32>
    %cst_87 = arith.constant 1.000000e+00 : f32
    %535 = vector.broadcast %cst_87 : f32 to vector<8x64xf32>
    %536 = arith.subf %535, %529 : vector<8x64xf32>
    %537 = arith.mulf %536, %534 : vector<8x64xf32>
    %538 = arith.mulf %529, %478 : vector<8x64xf32>
    %539 = arith.addf %537, %538 : vector<8x64xf32>
    %cst_88 = arith.constant dense<0.000000e+00> : vector<8x192xf32>
    %540 = tpu.matmul %539, %18, %cst_88 {dimension_numbers = #tpu.dot_dimension_numbers<[1], [0], [0], [1], [0, 0, 1, 1], [], []>} : vector<8x64xf32>, vector<64x192xf32>, vector<8x192xf32> -> vector<8x192xf32>
    %541 = arith.addf %540, %12 : vector<8x192xf32>
    %542 = vector.extract_strided_slice %511 {offsets = [0, 192], sizes = [8, 192], strides = [1, 1]} : vector<8x384xf32> to vector<8x192xf32>
    %543 = vector.extract_strided_slice %541 {offsets = [0, 0], sizes = [8, 64], strides = [1, 1]} : vector<8x192xf32> to vector<8x64xf32>
    %544 = vector.extract_strided_slice %542 {offsets = [0, 0], sizes = [8, 64], strides = [1, 1]} : vector<8x192xf32> to vector<8x64xf32>
    %545 = arith.addf %543, %544 : vector<8x64xf32>
    %546 = arith.negf %545 : vector<8x64xf32>
    %547 = math.exp %546 : vector<8x64xf32>
    %cst_89 = arith.constant 1.000000e+00 : f32
    %548 = vector.broadcast %cst_89 : f32 to vector<8x64xf32>
    %549 = arith.addf %548, %547 : vector<8x64xf32>
    %550 = arith.divf %548, %549 : vector<8x64xf32>
    %551 = vector.extract_strided_slice %541 {offsets = [0, 64], sizes = [8, 64], strides = [1, 1]} : vector<8x192xf32> to vector<8x64xf32>
    %552 = vector.extract_strided_slice %542 {offsets = [0, 64], sizes = [8, 64], strides = [1, 1]} : vector<8x192xf32> to vector<8x64xf32>
    %553 = arith.addf %551, %552 : vector<8x64xf32>
    %554 = arith.negf %553 : vector<8x64xf32>
    %555 = math.exp %554 : vector<8x64xf32>
    %cst_90 = arith.constant 1.000000e+00 : f32
    %556 = vector.broadcast %cst_90 : f32 to vector<8x64xf32>
    %557 = arith.addf %556, %555 : vector<8x64xf32>
    %558 = arith.divf %556, %557 : vector<8x64xf32>
    %559 = vector.extract_strided_slice %541 {offsets = [0, 128], sizes = [8, 64], strides = [1, 1]} : vector<8x192xf32> to vector<8x64xf32>
    %560 = vector.extract_strided_slice %542 {offsets = [0, 128], sizes = [8, 64], strides = [1, 1]} : vector<8x192xf32> to vector<8x64xf32>
    %561 = arith.mulf %550, %560 : vector<8x64xf32>
    %562 = arith.addf %559, %561 : vector<8x64xf32>
    %563 = math.tanh %562 : vector<8x64xf32>
    %cst_91 = arith.constant 1.000000e+00 : f32
    %564 = vector.broadcast %cst_91 : f32 to vector<8x64xf32>
    %565 = arith.subf %564, %558 : vector<8x64xf32>
    %566 = arith.mulf %565, %563 : vector<8x64xf32>
    %567 = arith.mulf %558, %507 : vector<8x64xf32>
    %568 = arith.addf %566, %567 : vector<8x64xf32>
    %c64 = arith.constant 64 : index
    %c0_92 = arith.constant 0 : index
    %569 = vector.load %arg6[%c64, %c0_92] : memref<96x64xf32, #tpu.memory_space<vmem>>, vector<8x64xf32>
    tpu.vector_store %arg6[%c64, %c0_92], %568 {strides = array<i32>} : memref<96x64xf32, #tpu.memory_space<vmem>>, vector<8x64xf32>,
    %570 = tpu.concatenate %539, %568 in 1 : vector<8x64xf32>, vector<8x64xf32> -> vector<8x128xf32>
    %cst_93 = arith.constant dense<0.000000e+00> : vector<8x384xf32>
    %571 = tpu.matmul %570, %17, %cst_93 {dimension_numbers = #tpu.dot_dimension_numbers<[1], [0], [0], [1], [0, 0, 1, 1], [], []>} : vector<8x128xf32>, vector<128x384xf32>, vector<8x384xf32> -> vector<8x384xf32>
    %572 = arith.addf %571, %8 : vector<8x384xf32>
    %573 = vector.extract_strided_slice %16 {offsets = [72, 0], sizes = [8, 192], strides = [1, 1]} : vector<96x192xf32> to vector<8x192xf32>
    %574 = vector.extract_strided_slice %572 {offsets = [0, 0], sizes = [8, 192], strides = [1, 1]} : vector<8x384xf32> to vector<8x192xf32>
    %575 = vector.extract_strided_slice %573 {offsets = [0, 0], sizes = [8, 64], strides = [1, 1]} : vector<8x192xf32> to vector<8x64xf32>
    %576 = vector.extract_strided_slice %574 {offsets = [0, 0], sizes = [8, 64], strides = [1, 1]} : vector<8x192xf32> to vector<8x64xf32>
    %577 = arith.addf %575, %576 : vector<8x64xf32>
    %578 = arith.negf %577 : vector<8x64xf32>
    %579 = math.exp %578 : vector<8x64xf32>
    %cst_94 = arith.constant 1.000000e+00 : f32
    %580 = vector.broadcast %cst_94 : f32 to vector<8x64xf32>
    %581 = arith.addf %580, %579 : vector<8x64xf32>
    %582 = arith.divf %580, %581 : vector<8x64xf32>
    %583 = vector.extract_strided_slice %573 {offsets = [0, 64], sizes = [8, 64], strides = [1, 1]} : vector<8x192xf32> to vector<8x64xf32>
    %584 = vector.extract_strided_slice %574 {offsets = [0, 64], sizes = [8, 64], strides = [1, 1]} : vector<8x192xf32> to vector<8x64xf32>
    %585 = arith.addf %583, %584 : vector<8x64xf32>
    %586 = arith.negf %585 : vector<8x64xf32>
    %587 = math.exp %586 : vector<8x64xf32>
    %cst_95 = arith.constant 1.000000e+00 : f32
    %588 = vector.broadcast %cst_95 : f32 to vector<8x64xf32>
    %589 = arith.addf %588, %587 : vector<8x64xf32>
    %590 = arith.divf %588, %589 : vector<8x64xf32>
    %591 = vector.extract_strided_slice %573 {offsets = [0, 128], sizes = [8, 64], strides = [1, 1]} : vector<8x192xf32> to vector<8x64xf32>
    %592 = vector.extract_strided_slice %574 {offsets = [0, 128], sizes = [8, 64], strides = [1, 1]} : vector<8x192xf32> to vector<8x64xf32>
    %593 = arith.mulf %582, %592 : vector<8x64xf32>
    %594 = arith.addf %591, %593 : vector<8x64xf32>
    %595 = math.tanh %594 : vector<8x64xf32>
    %cst_96 = arith.constant 1.000000e+00 : f32
    %596 = vector.broadcast %cst_96 : f32 to vector<8x64xf32>
    %597 = arith.subf %596, %590 : vector<8x64xf32>
    %598 = arith.mulf %597, %595 : vector<8x64xf32>
    %599 = arith.mulf %590, %539 : vector<8x64xf32>
    %600 = arith.addf %598, %599 : vector<8x64xf32>
    %cst_97 = arith.constant dense<0.000000e+00> : vector<8x192xf32>
    %601 = tpu.matmul %600, %18, %cst_97 {dimension_numbers = #tpu.dot_dimension_numbers<[1], [0], [0], [1], [0, 0, 1, 1], [], []>} : vector<8x64xf32>, vector<64x192xf32>, vector<8x192xf32> -> vector<8x192xf32>
    %602 = arith.addf %601, %12 : vector<8x192xf32>
    %603 = vector.extract_strided_slice %572 {offsets = [0, 192], sizes = [8, 192], strides = [1, 1]} : vector<8x384xf32> to vector<8x192xf32>
    %604 = vector.extract_strided_slice %602 {offsets = [0, 0], sizes = [8, 64], strides = [1, 1]} : vector<8x192xf32> to vector<8x64xf32>
    %605 = vector.extract_strided_slice %603 {offsets = [0, 0], sizes = [8, 64], strides = [1, 1]} : vector<8x192xf32> to vector<8x64xf32>
    %606 = arith.addf %604, %605 : vector<8x64xf32>
    %607 = arith.negf %606 : vector<8x64xf32>
    %608 = math.exp %607 : vector<8x64xf32>
    %cst_98 = arith.constant 1.000000e+00 : f32
    %609 = vector.broadcast %cst_98 : f32 to vector<8x64xf32>
    %610 = arith.addf %609, %608 : vector<8x64xf32>
    %611 = arith.divf %609, %610 : vector<8x64xf32>
    %612 = vector.extract_strided_slice %602 {offsets = [0, 64], sizes = [8, 64], strides = [1, 1]} : vector<8x192xf32> to vector<8x64xf32>
    %613 = vector.extract_strided_slice %603 {offsets = [0, 64], sizes = [8, 64], strides = [1, 1]} : vector<8x192xf32> to vector<8x64xf32>
    %614 = arith.addf %612, %613 : vector<8x64xf32>
    %615 = arith.negf %614 : vector<8x64xf32>
    %616 = math.exp %615 : vector<8x64xf32>
    %cst_99 = arith.constant 1.000000e+00 : f32
    %617 = vector.broadcast %cst_99 : f32 to vector<8x64xf32>
    %618 = arith.addf %617, %616 : vector<8x64xf32>
    %619 = arith.divf %617, %618 : vector<8x64xf32>
    %620 = vector.extract_strided_slice %602 {offsets = [0, 128], sizes = [8, 64], strides = [1, 1]} : vector<8x192xf32> to vector<8x64xf32>
    %621 = vector.extract_strided_slice %603 {offsets = [0, 128], sizes = [8, 64], strides = [1, 1]} : vector<8x192xf32> to vector<8x64xf32>
    %622 = arith.mulf %611, %621 : vector<8x64xf32>
    %623 = arith.addf %620, %622 : vector<8x64xf32>
    %624 = math.tanh %623 : vector<8x64xf32>
    %cst_100 = arith.constant 1.000000e+00 : f32
    %625 = vector.broadcast %cst_100 : f32 to vector<8x64xf32>
    %626 = arith.subf %625, %619 : vector<8x64xf32>
    %627 = arith.mulf %626, %624 : vector<8x64xf32>
    %628 = arith.mulf %619, %568 : vector<8x64xf32>
    %629 = arith.addf %627, %628 : vector<8x64xf32>
    %c72 = arith.constant 72 : index
    %c0_101 = arith.constant 0 : index
    %630 = vector.load %arg6[%c72, %c0_101] : memref<96x64xf32, #tpu.memory_space<vmem>>, vector<8x64xf32>
    tpu.vector_store %arg6[%c72, %c0_101], %629 {strides = array<i32>} : memref<96x64xf32, #tpu.memory_space<vmem>>, vector<8x64xf32>,
    %631 = tpu.concatenate %600, %629 in 1 : vector<8x64xf32>, vector<8x64xf32> -> vector<8x128xf32>
    %cst_102 = arith.constant dense<0.000000e+00> : vector<8x384xf32>
    %632 = tpu.matmul %631, %17, %cst_102 {dimension_numbers = #tpu.dot_dimension_numbers<[1], [0], [0], [1], [0, 0, 1, 1], [], []>} : vector<8x128xf32>, vector<128x384xf32>, vector<8x384xf32> -> vector<8x384xf32>
    %633 = arith.addf %632, %8 : vector<8x384xf32>
    %634 = vector.extract_strided_slice %16 {offsets = [80, 0], sizes = [8, 192], strides = [1, 1]} : vector<96x192xf32> to vector<8x192xf32>
    %635 = vector.extract_strided_slice %633 {offsets = [0, 0], sizes = [8, 192], strides = [1, 1]} : vector<8x384xf32> to vector<8x192xf32>
    %636 = vector.extract_strided_slice %634 {offsets = [0, 0], sizes = [8, 64], strides = [1, 1]} : vector<8x192xf32> to vector<8x64xf32>
    %637 = vector.extract_strided_slice %635 {offsets = [0, 0], sizes = [8, 64], strides = [1, 1]} : vector<8x192xf32> to vector<8x64xf32>
    %638 = arith.addf %636, %637 : vector<8x64xf32>
    %639 = arith.negf %638 : vector<8x64xf32>
    %640 = math.exp %639 : vector<8x64xf32>
    %cst_103 = arith.constant 1.000000e+00 : f32
    %641 = vector.broadcast %cst_103 : f32 to vector<8x64xf32>
    %642 = arith.addf %641, %640 : vector<8x64xf32>
    %643 = arith.divf %641, %642 : vector<8x64xf32>
    %644 = vector.extract_strided_slice %634 {offsets = [0, 64], sizes = [8, 64], strides = [1, 1]} : vector<8x192xf32> to vector<8x64xf32>
    %645 = vector.extract_strided_slice %635 {offsets = [0, 64], sizes = [8, 64], strides = [1, 1]} : vector<8x192xf32> to vector<8x64xf32>
    %646 = arith.addf %644, %645 : vector<8x64xf32>
    %647 = arith.negf %646 : vector<8x64xf32>
    %648 = math.exp %647 : vector<8x64xf32>
    %cst_104 = arith.constant 1.000000e+00 : f32
    %649 = vector.broadcast %cst_104 : f32 to vector<8x64xf32>
    %650 = arith.addf %649, %648 : vector<8x64xf32>
    %651 = arith.divf %649, %650 : vector<8x64xf32>
    %652 = vector.extract_strided_slice %634 {offsets = [0, 128], sizes = [8, 64], strides = [1, 1]} : vector<8x192xf32> to vector<8x64xf32>
    %653 = vector.extract_strided_slice %635 {offsets = [0, 128], sizes = [8, 64], strides = [1, 1]} : vector<8x192xf32> to vector<8x64xf32>
    %654 = arith.mulf %643, %653 : vector<8x64xf32>
    %655 = arith.addf %652, %654 : vector<8x64xf32>
    %656 = math.tanh %655 : vector<8x64xf32>
    %cst_105 = arith.constant 1.000000e+00 : f32
    %657 = vector.broadcast %cst_105 : f32 to vector<8x64xf32>
    %658 = arith.subf %657, %651 : vector<8x64xf32>
    %659 = arith.mulf %658, %656 : vector<8x64xf32>
    %660 = arith.mulf %651, %600 : vector<8x64xf32>
    %661 = arith.addf %659, %660 : vector<8x64xf32>
    %cst_106 = arith.constant dense<0.000000e+00> : vector<8x192xf32>
    %662 = tpu.matmul %661, %18, %cst_106 {dimension_numbers = #tpu.dot_dimension_numbers<[1], [0], [0], [1], [0, 0, 1, 1], [], []>} : vector<8x64xf32>, vector<64x192xf32>, vector<8x192xf32> -> vector<8x192xf32>
    %663 = arith.addf %662, %12 : vector<8x192xf32>
    %664 = vector.extract_strided_slice %633 {offsets = [0, 192], sizes = [8, 192], strides = [1, 1]} : vector<8x384xf32> to vector<8x192xf32>
    %665 = vector.extract_strided_slice %663 {offsets = [0, 0], sizes = [8, 64], strides = [1, 1]} : vector<8x192xf32> to vector<8x64xf32>
    %666 = vector.extract_strided_slice %664 {offsets = [0, 0], sizes = [8, 64], strides = [1, 1]} : vector<8x192xf32> to vector<8x64xf32>
    %667 = arith.addf %665, %666 : vector<8x64xf32>
    %668 = arith.negf %667 : vector<8x64xf32>
    %669 = math.exp %668 : vector<8x64xf32>
    %cst_107 = arith.constant 1.000000e+00 : f32
    %670 = vector.broadcast %cst_107 : f32 to vector<8x64xf32>
    %671 = arith.addf %670, %669 : vector<8x64xf32>
    %672 = arith.divf %670, %671 : vector<8x64xf32>
    %673 = vector.extract_strided_slice %663 {offsets = [0, 64], sizes = [8, 64], strides = [1, 1]} : vector<8x192xf32> to vector<8x64xf32>
    %674 = vector.extract_strided_slice %664 {offsets = [0, 64], sizes = [8, 64], strides = [1, 1]} : vector<8x192xf32> to vector<8x64xf32>
    %675 = arith.addf %673, %674 : vector<8x64xf32>
    %676 = arith.negf %675 : vector<8x64xf32>
    %677 = math.exp %676 : vector<8x64xf32>
    %cst_108 = arith.constant 1.000000e+00 : f32
    %678 = vector.broadcast %cst_108 : f32 to vector<8x64xf32>
    %679 = arith.addf %678, %677 : vector<8x64xf32>
    %680 = arith.divf %678, %679 : vector<8x64xf32>
    %681 = vector.extract_strided_slice %663 {offsets = [0, 128], sizes = [8, 64], strides = [1, 1]} : vector<8x192xf32> to vector<8x64xf32>
    %682 = vector.extract_strided_slice %664 {offsets = [0, 128], sizes = [8, 64], strides = [1, 1]} : vector<8x192xf32> to vector<8x64xf32>
    %683 = arith.mulf %672, %682 : vector<8x64xf32>
    %684 = arith.addf %681, %683 : vector<8x64xf32>
    %685 = math.tanh %684 : vector<8x64xf32>
    %cst_109 = arith.constant 1.000000e+00 : f32
    %686 = vector.broadcast %cst_109 : f32 to vector<8x64xf32>
    %687 = arith.subf %686, %680 : vector<8x64xf32>
    %688 = arith.mulf %687, %685 : vector<8x64xf32>
    %689 = arith.mulf %680, %629 : vector<8x64xf32>
    %690 = arith.addf %688, %689 : vector<8x64xf32>
    %c80 = arith.constant 80 : index
    %c0_110 = arith.constant 0 : index
    %691 = vector.load %arg6[%c80, %c0_110] : memref<96x64xf32, #tpu.memory_space<vmem>>, vector<8x64xf32>
    tpu.vector_store %arg6[%c80, %c0_110], %690 {strides = array<i32>} : memref<96x64xf32, #tpu.memory_space<vmem>>, vector<8x64xf32>,
    %692 = tpu.concatenate %661, %690 in 1 : vector<8x64xf32>, vector<8x64xf32> -> vector<8x128xf32>
    %cst_111 = arith.constant dense<0.000000e+00> : vector<8x384xf32>
    %693 = tpu.matmul %692, %17, %cst_111 {dimension_numbers = #tpu.dot_dimension_numbers<[1], [0], [0], [1], [0, 0, 1, 1], [], []>} : vector<8x128xf32>, vector<128x384xf32>, vector<8x384xf32> -> vector<8x384xf32>
    %694 = arith.addf %693, %8 : vector<8x384xf32>
    %695 = vector.extract_strided_slice %16 {offsets = [88, 0], sizes = [8, 192], strides = [1, 1]} : vector<96x192xf32> to vector<8x192xf32>
    %696 = vector.extract_strided_slice %694 {offsets = [0, 0], sizes = [8, 192], strides = [1, 1]} : vector<8x384xf32> to vector<8x192xf32>
    %697 = vector.extract_strided_slice %695 {offsets = [0, 0], sizes = [8, 64], strides = [1, 1]} : vector<8x192xf32> to vector<8x64xf32>
    %698 = vector.extract_strided_slice %696 {offsets = [0, 0], sizes = [8, 64], strides = [1, 1]} : vector<8x192xf32> to vector<8x64xf32>
    %699 = arith.addf %697, %698 : vector<8x64xf32>
    %700 = arith.negf %699 : vector<8x64xf32>
    %701 = math.exp %700 : vector<8x64xf32>
    %cst_112 = arith.constant 1.000000e+00 : f32
    %702 = vector.broadcast %cst_112 : f32 to vector<8x64xf32>
    %703 = arith.addf %702, %701 : vector<8x64xf32>
    %704 = arith.divf %702, %703 : vector<8x64xf32>
    %705 = vector.extract_strided_slice %695 {offsets = [0, 64], sizes = [8, 64], strides = [1, 1]} : vector<8x192xf32> to vector<8x64xf32>
    %706 = vector.extract_strided_slice %696 {offsets = [0, 64], sizes = [8, 64], strides = [1, 1]} : vector<8x192xf32> to vector<8x64xf32>
    %707 = arith.addf %705, %706 : vector<8x64xf32>
    %708 = arith.negf %707 : vector<8x64xf32>
    %709 = math.exp %708 : vector<8x64xf32>
    %cst_113 = arith.constant 1.000000e+00 : f32
    %710 = vector.broadcast %cst_113 : f32 to vector<8x64xf32>
    %711 = arith.addf %710, %709 : vector<8x64xf32>
    %712 = arith.divf %710, %711 : vector<8x64xf32>
    %713 = vector.extract_strided_slice %695 {offsets = [0, 128], sizes = [8, 64], strides = [1, 1]} : vector<8x192xf32> to vector<8x64xf32>
    %714 = vector.extract_strided_slice %696 {offsets = [0, 128], sizes = [8, 64], strides = [1, 1]} : vector<8x192xf32> to vector<8x64xf32>
    %715 = arith.mulf %704, %714 : vector<8x64xf32>
    %716 = arith.addf %713, %715 : vector<8x64xf32>
    %717 = math.tanh %716 : vector<8x64xf32>
    %cst_114 = arith.constant 1.000000e+00 : f32
    %718 = vector.broadcast %cst_114 : f32 to vector<8x64xf32>
    %719 = arith.subf %718, %712 : vector<8x64xf32>
    %720 = arith.mulf %719, %717 : vector<8x64xf32>
    %721 = arith.mulf %712, %661 : vector<8x64xf32>
    %722 = arith.addf %720, %721 : vector<8x64xf32>
    %cst_115 = arith.constant dense<0.000000e+00> : vector<8x192xf32>
    %723 = tpu.matmul %722, %18, %cst_115 {dimension_numbers = #tpu.dot_dimension_numbers<[1], [0], [0], [1], [0, 0, 1, 1], [], []>} : vector<8x64xf32>, vector<64x192xf32>, vector<8x192xf32> -> vector<8x192xf32>
    %724 = arith.addf %723, %12 : vector<8x192xf32>
    %725 = vector.extract_strided_slice %694 {offsets = [0, 192], sizes = [8, 192], strides = [1, 1]} : vector<8x384xf32> to vector<8x192xf32>
    %726 = vector.extract_strided_slice %724 {offsets = [0, 0], sizes = [8, 64], strides = [1, 1]} : vector<8x192xf32> to vector<8x64xf32>
    %727 = vector.extract_strided_slice %725 {offsets = [0, 0], sizes = [8, 64], strides = [1, 1]} : vector<8x192xf32> to vector<8x64xf32>
    %728 = arith.addf %726, %727 : vector<8x64xf32>
    %729 = arith.negf %728 : vector<8x64xf32>
    %730 = math.exp %729 : vector<8x64xf32>
    %cst_116 = arith.constant 1.000000e+00 : f32
    %731 = vector.broadcast %cst_116 : f32 to vector<8x64xf32>
    %732 = arith.addf %731, %730 : vector<8x64xf32>
    %733 = arith.divf %731, %732 : vector<8x64xf32>
    %734 = vector.extract_strided_slice %724 {offsets = [0, 64], sizes = [8, 64], strides = [1, 1]} : vector<8x192xf32> to vector<8x64xf32>
    %735 = vector.extract_strided_slice %725 {offsets = [0, 64], sizes = [8, 64], strides = [1, 1]} : vector<8x192xf32> to vector<8x64xf32>
    %736 = arith.addf %734, %735 : vector<8x64xf32>
    %737 = arith.negf %736 : vector<8x64xf32>
    %738 = math.exp %737 : vector<8x64xf32>
    %cst_117 = arith.constant 1.000000e+00 : f32
    %739 = vector.broadcast %cst_117 : f32 to vector<8x64xf32>
    %740 = arith.addf %739, %738 : vector<8x64xf32>
    %741 = arith.divf %739, %740 : vector<8x64xf32>
    %742 = vector.extract_strided_slice %724 {offsets = [0, 128], sizes = [8, 64], strides = [1, 1]} : vector<8x192xf32> to vector<8x64xf32>
    %743 = vector.extract_strided_slice %725 {offsets = [0, 128], sizes = [8, 64], strides = [1, 1]} : vector<8x192xf32> to vector<8x64xf32>
    %744 = arith.mulf %733, %743 : vector<8x64xf32>
    %745 = arith.addf %742, %744 : vector<8x64xf32>
    %746 = math.tanh %745 : vector<8x64xf32>
    %cst_118 = arith.constant 1.000000e+00 : f32
    %747 = vector.broadcast %cst_118 : f32 to vector<8x64xf32>
    %748 = arith.subf %747, %741 : vector<8x64xf32>
    %749 = arith.mulf %748, %746 : vector<8x64xf32>
    %750 = arith.mulf %741, %690 : vector<8x64xf32>
    %751 = arith.addf %749, %750 : vector<8x64xf32>
    %c88 = arith.constant 88 : index
    %c0_119 = arith.constant 0 : index
    %752 = vector.load %arg6[%c88, %c0_119] : memref<96x64xf32, #tpu.memory_space<vmem>>, vector<8x64xf32>
    tpu.vector_store %arg6[%c88, %c0_119], %751 {strides = array<i32>} : memref<96x64xf32, #tpu.memory_space<vmem>>, vector<8x64xf32>,
    %c0_120 = arith.constant 0 : index
    %c0_121 = arith.constant 0 : index
    %753 = vector.load %arg6[%c0_120, %c0_121] : memref<96x64xf32, #tpu.memory_space<vmem>>, vector<96x64xf32>
    %c0_122 = arith.constant 0 : index
    %c0_123 = arith.constant 0 : index
    %754 = vector.load %arg4[%c0_122, %c0_123] : memref<64x134xf32, #tpu.memory_space<vmem>>, vector<64x134xf32>
    %cst_124 = arith.constant dense<0.000000e+00> : vector<96x134xf32>
    %755 = tpu.matmul %753, %754, %cst_124 {dimension_numbers = #tpu.dot_dimension_numbers<[1], [0], [0], [1], [0, 0, 1, 1], [], []>} : vector<96x64xf32>, vector<64x134xf32>, vector<96x134xf32> -> vector<96x134xf32>
    %756 = vector.extract_strided_slice %755 {offsets = [0, 0], sizes = [96, 64], strides = [1, 1]} : vector<96x134xf32> to vector<96x64xf32>
    %757 = vector.extract_strided_slice %755 {offsets = [0, 64], sizes = [96, 64], strides = [1, 1]} : vector<96x134xf32> to vector<96x64xf32>
    %758 = vector.broadcast %2 : vector<1x64xf32> to vector<96x64xf32>
    %759 = arith.addf %757, %758 : vector<96x64xf32>
    %760 = vector.extract_strided_slice %755 {offsets = [0, 128], sizes = [96, 2], strides = [1, 1]} : vector<96x134xf32> to vector<96x2xf32>
    %761 = vector.extract_strided_slice %755 {offsets = [0, 130], sizes = [96, 2], strides = [1, 1]} : vector<96x134xf32> to vector<96x2xf32>
    %cst_125 = arith.constant 0.000000e+00 : f32
    %762 = vector.broadcast %cst_125 : f32 to vector<40x2xf32>
    %763 = vector.extract_strided_slice %760 {offsets = [0, 0], sizes = [56, 2], strides = [1, 1]} : vector<96x2xf32> to vector<56x2xf32>
    %764 = tpu.concatenate %762, %763 in 0 : vector<40x2xf32>, vector<56x2xf32> -> vector<96x2xf32>
    %765 = arith.addf %764, %761 : vector<96x2xf32>
    %cst_126 = arith.constant 0.000000e+00 : f32
    %766 = vector.broadcast %cst_126 : f32 to vector<40x64xf32>
    %767 = vector.extract_strided_slice %756 {offsets = [0, 0], sizes = [56, 64], strides = [1, 1]} : vector<96x64xf32> to vector<56x64xf32>
    %768 = tpu.concatenate %766, %767 in 0 : vector<40x64xf32>, vector<56x64xf32> -> vector<96x64xf32>
    %cst_127 = arith.constant 0.000000e+00 : f32
    %769 = vector.broadcast %cst_127 : f32 to vector<32x2xf32>
    %770 = vector.extract_strided_slice %760 {offsets = [0, 0], sizes = [64, 2], strides = [1, 1]} : vector<96x2xf32> to vector<64x2xf32>
    %771 = tpu.concatenate %769, %770 in 0 : vector<32x2xf32>, vector<64x2xf32> -> vector<96x2xf32>
    %772 = arith.addf %771, %761 : vector<96x2xf32>
    %cst_128 = arith.constant 0.000000e+00 : f32
    %773 = vector.broadcast %cst_128 : f32 to vector<32x64xf32>
    %774 = vector.extract_strided_slice %756 {offsets = [0, 0], sizes = [64, 64], strides = [1, 1]} : vector<96x64xf32> to vector<64x64xf32>
    %775 = tpu.concatenate %773, %774 in 0 : vector<32x64xf32>, vector<64x64xf32> -> vector<96x64xf32>
    %cst_129 = arith.constant 0.000000e+00 : f32
    %776 = vector.broadcast %cst_129 : f32 to vector<24x2xf32>
    %777 = vector.extract_strided_slice %760 {offsets = [0, 0], sizes = [72, 2], strides = [1, 1]} : vector<96x2xf32> to vector<72x2xf32>
    %778 = tpu.concatenate %776, %777 in 0 : vector<24x2xf32>, vector<72x2xf32> -> vector<96x2xf32>
    %779 = arith.addf %778, %761 : vector<96x2xf32>
    %cst_130 = arith.constant 0.000000e+00 : f32
    %780 = vector.broadcast %cst_130 : f32 to vector<24x64xf32>
    %781 = vector.extract_strided_slice %756 {offsets = [0, 0], sizes = [72, 64], strides = [1, 1]} : vector<96x64xf32> to vector<72x64xf32>
    %782 = tpu.concatenate %780, %781 in 0 : vector<24x64xf32>, vector<72x64xf32> -> vector<96x64xf32>
    %cst_131 = arith.constant 0.000000e+00 : f32
    %783 = vector.broadcast %cst_131 : f32 to vector<16x2xf32>
    %784 = vector.extract_strided_slice %760 {offsets = [0, 0], sizes = [80, 2], strides = [1, 1]} : vector<96x2xf32> to vector<80x2xf32>
    %785 = tpu.concatenate %783, %784 in 0 : vector<16x2xf32>, vector<80x2xf32> -> vector<96x2xf32>
    %786 = arith.addf %785, %761 : vector<96x2xf32>
    %cst_132 = arith.constant 0.000000e+00 : f32
    %787 = vector.broadcast %cst_132 : f32 to vector<16x64xf32>
    %788 = vector.extract_strided_slice %756 {offsets = [0, 0], sizes = [80, 64], strides = [1, 1]} : vector<96x64xf32> to vector<80x64xf32>
    %789 = tpu.concatenate %787, %788 in 0 : vector<16x64xf32>, vector<80x64xf32> -> vector<96x64xf32>
    %cst_133 = arith.constant 0.000000e+00 : f32
    %790 = vector.broadcast %cst_133 : f32 to vector<8x2xf32>
    %791 = vector.extract_strided_slice %760 {offsets = [0, 0], sizes = [88, 2], strides = [1, 1]} : vector<96x2xf32> to vector<88x2xf32>
    %792 = tpu.concatenate %790, %791 in 0 : vector<8x2xf32>, vector<88x2xf32> -> vector<96x2xf32>
    %793 = arith.addf %792, %761 : vector<96x2xf32>
    %cst_134 = arith.constant 0.000000e+00 : f32
    %794 = vector.broadcast %cst_134 : f32 to vector<8x64xf32>
    %795 = vector.extract_strided_slice %756 {offsets = [0, 0], sizes = [88, 64], strides = [1, 1]} : vector<96x64xf32> to vector<88x64xf32>
    %796 = tpu.concatenate %794, %795 in 0 : vector<8x64xf32>, vector<88x64xf32> -> vector<96x64xf32>
    %797 = arith.maximumf %765, %772 : vector<96x2xf32>
    %798 = arith.maximumf %797, %779 : vector<96x2xf32>
    %799 = arith.maximumf %798, %786 : vector<96x2xf32>
    %800 = arith.maximumf %799, %793 : vector<96x2xf32>
    %801 = arith.subf %765, %800 : vector<96x2xf32>
    %802 = math.exp %801 : vector<96x2xf32>
    %803 = arith.subf %772, %800 : vector<96x2xf32>
    %804 = math.exp %803 : vector<96x2xf32>
    %805 = arith.subf %779, %800 : vector<96x2xf32>
    %806 = math.exp %805 : vector<96x2xf32>
    %807 = arith.subf %786, %800 : vector<96x2xf32>
    %808 = math.exp %807 : vector<96x2xf32>
    %809 = arith.subf %793, %800 : vector<96x2xf32>
    %810 = math.exp %809 : vector<96x2xf32>
    %811 = arith.addf %802, %804 : vector<96x2xf32>
    %812 = arith.addf %811, %806 : vector<96x2xf32>
    %813 = arith.addf %812, %808 : vector<96x2xf32>
    %814 = arith.addf %813, %810 : vector<96x2xf32>
    %815 = tpu.reciprocal %814 {approx = true} : vector<96x2xf32> -> vector<96x2xf32>
    %cst_135 = arith.constant 0.000000e+00 : f32
    %816 = vector.broadcast %cst_135 : f32 to vector<96x64xf32>
    %817 = arith.mulf %802, %815 : vector<96x2xf32>
    %818 = vector.extract_strided_slice %817 {offsets = [0, 0], sizes = [96, 1], strides = [1, 1]} : vector<96x2xf32> to vector<96x1xf32>
    %819 = vector.shape_cast %818 : vector<96x1xf32> to vector<96x1xf32>
    %820 = vector.broadcast %819 : vector<96x1xf32> to vector<96x32xf32>
    %821 = vector.extract_strided_slice %817 {offsets = [0, 1], sizes = [96, 1], strides = [1, 1]} : vector<96x2xf32> to vector<96x1xf32>
    %822 = vector.shape_cast %821 : vector<96x1xf32> to vector<96x1xf32>
    %823 = vector.broadcast %822 : vector<96x1xf32> to vector<96x32xf32>
    %824 = tpu.concatenate %820, %823 in 1 : vector<96x32xf32>, vector<96x32xf32> -> vector<96x64xf32>
    %825 = arith.mulf %824, %768 : vector<96x64xf32>
    %826 = arith.addf %816, %825 : vector<96x64xf32>
    %827 = arith.mulf %804, %815 : vector<96x2xf32>
    %828 = vector.extract_strided_slice %827 {offsets = [0, 0], sizes = [96, 1], strides = [1, 1]} : vector<96x2xf32> to vector<96x1xf32>
    %829 = vector.shape_cast %828 : vector<96x1xf32> to vector<96x1xf32>
    %830 = vector.broadcast %829 : vector<96x1xf32> to vector<96x32xf32>
    %831 = vector.extract_strided_slice %827 {offsets = [0, 1], sizes = [96, 1], strides = [1, 1]} : vector<96x2xf32> to vector<96x1xf32>
    %832 = vector.shape_cast %831 : vector<96x1xf32> to vector<96x1xf32>
    %833 = vector.broadcast %832 : vector<96x1xf32> to vector<96x32xf32>
    %834 = tpu.concatenate %830, %833 in 1 : vector<96x32xf32>, vector<96x32xf32> -> vector<96x64xf32>
    %835 = arith.mulf %834, %775 : vector<96x64xf32>
    %836 = arith.addf %826, %835 : vector<96x64xf32>
    %837 = arith.mulf %806, %815 : vector<96x2xf32>
    %838 = vector.extract_strided_slice %837 {offsets = [0, 0], sizes = [96, 1], strides = [1, 1]} : vector<96x2xf32> to vector<96x1xf32>
    %839 = vector.shape_cast %838 : vector<96x1xf32> to vector<96x1xf32>
    %840 = vector.broadcast %839 : vector<96x1xf32> to vector<96x32xf32>
    %841 = vector.extract_strided_slice %837 {offsets = [0, 1], sizes = [96, 1], strides = [1, 1]} : vector<96x2xf32> to vector<96x1xf32>
    %842 = vector.shape_cast %841 : vector<96x1xf32> to vector<96x1xf32>
    %843 = vector.broadcast %842 : vector<96x1xf32> to vector<96x32xf32>
    %844 = tpu.concatenate %840, %843 in 1 : vector<96x32xf32>, vector<96x32xf32> -> vector<96x64xf32>
    %845 = arith.mulf %844, %782 : vector<96x64xf32>
    %846 = arith.addf %836, %845 : vector<96x64xf32>
    %847 = arith.mulf %808, %815 : vector<96x2xf32>
    %848 = vector.extract_strided_slice %847 {offsets = [0, 0], sizes = [96, 1], strides = [1, 1]} : vector<96x2xf32> to vector<96x1xf32>
    %849 = vector.shape_cast %848 : vector<96x1xf32> to vector<96x1xf32>
    %850 = vector.broadcast %849 : vector<96x1xf32> to vector<96x32xf32>
    %851 = vector.extract_strided_slice %847 {offsets = [0, 1], sizes = [96, 1], strides = [1, 1]} : vector<96x2xf32> to vector<96x1xf32>
    %852 = vector.shape_cast %851 : vector<96x1xf32> to vector<96x1xf32>
    %853 = vector.broadcast %852 : vector<96x1xf32> to vector<96x32xf32>
    %854 = tpu.concatenate %850, %853 in 1 : vector<96x32xf32>, vector<96x32xf32> -> vector<96x64xf32>
    %855 = arith.mulf %854, %789 : vector<96x64xf32>
    %856 = arith.addf %846, %855 : vector<96x64xf32>
    %857 = arith.mulf %810, %815 : vector<96x2xf32>
    %858 = vector.extract_strided_slice %857 {offsets = [0, 0], sizes = [96, 1], strides = [1, 1]} : vector<96x2xf32> to vector<96x1xf32>
    %859 = vector.shape_cast %858 : vector<96x1xf32> to vector<96x1xf32>
    %860 = vector.broadcast %859 : vector<96x1xf32> to vector<96x32xf32>
    %861 = vector.extract_strided_slice %857 {offsets = [0, 1], sizes = [96, 1], strides = [1, 1]} : vector<96x2xf32> to vector<96x1xf32>
    %862 = vector.shape_cast %861 : vector<96x1xf32> to vector<96x1xf32>
    %863 = vector.broadcast %862 : vector<96x1xf32> to vector<96x32xf32>
    %864 = tpu.concatenate %860, %863 in 1 : vector<96x32xf32>, vector<96x32xf32> -> vector<96x64xf32>
    %865 = arith.mulf %864, %796 : vector<96x64xf32>
    %866 = arith.addf %856, %865 : vector<96x64xf32>
    %867 = arith.addf %866, %759 : vector<96x64xf32>
    %868 = tpu.iota {dimensions = array<i32: 0>} : vector<96x64xi32>
    %c40_i32 = arith.constant 40 : i32
    %869 = vector.broadcast %c40_i32 : i32 to vector<96x64xi32>
    %870 = arith.cmpi slt, %868, %869 : vector<96x64xi32>
    %871 = arith.select %870, %753, %867 : vector<96x64xi1>, vector<96x64xf32>
    %872 = vector.extract_strided_slice %871 {offsets = [88, 0], sizes = [8, 64], strides = [1, 1]} : vector<96x64xf32> to vector<8x64xf32>
    %873 = vector.extract_strided_slice %871 {offsets = [16, 0], sizes = [72, 64], strides = [1, 1]} : vector<96x64xf32> to vector<72x64xf32>
    %874 = tpu.concatenate %873, %872, %872, %872 in 0 : vector<72x64xf32>, vector<8x64xf32>, vector<8x64xf32>, vector<8x64xf32> -> vector<96x64xf32>
    %875 = vector.extract_strided_slice %754 {offsets = [0, 132], sizes = [64, 1], strides = [1, 1]} : vector<64x134xf32> to vector<64x1xf32>
    %876 = vector.extract_strided_slice %754 {offsets = [0, 133], sizes = [64, 1], strides = [1, 1]} : vector<64x134xf32> to vector<64x1xf32>
    %cst_136 = arith.constant dense<0.000000e+00> : vector<96x1xf32>
    %877 = tpu.matmul %871, %875, %cst_136 {dimension_numbers = #tpu.dot_dimension_numbers<[1], [0], [0], [1], [0, 0, 1, 1], [], []>} : vector<96x64xf32>, vector<64x1xf32>, vector<96x1xf32> -> vector<96x1xf32>
    %cst_137 = arith.constant dense<0.000000e+00> : vector<96x1xf32>
    %878 = tpu.matmul %874, %876, %cst_137 {dimension_numbers = #tpu.dot_dimension_numbers<[1], [0], [0], [1], [0, 0, 1, 1], [], []>} : vector<96x64xf32>, vector<64x1xf32>, vector<96x1xf32> -> vector<96x1xf32>
    %879 = arith.addf %877, %878 : vector<96x1xf32>
    %880 = vector.broadcast %3 : vector<1x1xf32> to vector<96x1xf32>
    %881 = arith.addf %879, %880 : vector<96x1xf32>
    %882 = arith.negf %881 : vector<96x1xf32>
    %883 = math.exp %882 : vector<96x1xf32>
    %cst_138 = arith.constant 1.000000e+00 : f32
    %884 = vector.broadcast %cst_138 : f32 to vector<96x1xf32>
    %885 = arith.addf %884, %883 : vector<96x1xf32>
    %886 = arith.divf %884, %885 : vector<96x1xf32>
    %c0_139 = arith.constant 0 : index
    %c0_140 = arith.constant 0 : index
    %887 = vector.load %arg5[%c0_139, %c0_140] : memref<96x1xf32, #tpu.memory_space<vmem>>, vector<96x1xf32>
    tpu.vector_store %arg5[%c0_139, %c0_140], %886 {strides = array<i32>} : memref<96x1xf32, #tpu.memory_space<vmem>>, vector<96x1xf32>,
    return
  }
}

</mosaic_0001>

<llo_original>
// kernel: dec_forward.1
$region0: #{dec_forward.1}
  #allocation0 [shape = 'u32[]', space=smem, size = 0x4, offset = 0x4, fixed_abs, tag = 'smem constant byte address 0x4 - core index']
  #allocation1 [shape = 'u32[72,128]{1,0:T(1,128)}', space=vmem, size = 0x9000, scoped, tag = 'internal scratch']
  #allocation2 [shape = 'f32[96,64]{1,0:T(8,128)}', space=vmem, size = 0xc000, scoped, tag = 'scratch operand']
  %s0 = inlined_call_operand.vmem [shape: f32[96,3], index: 0, kind: input, shape index: {}]
  %s1 = inlined_call_operand.vmem [shape: f32[16,384], index: 1, kind: input, shape index: {}]
  %s2 = inlined_call_operand.vmem [shape: f32[128,384], index: 2, kind: input, shape index: {}]
  %s3 = inlined_call_operand.vmem [shape: f32[64,192], index: 3, kind: input, shape index: {}]
  %s4 = inlined_call_operand.vmem [shape: f32[64,134], index: 4, kind: input, shape index: {}]
  %s5 = inlined_call_operand.vmem [shape: f32[96,1], index: 5, kind: output, shape index: {}]
  %s6 = sld [smem:[#allocation0]]
  $region30: #{dec_forward.1} parent=0
    _
  %s8 = ssub.s32 1, %s6
  %s9 = scalar_select 0, %s8, %s6
  // Predicated region
  $region2: #{dec_forward.1} parent=0 // pred_check
    _
  $region3: #{dec_forward.1} parent=0 // pred_check_branch
    %11 = sbr.rel (0) target = $region5
  $region4: #{dec_forward.1} parent=0 // pred_region
    _
  $region5: #{dec_forward.1} parent=0 // pred_fallthru
    _
  // Predicated region
  $region6: #{dec_forward.1} parent=0 // pred_check
    _
  $region7: #{dec_forward.1} parent=0 // pred_check_branch
    %13 = sbr.rel (0) target = $region9
  $region8: #{dec_forward.1} parent=0 // pred_region
    _
  $region9: #{dec_forward.1} parent=0 // pred_fallthru
    _
  // Predicated region
  $region10: #{dec_forward.1} parent=0 // pred_check
    _
  $region11: #{dec_forward.1} parent=0 // pred_check_branch
    %15 = sbr.rel (0) target = $region13
  $region12: #{dec_forward.1} parent=0 // pred_region
    _
  $region13: #{dec_forward.1} parent=0 // pred_fallthru
    _
  // Predicated region
  $region14: #{dec_forward.1} parent=0 // pred_check
    _
  $region15: #{dec_forward.1} parent=0 // pred_check_branch
    %17 = sbr.rel (0) target = $region17
  $region16: #{dec_forward.1} parent=0 // pred_region
    _
  $region17: #{dec_forward.1} parent=0 // pred_fallthru
    _
  // Predicated region
  $region18: #{dec_forward.1} parent=0 // pred_check
    _
  $region19: #{dec_forward.1} parent=0 // pred_check_branch
    %19 = sbr.rel (0) target = $region21
  $region20: #{dec_forward.1} parent=0 // pred_region
    _
  $region21: #{dec_forward.1} parent=0 // pred_fallthru
    _
  %v20 = vld [vmem:[%s1] sm:$0xff]
  %v21 = vld [vmem:[%s1 + $0x8] sm:$0xff]
  %v22 = vld [vmem:[%s1 + $0x10] sm:$0xff]
  %v23 = vld [vmem:[%s1 + $0x18] sm:$0xff]
  %v24 = vld [vmem:[%s1 + $0x20] sm:$0xff]
  %v25 = vperm.slane %v20, 1
  %v26 = vperm.slane %v21, 1
  %v27 = vperm.slane %v22, 1
  %v28 = vadd.f32 %v25, 0.0
  %v29 = vadd.f32 %v26, 0.0
  %v30 = vadd.f32 %v27, 0.0
  %v31 = vperm.slane %v20, 2
  %v32 = vperm.slane %v21, 2
  %v33 = vadd.f32 %v31, 0.0
  %v34 = vadd.f32 %v32, 0.0
  %v35 = vld [vmem:[%s0] sm:$0xff]
  %v36 = vld [vmem:[%s0 + $0x8] sm:$0xff]
  %v37 = vld [vmem:[%s0 + $0x10] sm:$0xff]
  %v38 = vld [vmem:[%s0 + $0x18] sm:$0xff]
  %v39 = vld [vmem:[%s0 + $0x20] sm:$0xff]
  %v40 = vld [vmem:[%s0 + $0x28] sm:$0xff]
  %v41 = vld [vmem:[%s0 + $0x30] sm:$0xff]
  %v42 = vld [vmem:[%s0 + $0x38] sm:$0xff]
  %v43 = vld [vmem:[%s0 + $0x40] sm:$0xff]
  %v44 = vld [vmem:[%s0 + $0x48] sm:$0xff]
  %v45 = vld [vmem:[%s0 + $0x50] sm:$0xff]
  %v46 = vld [vmem:[%s0 + $0x58] sm:$0xff]
  %v47 = vperm.slane %v20, 0
  %v48 = vperm.slane %v21, 0
  %vm49 = vcmask 23552
  %v51 = vsel %vm49, %v35, 0
  %v54 = vsel %vm49, %v36, 0
  %v57 = vsel %vm49, %v37, 0
  %v60 = vsel %vm49, %v38, 0
  %v63 = vsel %vm49, %v39, 0
  %v66 = vsel %vm49, %v40, 0
  %v69 = vsel %vm49, %v41, 0
  %v72 = vsel %vm49, %v42, 0
  %v75 = vsel %vm49, %v43, 0
  %v78 = vsel %vm49, %v44, 0
  %v81 = vsel %vm49, %v45, 0
  %v84 = vsel %vm49, %v46, 0
  %vm86 = vcmask 1042432
  %v88 = vsel %vm86, %v23, 0
  %v91 = vsel %vm86, %v24, 0
  %93 = vmatpush.msra.mxu0 0.0
  %94 = vmatpush.msra.mxu0 0.0
  %95 = vmatpush.msra.mxu0 0.0
  %96 = vmatpush.msra.mxu0 0.0
  %97 = vmatpush.msra.mxu0 0.0
  %98 = vmatpush.msra.mxu0 0.0
  %99 = vmatpush.msra.mxu0 0.0
  %100 = vmatpush.msra.mxu0 0.0
  %101 = vmatpush.msra.mxu0 0.0
  %102 = vmatpush.msra.mxu0 0.0
  %103 = vmatpush.msra.mxu0 0.0
  %104 = vmatpush.msra.mxu0 0.0
  %105 = vmatpush.msra.mxu0 0.0
  %106 = vmatpush.msra.mxu0 0.0
  %107 = vmatpush.msra.mxu0 0.0
  %108 = vmatpush.msra.mxu0 %v88
  %109 = vmatmul.f32.gmra.mxu0 %v51
  %v110 = vpop.f32.mrf.mxu0
  %v111 = vadd.f32 %v47, %v110
  %112 = vmatmul.f32.gmra.mxu0 %v54
  %v113 = vpop.f32.mrf.mxu0
  %v114 = vadd.f32 %v47, %v113
  %115 = vmatmul.f32.gmra.mxu0 %v57
  %v116 = vpop.f32.mrf.mxu0
  %v117 = vadd.f32 %v47, %v116
  %118 = vmatmul.f32.gmra.mxu0 %v60
  %v119 = vpop.f32.mrf.mxu0
  %v120 = vadd.f32 %v47, %v119
  %121 = vmatmul.f32.gmra.mxu0 %v63
  %v122 = vpop.f32.mrf.mxu0
  %v123 = vadd.f32 %v47, %v122
  %124 = vmatmul.f32.gmra.mxu0 %v66
  %v125 = vpop.f32.mrf.mxu0
  %v126 = vadd.f32 %v47, %v125
  %127 = vmatmul.f32.gmra.mxu0 %v69
  %v128 = vpop.f32.mrf.mxu0
  %v129 = vadd.f32 %v47, %v128
  %130 = vmatmul.f32.gmra.mxu0 %v72
  %v131 = vpop.f32.mrf.mxu0
  %v132 = vadd.f32 %v47, %v131
  %133 = vmatmul.f32.gmra.mxu0 %v75
  %v134 = vpop.f32.mrf.mxu0
  %v135 = vadd.f32 %v47, %v134
  %136 = vmatmul.f32.gmra.mxu0 %v78
  %v137 = vpop.f32.mrf.mxu0
  %v138 = vadd.f32 %v47, %v137
  %139 = vmatmul.f32.gmra.mxu0 %v81
  %v140 = vpop.f32.mrf.mxu0
  %v141 = vadd.f32 %v47, %v140
  %142 = vmatmul.f32.gmra.mxu0 %v84
  %v143 = vpop.f32.mrf.mxu0
  %v144 = vadd.f32 %v47, %v143
  %145 = vdwg.mxu0
  %146 = vmatpush.msra.mxu0 0.0
  %147 = vmatpush.msra.mxu0 0.0
  %148 = vmatpush.msra.mxu0 0.0
  %149 = vmatpush.msra.mxu0 0.0
  %150 = vmatpush.msra.mxu0 0.0
  %151 = vmatpush.msra.mxu0 0.0
  %152 = vmatpush.msra.mxu0 0.0
  %153 = vmatpush.msra.mxu0 0.0
  %154 = vmatpush.msra.mxu0 0.0
  %155 = vmatpush.msra.mxu0 0.0
  %156 = vmatpush.msra.mxu0 0.0
  %157 = vmatpush.msra.mxu0 0.0
  %158 = vmatpush.msra.mxu0 0.0
  %159 = vmatpush.msra.mxu0 0.0
  %160 = vmatpush.msra.mxu0 0.0
  %161 = vmatpush.msra.mxu0 %v91
  %162 = vmatmul.f32.gmra.mxu0 %v51
  %v163 = vpop.f32.mrf.mxu0
  %v164 = vadd.f32 %v48, %v163
  %165 = vmatmul.f32.gmra.mxu0 %v54
  %v166 = vpop.f32.mrf.mxu0
  %v167 = vadd.f32 %v48, %v166
  %168 = vmatmul.f32.gmra.mxu0 %v57
  %v169 = vpop.f32.mrf.mxu0
  %v170 = vadd.f32 %v48, %v169
  %171 = vmatmul.f32.gmra.mxu0 %v60
  %v172 = vpop.f32.mrf.mxu0
  %v173 = vadd.f32 %v48, %v172
  %174 = vmatmul.f32.gmra.mxu0 %v63
  %v175 = vpop.f32.mrf.mxu0
  %v176 = vadd.f32 %v48, %v175
  %177 = vmatmul.f32.gmra.mxu0 %v66
  %v178 = vpop.f32.mrf.mxu0
  %v179 = vadd.f32 %v48, %v178
  %180 = vmatmul.f32.gmra.mxu0 %v69
  %v181 = vpop.f32.mrf.mxu0
  %v182 = vadd.f32 %v48, %v181
  %183 = vmatmul.f32.gmra.mxu0 %v72
  %v184 = vpop.f32.mrf.mxu0
  %v185 = vadd.f32 %v48, %v184
  %186 = vmatmul.f32.gmra.mxu0 %v75
  %v187 = vpop.f32.mrf.mxu0
  %v188 = vadd.f32 %v48, %v187
  %189 = vmatmul.f32.gmra.mxu0 %v78
  %v190 = vpop.f32.mrf.mxu0
  %v191 = vadd.f32 %v48, %v190
  %192 = vmatmul.f32.gmra.mxu0 %v81
  %v193 = vpop.f32.mrf.mxu0
  %v194 = vadd.f32 %v48, %v193
  %195 = vmatmul.f32.gmra.mxu0 %v84
  %v196 = vpop.f32.mrf.mxu0
  %v197 = vadd.f32 %v48, %v196
  %198 = vdwg.mxu0
  %v199 = vld [vmem:[%s2] sm:$0xff]
  %v200 = vld [vmem:[%s2 + $0x8] sm:$0xff]
  %v201 = vld [vmem:[%s2 + $0x10] sm:$0xff]
  %v202 = vld [vmem:[%s2 + $0x18] sm:$0xff]
  %v203 = vld [vmem:[%s2 + $0x20] sm:$0xff]
  %v204 = vld [vmem:[%s2 + $0x28] sm:$0xff]
  %v205 = vld [vmem:[%s2 + $0x30] sm:$0xff]
  %v206 = vld [vmem:[%s2 + $0x38] sm:$0xff]
  %v207 = vld [vmem:[%s2 + $0x40] sm:$0xff]
  %v208 = vld [vmem:[%s2 + $0x48] sm:$0xff]
  %v209 = vld [vmem:[%s2 + $0x50] sm:$0xff]
  %v210 = vld [vmem:[%s2 + $0x58] sm:$0xff]
  %v211 = vld [vmem:[%s2 + $0x60] sm:$0xff]
  %v212 = vld [vmem:[%s2 + $0x68] sm:$0xff]
  %v213 = vld [vmem:[%s2 + $0x70] sm:$0xff]
  %v214 = vld [vmem:[%s2 + $0x78] sm:$0xff]
  %v215 = vld [vmem:[%s2 + $0x80] sm:$0xff]
  %v216 = vld [vmem:[%s2 + $0x88] sm:$0xff]
  %v217 = vld [vmem:[%s2 + $0x90] sm:$0xff]
  %v218 = vld [vmem:[%s2 + $0x98] sm:$0xff]
  %v219 = vld [vmem:[%s2 + $0xa0] sm:$0xff]
  %v220 = vld [vmem:[%s2 + $0xa8] sm:$0xff]
  %v221 = vld [vmem:[%s2 + $0xb0] sm:$0xff]
  %v222 = vld [vmem:[%s2 + $0xb8] sm:$0xff]
  %v223 = vld [vmem:[%s2 + $0xc0] sm:$0xff]
  %v224 = vld [vmem:[%s2 + $0xc8] sm:$0xff]
  %v225 = vld [vmem:[%s2 + $0xd0] sm:$0xff]
  %v226 = vld [vmem:[%s2 + $0xd8] sm:$0xff]
  %v227 = vld [vmem:[%s2 + $0xe0] sm:$0xff]
  %v228 = vld [vmem:[%s2 + $0xe8] sm:$0xff]
  %v229 = vld [vmem:[%s2 + $0xf0] sm:$0xff]
  %v230 = vld [vmem:[%s2 + $0xf8] sm:$0xff]
  %v231 = vld [vmem:[%s2 + $0x100] sm:$0xff]
  %v232 = vld [vmem:[%s2 + $0x108] sm:$0xff]
  %v233 = vld [vmem:[%s2 + $0x110] sm:$0xff]
  %v234 = vld [vmem:[%s2 + $0x118] sm:$0xff]
  %v235 = vld [vmem:[%s2 + $0x120] sm:$0xff]
  %v236 = vld [vmem:[%s2 + $0x128] sm:$0xff]
  %v237 = vld [vmem:[%s2 + $0x130] sm:$0xff]
  %v238 = vld [vmem:[%s2 + $0x138] sm:$0xff]
  %v239 = vld [vmem:[%s2 + $0x140] sm:$0xff]
  %v240 = vld [vmem:[%s2 + $0x148] sm:$0xff]
  %v241 = vld [vmem:[%s2 + $0x150] sm:$0xff]
  %v242 = vld [vmem:[%s2 + $0x158] sm:$0xff]
  %v243 = vld [vmem:[%s2 + $0x160] sm:$0xff]
  %v244 = vld [vmem:[%s2 + $0x168] sm:$0xff]
  %v245 = vld [vmem:[%s2 + $0x170] sm:$0xff]
  %v246 = vld [vmem:[%s2 + $0x178] sm:$0xff]
  %v247 = vld [vmem:[%s3] sm:$0xff]
  %v248 = vld [vmem:[%s3 + $0x8] sm:$0xff]
  %v249 = vld [vmem:[%s3 + $0x10] sm:$0xff]
  %v250 = vld [vmem:[%s3 + $0x18] sm:$0xff]
  %v251 = vld [vmem:[%s3 + $0x20] sm:$0xff]
  %v252 = vld [vmem:[%s3 + $0x28] sm:$0xff]
  %v253 = vld [vmem:[%s3 + $0x30] sm:$0xff]
  %v254 = vld [vmem:[%s3 + $0x38] sm:$0xff]
  %v255 = vld [vmem:[%s3 + $0x40] sm:$0xff]
  %v256 = vld [vmem:[%s3 + $0x48] sm:$0xff]
  %v257 = vld [vmem:[%s3 + $0x50] sm:$0xff]
  %v258 = vld [vmem:[%s3 + $0x58] sm:$0xff]
  %v259 = vld [vmem:[%s3 + $0x60] sm:$0xff]
  %v260 = vld [vmem:[%s3 + $0x68] sm:$0xff]
  %v261 = vld [vmem:[%s3 + $0x70] sm:$0xff]
  %v262 = vld [vmem:[%s3 + $0x78] sm:$0xff]
  %263 = vmatpush.msra.mxu0 %v244
  %264 = vmatpush.msra.mxu0 %v241
  %265 = vmatpush.msra.mxu0 %v238
  %266 = vmatpush.msra.mxu0 %v235
  %267 = vmatpush.msra.mxu0 %v232
  %268 = vmatpush.msra.mxu0 %v229
  %269 = vmatpush.msra.mxu0 %v226
  %270 = vmatpush.msra.mxu0 %v223
  %271 = vmatpush.msra.mxu0 %v220
  %272 = vmatpush.msra.mxu0 %v217
  %273 = vmatpush.msra.mxu0 %v214
  %274 = vmatpush.msra.mxu0 %v211
  %275 = vmatpush.msra.mxu0 %v208
  %276 = vmatpush.msra.mxu0 %v205
  %277 = vmatpush.msra.mxu0 %v202
  %278 = vmatpush.msra.mxu0 %v199
  %279 = vmatmul.f32.gmra.mxu0 0.0
  %v280 = vpop.f32.mrf.mxu0
  %v281 = vadd.f32 %v28, %v280
  %282 = vdwg.mxu0
  %283 = vmatpush.msra.mxu0 %v245
  %284 = vmatpush.msra.mxu0 %v242
  %285 = vmatpush.msra.mxu0 %v239
  %286 = vmatpush.msra.mxu0 %v236
  %287 = vmatpush.msra.mxu0 %v233
  %288 = vmatpush.msra.mxu0 %v230
  %289 = vmatpush.msra.mxu0 %v227
  %290 = vmatpush.msra.mxu0 %v224
  %291 = vmatpush.msra.mxu0 %v221
  %292 = vmatpush.msra.mxu0 %v218
  %293 = vmatpush.msra.mxu0 %v215
  %294 = vmatpush.msra.mxu0 %v212
  %295 = vmatpush.msra.mxu0 %v209
  %296 = vmatpush.msra.mxu0 %v206
  %297 = vmatpush.msra.mxu0 %v203
  %298 = vmatpush.msra.mxu0 %v200
  %299 = vmatmul.f32.gmra.mxu0 0.0
  %v300 = vpop.f32.mrf.mxu0
  %v301 = vadd.f32 %v29, %v300
  %302 = vdwg.mxu0
  %303 = vmatpush.msra.mxu0 %v246
  %304 = vmatpush.msra.mxu0 %v243
  %305 = vmatpush.msra.mxu0 %v240
  %306 = vmatpush.msra.mxu0 %v237
  %307 = vmatpush.msra.mxu0 %v234
  %308 = vmatpush.msra.mxu0 %v231
  %309 = vmatpush.msra.mxu0 %v228
  %310 = vmatpush.msra.mxu0 %v225
  %311 = vmatpush.msra.mxu0 %v222
  %312 = vmatpush.msra.mxu0 %v219
  %313 = vmatpush.msra.mxu0 %v216
  %314 = vmatpush.msra.mxu0 %v213
  %315 = vmatpush.msra.mxu0 %v210
  %316 = vmatpush.msra.mxu0 %v207
  %317 = vmatpush.msra.mxu0 %v204
  %318 = vmatpush.msra.mxu0 %v201
  %319 = vmatmul.f32.gmra.mxu0 0.0
  %v320 = vpop.f32.mrf.mxu0
  %v321 = vadd.f32 %v30, %v320
  %322 = vdwg.mxu0
  %v323 = vadd.f32 %v111, %v281
  %v324 = vxor.u32 %v323, 2147483648
  %v325 = vmul.f32 %v324, 1.442695
  %v326 = vpow.pop %v325
  %v327 = vadd.f32 %v326, 1.0
  %v328 = vrcp.pop %v327
  %v329 = vmul.f32 %v327, %v328
  %v330 = vsub.f32 1.0, %v329
  %v331 = vmul.f32 %v328, %v330
  %v332 = vadd.f32 %v328, %v331
  %vm333 = vweird.f32 %v327
  %vm334 = vweird.f32 %v328
  %vm335 = vmor %vm333, %vm334
  %v336 = vsel %vm335, %v328, %v332
  %v337 = vand.u32 2147483647, %v327
  %vm338 = vcmp.eq.f32.partialorder %v337, 8.507059e+37
  %v339 = vand.u32 %v327, 2147483648
  %v340 = vor.u32 1.1754944e-38, %v339
  %v341 = vsel %vm338, %v340, %v336
  %v342 = vmul.f32 1.0, %v341
  %v343 = vmul.f32 %v342, %v301
  %v344 = vadd.f32 %v164, %v343
  %v345 = vtanh.pop %v344
  %v346 = vsub.f32 1.0, %v342
  %348 = vrot.lane.b32.xlu0 %v345, 64
  %v349 = vpop.permute.xlu0 %348
  %v351 = vmul.f32 %v346, %v349
  %v352 = vmul.f32 %v342, 0.0
  %v353 = vadd.f32 %v351, %v352
  %355 = vrot.lane.b32.xlu0 %v353, 64
  %v356 = vpop.permute.xlu0 %355
  %vm357 = vcmask 523264
  %v358 = vsel %vm357, %v356, 0
  %360 = vmatpush.msra.mxu0 0.0
  %361 = vmatpush.msra.mxu0 0.0
  %362 = vmatpush.msra.mxu0 0.0
  %363 = vmatpush.msra.mxu0 0.0
  %364 = vmatpush.msra.mxu0 0.0
  %365 = vmatpush.msra.mxu0 0.0
  %366 = vmatpush.msra.mxu0 0.0
  %367 = vmatpush.msra.mxu0 0.0
  %368 = vmatpush.msra.mxu0 %v261
  %369 = vmatpush.msra.mxu0 %v259
  %370 = vmatpush.msra.mxu0 %v257
  %371 = vmatpush.msra.mxu0 %v255
  %372 = vmatpush.msra.mxu0 %v253
  %373 = vmatpush.msra.mxu0 %v251
  %374 = vmatpush.msra.mxu0 %v249
  %375 = vmatpush.msra.mxu0 %v247
  %376 = vmatmul.f32.gmra.mxu0 %v358
  %v377 = vpop.f32.mrf.mxu0
  %v378 = vadd.f32 %v33, %v377
  %379 = vdwg.mxu0
  %380 = vmatpush.msra.mxu0 0.0
  %381 = vmatpush.msra.mxu0 0.0
  %382 = vmatpush.msra.mxu0 0.0
  %383 = vmatpush.msra.mxu0 0.0
  %384 = vmatpush.msra.mxu0 0.0
  %385 = vmatpush.msra.mxu0 0.0
  %386 = vmatpush.msra.mxu0 0.0
  %387 = vmatpush.msra.mxu0 0.0
  %388 = vmatpush.msra.mxu0 %v262
  %389 = vmatpush.msra.mxu0 %v260
  %390 = vmatpush.msra.mxu0 %v258
  %391 = vmatpush.msra.mxu0 %v256
  %392 = vmatpush.msra.mxu0 %v254
  %393 = vmatpush.msra.mxu0 %v252
  %394 = vmatpush.msra.mxu0 %v250
  %395 = vmatpush.msra.mxu0 %v248
  %396 = vmatmul.f32.gmra.mxu0 %v358
  %v397 = vpop.f32.mrf.mxu0
  %v398 = vadd.f32 %v34, %v397
  %399 = vdwg.mxu0
  %401 = vrot.lane.b32.xlu0 %v301, 64
  %v402 = vpop.permute.xlu0 %401
  %v404 = vadd.f32 %v378, %v402
  %v405 = vxor.u32 %v404, 2147483648
  %v406 = vmul.f32 %v405, 1.442695
  %v407 = vpow.pop %v406
  %v408 = vadd.f32 %v407, 1.0
  %v409 = vrcp.pop %v408
  %v410 = vmul.f32 %v408, %v409
  %v411 = vsub.f32 1.0, %v410
  %v412 = vmul.f32 %v409, %v411
  %v413 = vadd.f32 %v409, %v412
  %vm414 = vweird.f32 %v408
  %vm415 = vweird.f32 %v409
  %vm416 = vmor %vm414, %vm415
  %v417 = vsel %vm416, %v409, %v413
  %v418 = vand.u32 2147483647, %v408
  %vm419 = vcmp.eq.f32.partialorder %v418, 8.507059e+37
  %v420 = vand.u32 %v408, 2147483648
  %v421 = vor.u32 1.1754944e-38, %v420
  %v422 = vsel %vm419, %v421, %v417
  %v423 = vmul.f32 1.0, %v422
  %425 = vrot.lane.b32.xlu0 %v321, 64
  %v426 = vpop.permute.xlu0 %425
  %v428 = vadd.f32 %v378, %v426
  %v429 = vxor.u32 %v428, 2147483648
  %v430 = vmul.f32 %v429, 1.442695
  %v431 = vpow.pop %v430
  %v432 = vadd.f32 %v431, 1.0
  %v433 = vrcp.pop %v432
  %v434 = vmul.f32 %v432, %v433
  %v435 = vsub.f32 1.0, %v434
  %v436 = vmul.f32 %v433, %v435
  %v437 = vadd.f32 %v433, %v436
  %vm438 = vweird.f32 %v432
  %vm439 = vweird.f32 %v433
  %vm440 = vmor %vm438, %vm439
  %v441 = vsel %vm440, %v433, %v437
  %v442 = vand.u32 2147483647, %v432
  %vm443 = vcmp.eq.f32.partialorder %v442, 8.507059e+37
  %v444 = vand.u32 %v432, 2147483648
  %v445 = vor.u32 1.1754944e-38, %v444
  %v446 = vsel %vm443, %v445, %v441
  %v447 = vmul.f32 1.0, %v446
  %v448 = vmul.f32 %v423, %v426
  %v449 = vadd.f32 %v398, %v448
  %v450 = vtanh.pop %v449
  %v451 = vsub.f32 1.0, %v447
  %453 = vrot.lane.b32.xlu0 %v450, 64
  %v454 = vpop.permute.xlu0 %453
  %v456 = vmul.f32 %v451, %v454
  %v457 = vmul.f32 %v447, 0.0
  %v458 = vadd.f32 %v456, %v457
  %460 = vrot.lane.b32.xlu0 %v458, 64
  %v461 = vpop.permute.xlu0 %460
  %463 = vst.msk [vmem:[#allocation2] sm:$0xff] %vm357, %v461
  %v465 = vsel %vm357, %v356, %v458
  %466 = vmatpush.msra.mxu0 %v244
  %467 = vmatpush.msra.mxu0 %v241
  %468 = vmatpush.msra.mxu0 %v238
  %469 = vmatpush.msra.mxu0 %v235
  %470 = vmatpush.msra.mxu0 %v232
  %471 = vmatpush.msra.mxu0 %v229
  %472 = vmatpush.msra.mxu0 %v226
  %473 = vmatpush.msra.mxu0 %v223
  %474 = vmatpush.msra.mxu0 %v220
  %475 = vmatpush.msra.mxu0 %v217
  %476 = vmatpush.msra.mxu0 %v214
  %477 = vmatpush.msra.mxu0 %v211
  %478 = vmatpush.msra.mxu0 %v208
  %479 = vmatpush.msra.mxu0 %v205
  %480 = vmatpush.msra.mxu0 %v202
  %481 = vmatpush.msra.mxu0 %v199
  %482 = vmatmul.f32.gmra.mxu0 %v465
  %v483 = vpop.f32.mrf.mxu0
  %v484 = vadd.f32 %v28, %v483
  %485 = vdwg.mxu0
  %486 = vmatpush.msra.mxu0 %v245
  %487 = vmatpush.msra.mxu0 %v242
  %488 = vmatpush.msra.mxu0 %v239
  %489 = vmatpush.msra.mxu0 %v236
  %490 = vmatpush.msra.mxu0 %v233
  %491 = vmatpush.msra.mxu0 %v230
  %492 = vmatpush.msra.mxu0 %v227
  %493 = vmatpush.msra.mxu0 %v224
  %494 = vmatpush.msra.mxu0 %v221
  %495 = vmatpush.msra.mxu0 %v218
  %496 = vmatpush.msra.mxu0 %v215
  %497 = vmatpush.msra.mxu0 %v212
  %498 = vmatpush.msra.mxu0 %v209
  %499 = vmatpush.msra.mxu0 %v206
  %500 = vmatpush.msra.mxu0 %v203
  %501 = vmatpush.msra.mxu0 %v200
  %502 = vmatmul.f32.gmra.mxu0 %v465
  %v503 = vpop.f32.mrf.mxu0
  %v504 = vadd.f32 %v29, %v503
  %505 = vdwg.mxu0
  %506 = vmatpush.msra.mxu0 %v246
  %507 = vmatpush.msra.mxu0 %v243
  %508 = vmatpush.msra.mxu0 %v240
  %509 = vmatpush.msra.mxu0 %v237
  %510 = vmatpush.msra.mxu0 %v234
  %511 = vmatpush.msra.mxu0 %v231
  %512 = vmatpush.msra.mxu0 %v228
  %513 = vmatpush.msra.mxu0 %v225
  %514 = vmatpush.msra.mxu0 %v222
  %515 = vmatpush.msra.mxu0 %v219
  %516 = vmatpush.msra.mxu0 %v216
  %517 = vmatpush.msra.mxu0 %v213
  %518 = vmatpush.msra.mxu0 %v210
  %519 = vmatpush.msra.mxu0 %v207
  %520 = vmatpush.msra.mxu0 %v204
  %521 = vmatpush.msra.mxu0 %v201
  %522 = vmatmul.f32.gmra.mxu0 %v465
  %v523 = vpop.f32.mrf.mxu0
  %v524 = vadd.f32 %v30, %v523
  %525 = vdwg.mxu0
  %v526 = vadd.f32 %v114, %v484
  %v527 = vxor.u32 %v526, 2147483648
  %v528 = vmul.f32 %v527, 1.442695
  %v529 = vpow.pop %v528
  %v530 = vadd.f32 %v529, 1.0
  %v531 = vrcp.pop %v530
  %v532 = vmul.f32 %v530, %v531
  %v533 = vsub.f32 1.0, %v532
  %v534 = vmul.f32 %v531, %v533
  %v535 = vadd.f32 %v531, %v534
  %vm536 = vweird.f32 %v530
  %vm537 = vweird.f32 %v531
  %vm538 = vmor %vm536, %vm537
  %v539 = vsel %vm538, %v531, %v535
  %v540 = vand.u32 2147483647, %v530
  %vm541 = vcmp.eq.f32.partialorder %v540, 8.507059e+37
  %v542 = vand.u32 %v530, 2147483648
  %v543 = vor.u32 1.1754944e-38, %v542
  %v544 = vsel %vm541, %v543, %v539
  %v545 = vmul.f32 1.0, %v544
  %v546 = vmul.f32 %v545, %v504
  %v547 = vadd.f32 %v167, %v546
  %v548 = vtanh.pop %v547
  %v549 = vsub.f32 1.0, %v545
  %551 = vrot.lane.b32.xlu0 %v548, 64
  %v552 = vpop.permute.xlu0 %551
  %v554 = vmul.f32 %v549, %v552
  %v555 = vmul.f32 %v545, %v353
  %v556 = vadd.f32 %v554, %v555
  %558 = vrot.lane.b32.xlu0 %v556, 64
  %v559 = vpop.permute.xlu0 %558
  %v560 = vsel %vm357, %v559, 0
  %562 = vmatpush.msra.mxu0 0.0
  %563 = vmatpush.msra.mxu0 0.0
  %564 = vmatpush.msra.mxu0 0.0
  %565 = vmatpush.msra.mxu0 0.0
  %566 = vmatpush.msra.mxu0 0.0
  %567 = vmatpush.msra.mxu0 0.0
  %568 = vmatpush.msra.mxu0 0.0
  %569 = vmatpush.msra.mxu0 0.0
  %570 = vmatpush.msra.mxu0 %v261
  %571 = vmatpush.msra.mxu0 %v259
  %572 = vmatpush.msra.mxu0 %v257
  %573 = vmatpush.msra.mxu0 %v255
  %574 = vmatpush.msra.mxu0 %v253
  %575 = vmatpush.msra.mxu0 %v251
  %576 = vmatpush.msra.mxu0 %v249
  %577 = vmatpush.msra.mxu0 %v247
  %578 = vmatmul.f32.gmra.mxu0 %v560
  %v579 = vpop.f32.mrf.mxu0
  %v580 = vadd.f32 %v33, %v579
  %581 = vdwg.mxu0
  %582 = vmatpush.msra.mxu0 0.0
  %583 = vmatpush.msra.mxu0 0.0
  %584 = vmatpush.msra.mxu0 0.0
  %585 = vmatpush.msra.mxu0 0.0
  %586 = vmatpush.msra.mxu0 0.0
  %587 = vmatpush.msra.mxu0 0.0
  %588 = vmatpush.msra.mxu0 0.0
  %589 = vmatpush.msra.mxu0 0.0
  %590 = vmatpush.msra.mxu0 %v262
  %591 = vmatpush.msra.mxu0 %v260
  %592 = vmatpush.msra.mxu0 %v258
  %593 = vmatpush.msra.mxu0 %v256
  %594 = vmatpush.msra.mxu0 %v254
  %595 = vmatpush.msra.mxu0 %v252
  %596 = vmatpush.msra.mxu0 %v250
  %597 = vmatpush.msra.mxu0 %v248
  %598 = vmatmul.f32.gmra.mxu0 %v560
  %v599 = vpop.f32.mrf.mxu0
  %v600 = vadd.f32 %v34, %v599
  %601 = vdwg.mxu0
  %603 = vrot.lane.b32.xlu0 %v504, 64
  %v604 = vpop.permute.xlu0 %603
  %v606 = vadd.f32 %v580, %v604
  %v607 = vxor.u32 %v606, 2147483648
  %v608 = vmul.f32 %v607, 1.442695
  %v609 = vpow.pop %v608
  %v610 = vadd.f32 %v609, 1.0
  %v611 = vrcp.pop %v610
  %v612 = vmul.f32 %v610, %v611
  %v613 = vsub.f32 1.0, %v612
  %v614 = vmul.f32 %v611, %v613
  %v615 = vadd.f32 %v611, %v614
  %vm616 = vweird.f32 %v610
  %vm617 = vweird.f32 %v611
  %vm618 = vmor %vm616, %vm617
  %v619 = vsel %vm618, %v611, %v615
  %v620 = vand.u32 2147483647, %v610
  %vm621 = vcmp.eq.f32.partialorder %v620, 8.507059e+37
  %v622 = vand.u32 %v610, 2147483648
  %v623 = vor.u32 1.1754944e-38, %v622
  %v624 = vsel %vm621, %v623, %v619
  %v625 = vmul.f32 1.0, %v624
  %627 = vrot.lane.b32.xlu0 %v524, 64
  %v628 = vpop.permute.xlu0 %627
  %v630 = vadd.f32 %v580, %v628
  %v631 = vxor.u32 %v630, 2147483648
  %v632 = vmul.f32 %v631, 1.442695
  %v633 = vpow.pop %v632
  %v634 = vadd.f32 %v633, 1.0
  %v635 = vrcp.pop %v634
  %v636 = vmul.f32 %v634, %v635
  %v637 = vsub.f32 1.0, %v636
  %v638 = vmul.f32 %v635, %v637
  %v639 = vadd.f32 %v635, %v638
  %vm640 = vweird.f32 %v634
  %vm641 = vweird.f32 %v635
  %vm642 = vmor %vm640, %vm641
  %v643 = vsel %vm642, %v635, %v639
  %v644 = vand.u32 2147483647, %v634
  %vm645 = vcmp.eq.f32.partialorder %v644, 8.507059e+37
  %v646 = vand.u32 %v634, 2147483648
  %v647 = vor.u32 1.1754944e-38, %v646
  %v648 = vsel %vm645, %v647, %v643
  %v649 = vmul.f32 1.0, %v648
  %v650 = vmul.f32 %v625, %v628
  %v651 = vadd.f32 %v600, %v650
  %v652 = vtanh.pop %v651
  %v653 = vsub.f32 1.0, %v649
  %655 = vrot.lane.b32.xlu0 %v652, 64
  %v656 = vpop.permute.xlu0 %655
  %v658 = vmul.f32 %v653, %v656
  %v659 = vmul.f32 %v649, %v458
  %v660 = vadd.f32 %v658, %v659
  %662 = vrot.lane.b32.xlu0 %v660, 64
  %v663 = vpop.permute.xlu0 %662
  %665 = vst.msk [vmem:[#allocation2 + $0x8] sm:$0xff] %vm357, %v663
  %v667 = vsel %vm357, %v559, %v660
  %668 = vmatpush.msra.mxu0 %v244
  %669 = vmatpush.msra.mxu0 %v241
  %670 = vmatpush.msra.mxu0 %v238
  %671 = vmatpush.msra.mxu0 %v235
  %672 = vmatpush.msra.mxu0 %v232
  %673 = vmatpush.msra.mxu0 %v229
  %674 = vmatpush.msra.mxu0 %v226
  %675 = vmatpush.msra.mxu0 %v223
  %676 = vmatpush.msra.mxu0 %v220
  %677 = vmatpush.msra.mxu0 %v217
  %678 = vmatpush.msra.mxu0 %v214
  %679 = vmatpush.msra.mxu0 %v211
  %680 = vmatpush.msra.mxu0 %v208
  %681 = vmatpush.msra.mxu0 %v205
  %682 = vmatpush.msra.mxu0 %v202
  %683 = vmatpush.msra.mxu0 %v199
  %684 = vmatmul.f32.gmra.mxu0 %v667
  %v685 = vpop.f32.mrf.mxu0
  %v686 = vadd.f32 %v28, %v685
  %687 = vdwg.mxu0
  %688 = vmatpush.msra.mxu0 %v245
  %689 = vmatpush.msra.mxu0 %v242
  %690 = vmatpush.msra.mxu0 %v239
  %691 = vmatpush.msra.mxu0 %v236
  %692 = vmatpush.msra.mxu0 %v233
  %693 = vmatpush.msra.mxu0 %v230
  %694 = vmatpush.msra.mxu0 %v227
  %695 = vmatpush.msra.mxu0 %v224
  %696 = vmatpush.msra.mxu0 %v221
  %697 = vmatpush.msra.mxu0 %v218
  %698 = vmatpush.msra.mxu0 %v215
  %699 = vmatpush.msra.mxu0 %v212
  %700 = vmatpush.msra.mxu0 %v209
  %701 = vmatpush.msra.mxu0 %v206
  %702 = vmatpush.msra.mxu0 %v203
  %703 = vmatpush.msra.mxu0 %v200
  %704 = vmatmul.f32.gmra.mxu0 %v667
  %v705 = vpop.f32.mrf.mxu0
  %v706 = vadd.f32 %v29, %v705
  %707 = vdwg.mxu0
  %708 = vmatpush.msra.mxu0 %v246
  %709 = vmatpush.msra.mxu0 %v243
  %710 = vmatpush.msra.mxu0 %v240
  %711 = vmatpush.msra.mxu0 %v237
  %712 = vmatpush.msra.mxu0 %v234
  %713 = vmatpush.msra.mxu0 %v231
  %714 = vmatpush.msra.mxu0 %v228
  %715 = vmatpush.msra.mxu0 %v225
  %716 = vmatpush.msra.mxu0 %v222
  %717 = vmatpush.msra.mxu0 %v219
  %718 = vmatpush.msra.mxu0 %v216
  %719 = vmatpush.msra.mxu0 %v213
  %720 = vmatpush.msra.mxu0 %v210
  %721 = vmatpush.msra.mxu0 %v207
  %722 = vmatpush.msra.mxu0 %v204
  %723 = vmatpush.msra.mxu0 %v201
  %724 = vmatmul.f32.gmra.mxu0 %v667
  %v725 = vpop.f32.mrf.mxu0
  %v726 = vadd.f32 %v30, %v725
  %727 = vdwg.mxu0
  %v728 = vadd.f32 %v117, %v686
  %v729 = vxor.u32 %v728, 2147483648
  %v730 = vmul.f32 %v729, 1.442695
  %v731 = vpow.pop %v730
  %v732 = vadd.f32 %v731, 1.0
  %v733 = vrcp.pop %v732
  %v734 = vmul.f32 %v732, %v733
  %v735 = vsub.f32 1.0, %v734
  %v736 = vmul.f32 %v733, %v735
  %v737 = vadd.f32 %v733, %v736
  %vm738 = vweird.f32 %v732
  %vm739 = vweird.f32 %v733
  %vm740 = vmor %vm738, %vm739
  %v741 = vsel %vm740, %v733, %v737
  %v742 = vand.u32 2147483647, %v732
  %vm743 = vcmp.eq.f32.partialorder %v742, 8.507059e+37
  %v744 = vand.u32 %v732, 2147483648
  %v745 = vor.u32 1.1754944e-38, %v744
  %v746 = vsel %vm743, %v745, %v741
  %v747 = vmul.f32 1.0, %v746
  %v748 = vmul.f32 %v747, %v706
  %v749 = vadd.f32 %v170, %v748
  %v750 = vtanh.pop %v749
  %v751 = vsub.f32 1.0, %v747
  %753 = vrot.lane.b32.xlu0 %v750, 64
  %v754 = vpop.permute.xlu0 %753
  %v756 = vmul.f32 %v751, %v754
  %v757 = vmul.f32 %v747, %v556
  %v758 = vadd.f32 %v756, %v757
  %760 = vrot.lane.b32.xlu0 %v758, 64
  %v761 = vpop.permute.xlu0 %760
  %v762 = vsel %vm357, %v761, 0
  %764 = vmatpush.msra.mxu0 0.0
  %765 = vmatpush.msra.mxu0 0.0
  %766 = vmatpush.msra.mxu0 0.0
  %767 = vmatpush.msra.mxu0 0.0
  %768 = vmatpush.msra.mxu0 0.0
  %769 = vmatpush.msra.mxu0 0.0
  %770 = vmatpush.msra.mxu0 0.0
  %771 = vmatpush.msra.mxu0 0.0
  %772 = vmatpush.msra.mxu0 %v261
  %773 = vmatpush.msra.mxu0 %v259
  %774 = vmatpush.msra.mxu0 %v257
  %775 = vmatpush.msra.mxu0 %v255
  %776 = vmatpush.msra.mxu0 %v253
  %777 = vmatpush.msra.mxu0 %v251
  %778 = vmatpush.msra.mxu0 %v249
  %779 = vmatpush.msra.mxu0 %v247
  %780 = vmatmul.f32.gmra.mxu0 %v762
  %v781 = vpop.f32.mrf.mxu0
  %v782 = vadd.f32 %v33, %v781
  %783 = vdwg.mxu0
  %784 = vmatpush.msra.mxu0 0.0
  %785 = vmatpush.msra.mxu0 0.0
  %786 = vmatpush.msra.mxu0 0.0
  %787 = vmatpush.msra.mxu0 0.0
  %788 = vmatpush.msra.mxu0 0.0
  %789 = vmatpush.msra.mxu0 0.0
  %790 = vmatpush.msra.mxu0 0.0
  %791 = vmatpush.msra.mxu0 0.0
  %792 = vmatpush.msra.mxu0 %v262
  %793 = vmatpush.msra.mxu0 %v260
  %794 = vmatpush.msra.mxu0 %v258
  %795 = vmatpush.msra.mxu0 %v256
  %796 = vmatpush.msra.mxu0 %v254
  %797 = vmatpush.msra.mxu0 %v252
  %798 = vmatpush.msra.mxu0 %v250
  %799 = vmatpush.msra.mxu0 %v248
  %800 = vmatmul.f32.gmra.mxu0 %v762
  %v801 = vpop.f32.mrf.mxu0
  %v802 = vadd.f32 %v34, %v801
  %803 = vdwg.mxu0
  %805 = vrot.lane.b32.xlu0 %v706, 64
  %v806 = vpop.permute.xlu0 %805
  %v808 = vadd.f32 %v782, %v806
  %v809 = vxor.u32 %v808, 2147483648
  %v810 = vmul.f32 %v809, 1.442695
  %v811 = vpow.pop %v810
  %v812 = vadd.f32 %v811, 1.0
  %v813 = vrcp.pop %v812
  %v814 = vmul.f32 %v812, %v813
  %v815 = vsub.f32 1.0, %v814
  %v816 = vmul.f32 %v813, %v815
  %v817 = vadd.f32 %v813, %v816
  %vm818 = vweird.f32 %v812
  %vm819 = vweird.f32 %v813
  %vm820 = vmor %vm818, %vm819
  %v821 = vsel %vm820, %v813, %v817
  %v822 = vand.u32 2147483647, %v812
  %vm823 = vcmp.eq.f32.partialorder %v822, 8.507059e+37
  %v824 = vand.u32 %v812, 2147483648
  %v825 = vor.u32 1.1754944e-38, %v824
  %v826 = vsel %vm823, %v825, %v821
  %v827 = vmul.f32 1.0, %v826
  %829 = vrot.lane.b32.xlu0 %v726, 64
  %v830 = vpop.permute.xlu0 %829
  %v832 = vadd.f32 %v782, %v830
  %v833 = vxor.u32 %v832, 2147483648
  %v834 = vmul.f32 %v833, 1.442695
  %v835 = vpow.pop %v834
  %v836 = vadd.f32 %v835, 1.0
  %v837 = vrcp.pop %v836
  %v838 = vmul.f32 %v836, %v837
  %v839 = vsub.f32 1.0, %v838
  %v840 = vmul.f32 %v837, %v839
  %v841 = vadd.f32 %v837, %v840
  %vm842 = vweird.f32 %v836
  %vm843 = vweird.f32 %v837
  %vm844 = vmor %vm842, %vm843
  %v845 = vsel %vm844, %v837, %v841
  %v846 = vand.u32 2147483647, %v836
  %vm847 = vcmp.eq.f32.partialorder %v846, 8.507059e+37
  %v848 = vand.u32 %v836, 2147483648
  %v849 = vor.u32 1.1754944e-38, %v848
  %v850 = vsel %vm847, %v849, %v845
  %v851 = vmul.f32 1.0, %v850
  %v852 = vmul.f32 %v827, %v830
  %v853 = vadd.f32 %v802, %v852
  %v854 = vtanh.pop %v853
  %v855 = vsub.f32 1.0, %v851
  %857 = vrot.lane.b32.xlu0 %v854, 64
  %v858 = vpop.permute.xlu0 %857
  %v860 = vmul.f32 %v855, %v858
  %v861 = vmul.f32 %v851, %v660
  %v862 = vadd.f32 %v860, %v861
  %864 = vrot.lane.b32.xlu0 %v862, 64
  %v865 = vpop.permute.xlu0 %864
  %867 = vst.msk [vmem:[#allocation2 + $0x10] sm:$0xff] %vm357, %v865
  %v869 = vsel %vm357, %v761, %v862
  %870 = vmatpush.msra.mxu0 %v244
  %871 = vmatpush.msra.mxu0 %v241
  %872 = vmatpush.msra.mxu0 %v238
  %873 = vmatpush.msra.mxu0 %v235
  %874 = vmatpush.msra.mxu0 %v232
  %875 = vmatpush.msra.mxu0 %v229
  %876 = vmatpush.msra.mxu0 %v226
  %877 = vmatpush.msra.mxu0 %v223
  %878 = vmatpush.msra.mxu0 %v220
  %879 = vmatpush.msra.mxu0 %v217
  %880 = vmatpush.msra.mxu0 %v214
  %881 = vmatpush.msra.mxu0 %v211
  %882 = vmatpush.msra.mxu0 %v208
  %883 = vmatpush.msra.mxu0 %v205
  %884 = vmatpush.msra.mxu0 %v202
  %885 = vmatpush.msra.mxu0 %v199
  %886 = vmatmul.f32.gmra.mxu0 %v869
  %v887 = vpop.f32.mrf.mxu0
  %v888 = vadd.f32 %v28, %v887
  %889 = vdwg.mxu0
  %890 = vmatpush.msra.mxu0 %v245
  %891 = vmatpush.msra.mxu0 %v242
  %892 = vmatpush.msra.mxu0 %v239
  %893 = vmatpush.msra.mxu0 %v236
  %894 = vmatpush.msra.mxu0 %v233
  %895 = vmatpush.msra.mxu0 %v230
  %896 = vmatpush.msra.mxu0 %v227
  %897 = vmatpush.msra.mxu0 %v224
  %898 = vmatpush.msra.mxu0 %v221
  %899 = vmatpush.msra.mxu0 %v218
  %900 = vmatpush.msra.mxu0 %v215
  %901 = vmatpush.msra.mxu0 %v212
  %902 = vmatpush.msra.mxu0 %v209
  %903 = vmatpush.msra.mxu0 %v206
  %904 = vmatpush.msra.mxu0 %v203
  %905 = vmatpush.msra.mxu0 %v200
  %906 = vmatmul.f32.gmra.mxu0 %v869
  %v907 = vpop.f32.mrf.mxu0
  %v908 = vadd.f32 %v29, %v907
  %909 = vdwg.mxu0
  %910 = vmatpush.msra.mxu0 %v246
  %911 = vmatpush.msra.mxu0 %v243
  %912 = vmatpush.msra.mxu0 %v240
  %913 = vmatpush.msra.mxu0 %v237
  %914 = vmatpush.msra.mxu0 %v234
  %915 = vmatpush.msra.mxu0 %v231
  %916 = vmatpush.msra.mxu0 %v228
  %917 = vmatpush.msra.mxu0 %v225
  %918 = vmatpush.msra.mxu0 %v222
  %919 = vmatpush.msra.mxu0 %v219
  %920 = vmatpush.msra.mxu0 %v216
  %921 = vmatpush.msra.mxu0 %v213
  %922 = vmatpush.msra.mxu0 %v210
  %923 = vmatpush.msra.mxu0 %v207
  %924 = vmatpush.msra.mxu0 %v204
  %925 = vmatpush.msra.mxu0 %v201
  %926 = vmatmul.f32.gmra.mxu0 %v869
  %v927 = vpop.f32.mrf.mxu0
  %v928 = vadd.f32 %v30, %v927
  %929 = vdwg.mxu0
  %v930 = vadd.f32 %v120, %v888
  %v931 = vxor.u32 %v930, 2147483648
  %v932 = vmul.f32 %v931, 1.442695
  %v933 = vpow.pop %v932
  %v934 = vadd.f32 %v933, 1.0
  %v935 = vrcp.pop %v934
  %v936 = vmul.f32 %v934, %v935
  %v937 = vsub.f32 1.0, %v936
  %v938 = vmul.f32 %v935, %v937
  %v939 = vadd.f32 %v935, %v938
  %vm940 = vweird.f32 %v934
  %vm941 = vweird.f32 %v935
  %vm942 = vmor %vm940, %vm941
  %v943 = vsel %vm942, %v935, %v939
  %v944 = vand.u32 2147483647, %v934
  %vm945 = vcmp.eq.f32.partialorder %v944, 8.507059e+37
  %v946 = vand.u32 %v934, 2147483648
  %v947 = vor.u32 1.1754944e-38, %v946
  %v948 = vsel %vm945, %v947, %v943
  %v949 = vmul.f32 1.0, %v948
  %v950 = vmul.f32 %v949, %v908
  %v951 = vadd.f32 %v173, %v950
  %v952 = vtanh.pop %v951
  %v953 = vsub.f32 1.0, %v949
  %955 = vrot.lane.b32.xlu0 %v952, 64
  %v956 = vpop.permute.xlu0 %955
  %v958 = vmul.f32 %v953, %v956
  %v959 = vmul.f32 %v949, %v758
  %v960 = vadd.f32 %v958, %v959
  %962 = vrot.lane.b32.xlu0 %v960, 64
  %v963 = vpop.permute.xlu0 %962
  %v964 = vsel %vm357, %v963, 0
  %966 = vmatpush.msra.mxu0 0.0
  %967 = vmatpush.msra.mxu0 0.0
  %968 = vmatpush.msra.mxu0 0.0
  %969 = vmatpush.msra.mxu0 0.0
  %970 = vmatpush.msra.mxu0 0.0
  %971 = vmatpush.msra.mxu0 0.0
  %972 = vmatpush.msra.mxu0 0.0
  %973 = vmatpush.msra.mxu0 0.0
  %974 = vmatpush.msra.mxu0 %v261
  %975 = vmatpush.msra.mxu0 %v259
  %976 = vmatpush.msra.mxu0 %v257
  %977 = vmatpush.msra.mxu0 %v255
  %978 = vmatpush.msra.mxu0 %v253
  %979 = vmatpush.msra.mxu0 %v251
  %980 = vmatpush.msra.mxu0 %v249
  %981 = vmatpush.msra.mxu0 %v247
  %982 = vmatmul.f32.gmra.mxu0 %v964
  %v983 = vpop.f32.mrf.mxu0
  %v984 = vadd.f32 %v33, %v983
  %985 = vdwg.mxu0
  %986 = vmatpush.msra.mxu0 0.0
  %987 = vmatpush.msra.mxu0 0.0
  %988 = vmatpush.msra.mxu0 0.0
  %989 = vmatpush.msra.mxu0 0.0
  %990 = vmatpush.msra.mxu0 0.0
  %991 = vmatpush.msra.mxu0 0.0
  %992 = vmatpush.msra.mxu0 0.0
  %993 = vmatpush.msra.mxu0 0.0
  %994 = vmatpush.msra.mxu0 %v262
  %995 = vmatpush.msra.mxu0 %v260
  %996 = vmatpush.msra.mxu0 %v258
  %997 = vmatpush.msra.mxu0 %v256
  %998 = vmatpush.msra.mxu0 %v254
  %999 = vmatpush.msra.mxu0 %v252
  %1000 = vmatpush.msra.mxu0 %v250
  %1001 = vmatpush.msra.mxu0 %v248
  %1002 = vmatmul.f32.gmra.mxu0 %v964
  %v1003 = vpop.f32.mrf.mxu0
  %v1004 = vadd.f32 %v34, %v1003
  %1005 = vdwg.mxu0
  %1007 = vrot.lane.b32.xlu0 %v908, 64
  %v1008 = vpop.permute.xlu0 %1007
  %v1010 = vadd.f32 %v984, %v1008
  %v1011 = vxor.u32 %v1010, 2147483648
  %v1012 = vmul.f32 %v1011, 1.442695
  %v1013 = vpow.pop %v1012
  %v1014 = vadd.f32 %v1013, 1.0
  %v1015 = vrcp.pop %v1014
  %v1016 = vmul.f32 %v1014, %v1015
  %v1017 = vsub.f32 1.0, %v1016
  %v1018 = vmul.f32 %v1015, %v1017
  %v1019 = vadd.f32 %v1015, %v1018
  %vm1020 = vweird.f32 %v1014
  %vm1021 = vweird.f32 %v1015
  %vm1022 = vmor %vm1020, %vm1021
  %v1023 = vsel %vm1022, %v1015, %v1019
  %v1024 = vand.u32 2147483647, %v1014
  %vm1025 = vcmp.eq.f32.partialorder %v1024, 8.507059e+37
  %v1026 = vand.u32 %v1014, 2147483648
  %v1027 = vor.u32 1.1754944e-38, %v1026
  %v1028 = vsel %vm1025, %v1027, %v1023
  %v1029 = vmul.f32 1.0, %v1028
  %1031 = vrot.lane.b32.xlu0 %v928, 64
  %v1032 = vpop.permute.xlu0 %1031
  %v1034 = vadd.f32 %v984, %v1032
  %v1035 = vxor.u32 %v1034, 2147483648
  %v1036 = vmul.f32 %v1035, 1.442695
  %v1037 = vpow.pop %v1036
  %v1038 = vadd.f32 %v1037, 1.0
  %v1039 = vrcp.pop %v1038
  %v1040 = vmul.f32 %v1038, %v1039
  %v1041 = vsub.f32 1.0, %v1040
  %v1042 = vmul.f32 %v1039, %v1041
  %v1043 = vadd.f32 %v1039, %v1042
  %vm1044 = vweird.f32 %v1038
  %vm1045 = vweird.f32 %v1039
  %vm1046 = vmor %vm1044, %vm1045
  %v1047 = vsel %vm1046, %v1039, %v1043
  %v1048 = vand.u32 2147483647, %v1038
  %vm1049 = vcmp.eq.f32.partialorder %v1048, 8.507059e+37
  %v1050 = vand.u32 %v1038, 2147483648
  %v1051 = vor.u32 1.1754944e-38, %v1050
  %v1052 = vsel %vm1049, %v1051, %v1047
  %v1053 = vmul.f32 1.0, %v1052
  %v1054 = vmul.f32 %v1029, %v1032
  %v1055 = vadd.f32 %v1004, %v1054
  %v1056 = vtanh.pop %v1055
  %v1057 = vsub.f32 1.0, %v1053
  %1059 = vrot.lane.b32.xlu0 %v1056, 64
  %v1060 = vpop.permute.xlu0 %1059
  %v1062 = vmul.f32 %v1057, %v1060
  %v1063 = vmul.f32 %v1053, %v862
  %v1064 = vadd.f32 %v1062, %v1063
  %1066 = vrot.lane.b32.xlu0 %v1064, 64
  %v1067 = vpop.permute.xlu0 %1066
  %1069 = vst.msk [vmem:[#allocation2 + $0x18] sm:$0xff] %vm357, %v1067
  %v1071 = vsel %vm357, %v963, %v1064
  %1072 = vmatpush.msra.mxu0 %v244
  %1073 = vmatpush.msra.mxu0 %v241
  %1074 = vmatpush.msra.mxu0 %v238
  %1075 = vmatpush.msra.mxu0 %v235
  %1076 = vmatpush.msra.mxu0 %v232
  %1077 = vmatpush.msra.mxu0 %v229
  %1078 = vmatpush.msra.mxu0 %v226
  %1079 = vmatpush.msra.mxu0 %v223
  %1080 = vmatpush.msra.mxu0 %v220
  %1081 = vmatpush.msra.mxu0 %v217
  %1082 = vmatpush.msra.mxu0 %v214
  %1083 = vmatpush.msra.mxu0 %v211
  %1084 = vmatpush.msra.mxu0 %v208
  %1085 = vmatpush.msra.mxu0 %v205
  %1086 = vmatpush.msra.mxu0 %v202
  %1087 = vmatpush.msra.mxu0 %v199
  %1088 = vmatmul.f32.gmra.mxu0 %v1071
  %v1089 = vpop.f32.mrf.mxu0
  %v1090 = vadd.f32 %v28, %v1089
  %1091 = vdwg.mxu0
  %1092 = vmatpush.msra.mxu0 %v245
  %1093 = vmatpush.msra.mxu0 %v242
  %1094 = vmatpush.msra.mxu0 %v239
  %1095 = vmatpush.msra.mxu0 %v236
  %1096 = vmatpush.msra.mxu0 %v233
  %1097 = vmatpush.msra.mxu0 %v230
  %1098 = vmatpush.msra.mxu0 %v227
  %1099 = vmatpush.msra.mxu0 %v224
  %1100 = vmatpush.msra.mxu0 %v221
  %1101 = vmatpush.msra.mxu0 %v218
  %1102 = vmatpush.msra.mxu0 %v215
  %1103 = vmatpush.msra.mxu0 %v212
  %1104 = vmatpush.msra.mxu0 %v209
  %1105 = vmatpush.msra.mxu0 %v206
  %1106 = vmatpush.msra.mxu0 %v203
  %1107 = vmatpush.msra.mxu0 %v200
  %1108 = vmatmul.f32.gmra.mxu0 %v1071
  %v1109 = vpop.f32.mrf.mxu0
  %v1110 = vadd.f32 %v29, %v1109
  %1111 = vdwg.mxu0
  %1112 = vmatpush.msra.mxu0 %v246
  %1113 = vmatpush.msra.mxu0 %v243
  %1114 = vmatpush.msra.mxu0 %v240
  %1115 = vmatpush.msra.mxu0 %v237
  %1116 = vmatpush.msra.mxu0 %v234
  %1117 = vmatpush.msra.mxu0 %v231
  %1118 = vmatpush.msra.mxu0 %v228
  %1119 = vmatpush.msra.mxu0 %v225
  %1120 = vmatpush.msra.mxu0 %v222
  %1121 = vmatpush.msra.mxu0 %v219
  %1122 = vmatpush.msra.mxu0 %v216
  %1123 = vmatpush.msra.mxu0 %v213
  %1124 = vmatpush.msra.mxu0 %v210
  %1125 = vmatpush.msra.mxu0 %v207
  %1126 = vmatpush.msra.mxu0 %v204
  %1127 = vmatpush.msra.mxu0 %v201
  %1128 = vmatmul.f32.gmra.mxu0 %v1071
  %v1129 = vpop.f32.mrf.mxu0
  %v1130 = vadd.f32 %v30, %v1129
  %1131 = vdwg.mxu0
  %v1132 = vadd.f32 %v123, %v1090
  %v1133 = vxor.u32 %v1132, 2147483648
  %v1134 = vmul.f32 %v1133, 1.442695
  %v1135 = vpow.pop %v1134
  %v1136 = vadd.f32 %v1135, 1.0
  %v1137 = vrcp.pop %v1136
  %v1138 = vmul.f32 %v1136, %v1137
  %v1139 = vsub.f32 1.0, %v1138
  %v1140 = vmul.f32 %v1137, %v1139
  %v1141 = vadd.f32 %v1137, %v1140
  %vm1142 = vweird.f32 %v1136
  %vm1143 = vweird.f32 %v1137
  %vm1144 = vmor %vm1142, %vm1143
  %v1145 = vsel %vm1144, %v1137, %v1141
  %v1146 = vand.u32 2147483647, %v1136
  %vm1147 = vcmp.eq.f32.partialorder %v1146, 8.507059e+37
  %v1148 = vand.u32 %v1136, 2147483648
  %v1149 = vor.u32 1.1754944e-38, %v1148
  %v1150 = vsel %vm1147, %v1149, %v1145
  %v1151 = vmul.f32 1.0, %v1150
  %v1152 = vmul.f32 %v1151, %v1110
  %v1153 = vadd.f32 %v176, %v1152
  %v1154 = vtanh.pop %v1153
  %v1155 = vsub.f32 1.0, %v1151
  %1157 = vrot.lane.b32.xlu0 %v1154, 64
  %v1158 = vpop.permute.xlu0 %1157
  %v1160 = vmul.f32 %v1155, %v1158
  %v1161 = vmul.f32 %v1151, %v960
  %v1162 = vadd.f32 %v1160, %v1161
  %1164 = vrot.lane.b32.xlu0 %v1162, 64
  %v1165 = vpop.permute.xlu0 %1164
  %v1166 = vsel %vm357, %v1165, 0
  %1168 = vmatpush.msra.mxu0 0.0
  %1169 = vmatpush.msra.mxu0 0.0
  %1170 = vmatpush.msra.mxu0 0.0
  %1171 = vmatpush.msra.mxu0 0.0
  %1172 = vmatpush.msra.mxu0 0.0
  %1173 = vmatpush.msra.mxu0 0.0
  %1174 = vmatpush.msra.mxu0 0.0
  %1175 = vmatpush.msra.mxu0 0.0
  %1176 = vmatpush.msra.mxu0 %v261
  %1177 = vmatpush.msra.mxu0 %v259
  %1178 = vmatpush.msra.mxu0 %v257
  %1179 = vmatpush.msra.mxu0 %v255
  %1180 = vmatpush.msra.mxu0 %v253
  %1181 = vmatpush.msra.mxu0 %v251
  %1182 = vmatpush.msra.mxu0 %v249
  %1183 = vmatpush.msra.mxu0 %v247
  %1184 = vmatmul.f32.gmra.mxu0 %v1166
  %v1185 = vpop.f32.mrf.mxu0
  %v1186 = vadd.f32 %v33, %v1185
  %1187 = vdwg.mxu0
  %1188 = vmatpush.msra.mxu0 0.0
  %1189 = vmatpush.msra.mxu0 0.0
  %1190 = vmatpush.msra.mxu0 0.0
  %1191 = vmatpush.msra.mxu0 0.0
  %1192 = vmatpush.msra.mxu0 0.0
  %1193 = vmatpush.msra.mxu0 0.0
  %1194 = vmatpush.msra.mxu0 0.0
  %1195 = vmatpush.msra.mxu0 0.0
  %1196 = vmatpush.msra.mxu0 %v262
  %1197 = vmatpush.msra.mxu0 %v260
  %1198 = vmatpush.msra.mxu0 %v258
  %1199 = vmatpush.msra.mxu0 %v256
  %1200 = vmatpush.msra.mxu0 %v254
  %1201 = vmatpush.msra.mxu0 %v252
  %1202 = vmatpush.msra.mxu0 %v250
  %1203 = vmatpush.msra.mxu0 %v248
  %1204 = vmatmul.f32.gmra.mxu0 %v1166
  %v1205 = vpop.f32.mrf.mxu0
  %v1206 = vadd.f32 %v34, %v1205
  %1207 = vdwg.mxu0
  %1209 = vrot.lane.b32.xlu0 %v1110, 64
  %v1210 = vpop.permute.xlu0 %1209
  %v1212 = vadd.f32 %v1186, %v1210
  %v1213 = vxor.u32 %v1212, 2147483648
  %v1214 = vmul.f32 %v1213, 1.442695
  %v1215 = vpow.pop %v1214
  %v1216 = vadd.f32 %v1215, 1.0
  %v1217 = vrcp.pop %v1216
  %v1218 = vmul.f32 %v1216, %v1217
  %v1219 = vsub.f32 1.0, %v1218
  %v1220 = vmul.f32 %v1217, %v1219
  %v1221 = vadd.f32 %v1217, %v1220
  %vm1222 = vweird.f32 %v1216
  %vm1223 = vweird.f32 %v1217
  %vm1224 = vmor %vm1222, %vm1223
  %v1225 = vsel %vm1224, %v1217, %v1221
  %v1226 = vand.u32 2147483647, %v1216
  %vm1227 = vcmp.eq.f32.partialorder %v1226, 8.507059e+37
  %v1228 = vand.u32 %v1216, 2147483648
  %v1229 = vor.u32 1.1754944e-38, %v1228
  %v1230 = vsel %vm1227, %v1229, %v1225
  %v1231 = vmul.f32 1.0, %v1230
  %1233 = vrot.lane.b32.xlu0 %v1130, 64
  %v1234 = vpop.permute.xlu0 %1233
  %v1236 = vadd.f32 %v1186, %v1234
  %v1237 = vxor.u32 %v1236, 2147483648
  %v1238 = vmul.f32 %v1237, 1.442695
  %v1239 = vpow.pop %v1238
  %v1240 = vadd.f32 %v1239, 1.0
  %v1241 = vrcp.pop %v1240
  %v1242 = vmul.f32 %v1240, %v1241
  %v1243 = vsub.f32 1.0, %v1242
  %v1244 = vmul.f32 %v1241, %v1243
  %v1245 = vadd.f32 %v1241, %v1244
  %vm1246 = vweird.f32 %v1240
  %vm1247 = vweird.f32 %v1241
  %vm1248 = vmor %vm1246, %vm1247
  %v1249 = vsel %vm1248, %v1241, %v1245
  %v1250 = vand.u32 2147483647, %v1240
  %vm1251 = vcmp.eq.f32.partialorder %v1250, 8.507059e+37
  %v1252 = vand.u32 %v1240, 2147483648
  %v1253 = vor.u32 1.1754944e-38, %v1252
  %v1254 = vsel %vm1251, %v1253, %v1249
  %v1255 = vmul.f32 1.0, %v1254
  %v1256 = vmul.f32 %v1231, %v1234
  %v1257 = vadd.f32 %v1206, %v1256
  %v1258 = vtanh.pop %v1257
  %v1259 = vsub.f32 1.0, %v1255
  %1261 = vrot.lane.b32.xlu0 %v1258, 64
  %v1262 = vpop.permute.xlu0 %1261
  %v1264 = vmul.f32 %v1259, %v1262
  %v1265 = vmul.f32 %v1255, %v1064
  %v1266 = vadd.f32 %v1264, %v1265
  %1268 = vrot.lane.b32.xlu0 %v1266, 64
  %v1269 = vpop.permute.xlu0 %1268
  %1271 = vst.msk [vmem:[#allocation2 + $0x20] sm:$0xff] %vm357, %v1269
  %v1273 = vsel %vm357, %v1165, %v1266
  %1274 = vmatpush.msra.mxu0 %v244
  %1275 = vmatpush.msra.mxu0 %v241
  %1276 = vmatpush.msra.mxu0 %v238
  %1277 = vmatpush.msra.mxu0 %v235
  %1278 = vmatpush.msra.mxu0 %v232
  %1279 = vmatpush.msra.mxu0 %v229
  %1280 = vmatpush.msra.mxu0 %v226
  %1281 = vmatpush.msra.mxu0 %v223
  %1282 = vmatpush.msra.mxu0 %v220
  %1283 = vmatpush.msra.mxu0 %v217
  %1284 = vmatpush.msra.mxu0 %v214
  %1285 = vmatpush.msra.mxu0 %v211
  %1286 = vmatpush.msra.mxu0 %v208
  %1287 = vmatpush.msra.mxu0 %v205
  %1288 = vmatpush.msra.mxu0 %v202
  %1289 = vmatpush.msra.mxu0 %v199
  %1290 = vmatmul.f32.gmra.mxu0 %v1273
  %v1291 = vpop.f32.mrf.mxu0
  %v1292 = vadd.f32 %v28, %v1291
  %1293 = vdwg.mxu0
  %1294 = vmatpush.msra.mxu0 %v245
  %1295 = vmatpush.msra.mxu0 %v242
  %1296 = vmatpush.msra.mxu0 %v239
  %1297 = vmatpush.msra.mxu0 %v236
  %1298 = vmatpush.msra.mxu0 %v233
  %1299 = vmatpush.msra.mxu0 %v230
  %1300 = vmatpush.msra.mxu0 %v227
  %1301 = vmatpush.msra.mxu0 %v224
  %1302 = vmatpush.msra.mxu0 %v221
  %1303 = vmatpush.msra.mxu0 %v218
  %1304 = vmatpush.msra.mxu0 %v215
  %1305 = vmatpush.msra.mxu0 %v212
  %1306 = vmatpush.msra.mxu0 %v209
  %1307 = vmatpush.msra.mxu0 %v206
  %1308 = vmatpush.msra.mxu0 %v203
  %1309 = vmatpush.msra.mxu0 %v200
  %1310 = vmatmul.f32.gmra.mxu0 %v1273
  %v1311 = vpop.f32.mrf.mxu0
  %v1312 = vadd.f32 %v29, %v1311
  %1313 = vdwg.mxu0
  %1314 = vmatpush.msra.mxu0 %v246
  %1315 = vmatpush.msra.mxu0 %v243
  %1316 = vmatpush.msra.mxu0 %v240
  %1317 = vmatpush.msra.mxu0 %v237
  %1318 = vmatpush.msra.mxu0 %v234
  %1319 = vmatpush.msra.mxu0 %v231
  %1320 = vmatpush.msra.mxu0 %v228
  %1321 = vmatpush.msra.mxu0 %v225
  %1322 = vmatpush.msra.mxu0 %v222
  %1323 = vmatpush.msra.mxu0 %v219
  %1324 = vmatpush.msra.mxu0 %v216
  %1325 = vmatpush.msra.mxu0 %v213
  %1326 = vmatpush.msra.mxu0 %v210
  %1327 = vmatpush.msra.mxu0 %v207
  %1328 = vmatpush.msra.mxu0 %v204
  %1329 = vmatpush.msra.mxu0 %v201
  %1330 = vmatmul.f32.gmra.mxu0 %v1273
  %v1331 = vpop.f32.mrf.mxu0
  %v1332 = vadd.f32 %v30, %v1331
  %1333 = vdwg.mxu0
  %v1334 = vadd.f32 %v126, %v1292
  %v1335 = vxor.u32 %v1334, 2147483648
  %v1336 = vmul.f32 %v1335, 1.442695
  %v1337 = vpow.pop %v1336
  %v1338 = vadd.f32 %v1337, 1.0
  %v1339 = vrcp.pop %v1338
  %v1340 = vmul.f32 %v1338, %v1339
  %v1341 = vsub.f32 1.0, %v1340
  %v1342 = vmul.f32 %v1339, %v1341
  %v1343 = vadd.f32 %v1339, %v1342
  %vm1344 = vweird.f32 %v1338
  %vm1345 = vweird.f32 %v1339
  %vm1346 = vmor %vm1344, %vm1345
  %v1347 = vsel %vm1346, %v1339, %v1343
  %v1348 = vand.u32 2147483647, %v1338
  %vm1349 = vcmp.eq.f32.partialorder %v1348, 8.507059e+37
  %v1350 = vand.u32 %v1338, 2147483648
  %v1351 = vor.u32 1.1754944e-38, %v1350
  %v1352 = vsel %vm1349, %v1351, %v1347
  %v1353 = vmul.f32 1.0, %v1352
  %v1354 = vmul.f32 %v1353, %v1312
  %v1355 = vadd.f32 %v179, %v1354
  %v1356 = vtanh.pop %v1355
  %v1357 = vsub.f32 1.0, %v1353
  %1359 = vrot.lane.b32.xlu0 %v1356, 64
  %v1360 = vpop.permute.xlu0 %1359
  %v1362 = vmul.f32 %v1357, %v1360
  %v1363 = vmul.f32 %v1353, %v1162
  %v1364 = vadd.f32 %v1362, %v1363
  %1366 = vrot.lane.b32.xlu0 %v1364, 64
  %v1367 = vpop.permute.xlu0 %1366
  %v1368 = vsel %vm357, %v1367, 0
  %1370 = vmatpush.msra.mxu0 0.0
  %1371 = vmatpush.msra.mxu0 0.0
  %1372 = vmatpush.msra.mxu0 0.0
  %1373 = vmatpush.msra.mxu0 0.0
  %1374 = vmatpush.msra.mxu0 0.0
  %1375 = vmatpush.msra.mxu0 0.0
  %1376 = vmatpush.msra.mxu0 0.0
  %1377 = vmatpush.msra.mxu0 0.0
  %1378 = vmatpush.msra.mxu0 %v261
  %1379 = vmatpush.msra.mxu0 %v259
  %1380 = vmatpush.msra.mxu0 %v257
  %1381 = vmatpush.msra.mxu0 %v255
  %1382 = vmatpush.msra.mxu0 %v253
  %1383 = vmatpush.msra.mxu0 %v251
  %1384 = vmatpush.msra.mxu0 %v249
  %1385 = vmatpush.msra.mxu0 %v247
  %1386 = vmatmul.f32.gmra.mxu0 %v1368
  %v1387 = vpop.f32.mrf.mxu0
  %v1388 = vadd.f32 %v33, %v1387
  %1389 = vdwg.mxu0
  %1390 = vmatpush.msra.mxu0 0.0
  %1391 = vmatpush.msra.mxu0 0.0
  %1392 = vmatpush.msra.mxu0 0.0
  %1393 = vmatpush.msra.mxu0 0.0
  %1394 = vmatpush.msra.mxu0 0.0
  %1395 = vmatpush.msra.mxu0 0.0
  %1396 = vmatpush.msra.mxu0 0.0
  %1397 = vmatpush.msra.mxu0 0.0
  %1398 = vmatpush.msra.mxu0 %v262
  %1399 = vmatpush.msra.mxu0 %v260
  %1400 = vmatpush.msra.mxu0 %v258
  %1401 = vmatpush.msra.mxu0 %v256
  %1402 = vmatpush.msra.mxu0 %v254
  %1403 = vmatpush.msra.mxu0 %v252
  %1404 = vmatpush.msra.mxu0 %v250
  %1405 = vmatpush.msra.mxu0 %v248
  %1406 = vmatmul.f32.gmra.mxu0 %v1368
  %v1407 = vpop.f32.mrf.mxu0
  %v1408 = vadd.f32 %v34, %v1407
  %1409 = vdwg.mxu0
  %1411 = vrot.lane.b32.xlu0 %v1312, 64
  %v1412 = vpop.permute.xlu0 %1411
  %v1414 = vadd.f32 %v1388, %v1412
  %v1415 = vxor.u32 %v1414, 2147483648
  %v1416 = vmul.f32 %v1415, 1.442695
  %v1417 = vpow.pop %v1416
  %v1418 = vadd.f32 %v1417, 1.0
  %v1419 = vrcp.pop %v1418
  %v1420 = vmul.f32 %v1418, %v1419
  %v1421 = vsub.f32 1.0, %v1420
  %v1422 = vmul.f32 %v1419, %v1421
  %v1423 = vadd.f32 %v1419, %v1422
  %vm1424 = vweird.f32 %v1418
  %vm1425 = vweird.f32 %v1419
  %vm1426 = vmor %vm1424, %vm1425
  %v1427 = vsel %vm1426, %v1419, %v1423
  %v1428 = vand.u32 2147483647, %v1418
  %vm1429 = vcmp.eq.f32.partialorder %v1428, 8.507059e+37
  %v1430 = vand.u32 %v1418, 2147483648
  %v1431 = vor.u32 1.1754944e-38, %v1430
  %v1432 = vsel %vm1429, %v1431, %v1427
  %v1433 = vmul.f32 1.0, %v1432
  %1435 = vrot.lane.b32.xlu0 %v1332, 64
  %v1436 = vpop.permute.xlu0 %1435
  %v1438 = vadd.f32 %v1388, %v1436
  %v1439 = vxor.u32 %v1438, 2147483648
  %v1440 = vmul.f32 %v1439, 1.442695
  %v1441 = vpow.pop %v1440
  %v1442 = vadd.f32 %v1441, 1.0
  %v1443 = vrcp.pop %v1442
  %v1444 = vmul.f32 %v1442, %v1443
  %v1445 = vsub.f32 1.0, %v1444
  %v1446 = vmul.f32 %v1443, %v1445
  %v1447 = vadd.f32 %v1443, %v1446
  %vm1448 = vweird.f32 %v1442
  %vm1449 = vweird.f32 %v1443
  %vm1450 = vmor %vm1448, %vm1449
  %v1451 = vsel %vm1450, %v1443, %v1447
  %v1452 = vand.u32 2147483647, %v1442
  %vm1453 = vcmp.eq.f32.partialorder %v1452, 8.507059e+37
  %v1454 = vand.u32 %v1442, 2147483648
  %v1455 = vor.u32 1.1754944e-38, %v1454
  %v1456 = vsel %vm1453, %v1455, %v1451
  %v1457 = vmul.f32 1.0, %v1456
  %v1458 = vmul.f32 %v1433, %v1436
  %v1459 = vadd.f32 %v1408, %v1458
  %v1460 = vtanh.pop %v1459
  %v1461 = vsub.f32 1.0, %v1457
  %1463 = vrot.lane.b32.xlu0 %v1460, 64
  %v1464 = vpop.permute.xlu0 %1463
  %v1466 = vmul.f32 %v1461, %v1464
  %v1467 = vmul.f32 %v1457, %v1266
  %v1468 = vadd.f32 %v1466, %v1467
  %1470 = vrot.lane.b32.xlu0 %v1468, 64
  %v1471 = vpop.permute.xlu0 %1470
  %1473 = vst.msk [vmem:[#allocation2 + $0x28] sm:$0xff] %vm357, %v1471
  %v1475 = vsel %vm357, %v1367, %v1468
  %1476 = vmatpush.msra.mxu0 %v244
  %1477 = vmatpush.msra.mxu0 %v241
  %1478 = vmatpush.msra.mxu0 %v238
  %1479 = vmatpush.msra.mxu0 %v235
  %1480 = vmatpush.msra.mxu0 %v232
  %1481 = vmatpush.msra.mxu0 %v229
  %1482 = vmatpush.msra.mxu0 %v226
  %1483 = vmatpush.msra.mxu0 %v223
  %1484 = vmatpush.msra.mxu0 %v220
  %1485 = vmatpush.msra.mxu0 %v217
  %1486 = vmatpush.msra.mxu0 %v214
  %1487 = vmatpush.msra.mxu0 %v211
  %1488 = vmatpush.msra.mxu0 %v208
  %1489 = vmatpush.msra.mxu0 %v205
  %1490 = vmatpush.msra.mxu0 %v202
  %1491 = vmatpush.msra.mxu0 %v199
  %1492 = vmatmul.f32.gmra.mxu0 %v1475
  %v1493 = vpop.f32.mrf.mxu0
  %v1494 = vadd.f32 %v28, %v1493
  %1495 = vdwg.mxu0
  %1496 = vmatpush.msra.mxu0 %v245
  %1497 = vmatpush.msra.mxu0 %v242
  %1498 = vmatpush.msra.mxu0 %v239
  %1499 = vmatpush.msra.mxu0 %v236
  %1500 = vmatpush.msra.mxu0 %v233
  %1501 = vmatpush.msra.mxu0 %v230
  %1502 = vmatpush.msra.mxu0 %v227
  %1503 = vmatpush.msra.mxu0 %v224
  %1504 = vmatpush.msra.mxu0 %v221
  %1505 = vmatpush.msra.mxu0 %v218
  %1506 = vmatpush.msra.mxu0 %v215
  %1507 = vmatpush.msra.mxu0 %v212
  %1508 = vmatpush.msra.mxu0 %v209
  %1509 = vmatpush.msra.mxu0 %v206
  %1510 = vmatpush.msra.mxu0 %v203
  %1511 = vmatpush.msra.mxu0 %v200
  %1512 = vmatmul.f32.gmra.mxu0 %v1475
  %v1513 = vpop.f32.mrf.mxu0
  %v1514 = vadd.f32 %v29, %v1513
  %1515 = vdwg.mxu0
  %1516 = vmatpush.msra.mxu0 %v246
  %1517 = vmatpush.msra.mxu0 %v243
  %1518 = vmatpush.msra.mxu0 %v240
  %1519 = vmatpush.msra.mxu0 %v237
  %1520 = vmatpush.msra.mxu0 %v234
  %1521 = vmatpush.msra.mxu0 %v231
  %1522 = vmatpush.msra.mxu0 %v228
  %1523 = vmatpush.msra.mxu0 %v225
  %1524 = vmatpush.msra.mxu0 %v222
  %1525 = vmatpush.msra.mxu0 %v219
  %1526 = vmatpush.msra.mxu0 %v216
  %1527 = vmatpush.msra.mxu0 %v213
  %1528 = vmatpush.msra.mxu0 %v210
  %1529 = vmatpush.msra.mxu0 %v207
  %1530 = vmatpush.msra.mxu0 %v204
  %1531 = vmatpush.msra.mxu0 %v201
  %1532 = vmatmul.f32.gmra.mxu0 %v1475
  %v1533 = vpop.f32.mrf.mxu0
  %v1534 = vadd.f32 %v30, %v1533
  %1535 = vdwg.mxu0
  %v1536 = vadd.f32 %v129, %v1494
  %v1537 = vxor.u32 %v1536, 2147483648
  %v1538 = vmul.f32 %v1537, 1.442695
  %v1539 = vpow.pop %v1538
  %v1540 = vadd.f32 %v1539, 1.0
  %v1541 = vrcp.pop %v1540
  %v1542 = vmul.f32 %v1540, %v1541
  %v1543 = vsub.f32 1.0, %v1542
  %v1544 = vmul.f32 %v1541, %v1543
  %v1545 = vadd.f32 %v1541, %v1544
  %vm1546 = vweird.f32 %v1540
  %vm1547 = vweird.f32 %v1541
  %vm1548 = vmor %vm1546, %vm1547
  %v1549 = vsel %vm1548, %v1541, %v1545
  %v1550 = vand.u32 2147483647, %v1540
  %vm1551 = vcmp.eq.f32.partialorder %v1550, 8.507059e+37
  %v1552 = vand.u32 %v1540, 2147483648
  %v1553 = vor.u32 1.1754944e-38, %v1552
  %v1554 = vsel %vm1551, %v1553, %v1549
  %v1555 = vmul.f32 1.0, %v1554
  %v1556 = vmul.f32 %v1555, %v1514
  %v1557 = vadd.f32 %v182, %v1556
  %v1558 = vtanh.pop %v1557
  %v1559 = vsub.f32 1.0, %v1555
  %1561 = vrot.lane.b32.xlu0 %v1558, 64
  %v1562 = vpop.permute.xlu0 %1561
  %v1564 = vmul.f32 %v1559, %v1562
  %v1565 = vmul.f32 %v1555, %v1364
  %v1566 = vadd.f32 %v1564, %v1565
  %1568 = vrot.lane.b32.xlu0 %v1566, 64
  %v1569 = vpop.permute.xlu0 %1568
  %v1570 = vsel %vm357, %v1569, 0
  %1572 = vmatpush.msra.mxu0 0.0
  %1573 = vmatpush.msra.mxu0 0.0
  %1574 = vmatpush.msra.mxu0 0.0
  %1575 = vmatpush.msra.mxu0 0.0
  %1576 = vmatpush.msra.mxu0 0.0
  %1577 = vmatpush.msra.mxu0 0.0
  %1578 = vmatpush.msra.mxu0 0.0
  %1579 = vmatpush.msra.mxu0 0.0
  %1580 = vmatpush.msra.mxu0 %v261
  %1581 = vmatpush.msra.mxu0 %v259
  %1582 = vmatpush.msra.mxu0 %v257
  %1583 = vmatpush.msra.mxu0 %v255
  %1584 = vmatpush.msra.mxu0 %v253
  %1585 = vmatpush.msra.mxu0 %v251
  %1586 = vmatpush.msra.mxu0 %v249
  %1587 = vmatpush.msra.mxu0 %v247
  %1588 = vmatmul.f32.gmra.mxu0 %v1570
  %v1589 = vpop.f32.mrf.mxu0
  %v1590 = vadd.f32 %v33, %v1589
  %1591 = vdwg.mxu0
  %1592 = vmatpush.msra.mxu0 0.0
  %1593 = vmatpush.msra.mxu0 0.0
  %1594 = vmatpush.msra.mxu0 0.0
  %1595 = vmatpush.msra.mxu0 0.0
  %1596 = vmatpush.msra.mxu0 0.0
  %1597 = vmatpush.msra.mxu0 0.0
  %1598 = vmatpush.msra.mxu0 0.0
  %1599 = vmatpush.msra.mxu0 0.0
  %1600 = vmatpush.msra.mxu0 %v262
  %1601 = vmatpush.msra.mxu0 %v260
  %1602 = vmatpush.msra.mxu0 %v258
  %1603 = vmatpush.msra.mxu0 %v256
  %1604 = vmatpush.msra.mxu0 %v254
  %1605 = vmatpush.msra.mxu0 %v252
  %1606 = vmatpush.msra.mxu0 %v250
  %1607 = vmatpush.msra.mxu0 %v248
  %1608 = vmatmul.f32.gmra.mxu0 %v1570
  %v1609 = vpop.f32.mrf.mxu0
  %v1610 = vadd.f32 %v34, %v1609
  %1611 = vdwg.mxu0
  %1613 = vrot.lane.b32.xlu0 %v1514, 64
  %v1614 = vpop.permute.xlu0 %1613
  %v1616 = vadd.f32 %v1590, %v1614
  %v1617 = vxor.u32 %v1616, 2147483648
  %v1618 = vmul.f32 %v1617, 1.442695
  %v1619 = vpow.pop %v1618
  %v1620 = vadd.f32 %v1619, 1.0
  %v1621 = vrcp.pop %v1620
  %v1622 = vmul.f32 %v1620, %v1621
  %v1623 = vsub.f32 1.0, %v1622
  %v1624 = vmul.f32 %v1621, %v1623
  %v1625 = vadd.f32 %v1621, %v1624
  %vm1626 = vweird.f32 %v1620
  %vm1627 = vweird.f32 %v1621
  %vm1628 = vmor %vm1626, %vm1627
  %v1629 = vsel %vm1628, %v1621, %v1625
  %v1630 = vand.u32 2147483647, %v1620
  %vm1631 = vcmp.eq.f32.partialorder %v1630, 8.507059e+37
  %v1632 = vand.u32 %v1620, 2147483648
  %v1633 = vor.u32 1.1754944e-38, %v1632
  %v1634 = vsel %vm1631, %v1633, %v1629
  %v1635 = vmul.f32 1.0, %v1634
  %1637 = vrot.lane.b32.xlu0 %v1534, 64
  %v1638 = vpop.permute.xlu0 %1637
  %v1640 = vadd.f32 %v1590, %v1638
  %v1641 = vxor.u32 %v1640, 2147483648
  %v1642 = vmul.f32 %v1641, 1.442695
  %v1643 = vpow.pop %v1642
  %v1644 = vadd.f32 %v1643, 1.0
  %v1645 = vrcp.pop %v1644
  %v1646 = vmul.f32 %v1644, %v1645
  %v1647 = vsub.f32 1.0, %v1646
  %v1648 = vmul.f32 %v1645, %v1647
  %v1649 = vadd.f32 %v1645, %v1648
  %vm1650 = vweird.f32 %v1644
  %vm1651 = vweird.f32 %v1645
  %vm1652 = vmor %vm1650, %vm1651
  %v1653 = vsel %vm1652, %v1645, %v1649
  %v1654 = vand.u32 2147483647, %v1644
  %vm1655 = vcmp.eq.f32.partialorder %v1654, 8.507059e+37
  %v1656 = vand.u32 %v1644, 2147483648
  %v1657 = vor.u32 1.1754944e-38, %v1656
  %v1658 = vsel %vm1655, %v1657, %v1653
  %v1659 = vmul.f32 1.0, %v1658
  %v1660 = vmul.f32 %v1635, %v1638
  %v1661 = vadd.f32 %v1610, %v1660
  %v1662 = vtanh.pop %v1661
  %v1663 = vsub.f32 1.0, %v1659
  %1665 = vrot.lane.b32.xlu0 %v1662, 64
  %v1666 = vpop.permute.xlu0 %1665
  %v1668 = vmul.f32 %v1663, %v1666
  %v1669 = vmul.f32 %v1659, %v1468
  %v1670 = vadd.f32 %v1668, %v1669
  %1672 = vrot.lane.b32.xlu0 %v1670, 64
  %v1673 = vpop.permute.xlu0 %1672
  %1675 = vst.msk [vmem:[#allocation2 + $0x30] sm:$0xff] %vm357, %v1673
  %v1677 = vsel %vm357, %v1569, %v1670
  %1678 = vmatpush.msra.mxu0 %v244
  %1679 = vmatpush.msra.mxu0 %v241
  %1680 = vmatpush.msra.mxu0 %v238
  %1681 = vmatpush.msra.mxu0 %v235
  %1682 = vmatpush.msra.mxu0 %v232
  %1683 = vmatpush.msra.mxu0 %v229
  %1684 = vmatpush.msra.mxu0 %v226
  %1685 = vmatpush.msra.mxu0 %v223
  %1686 = vmatpush.msra.mxu0 %v220
  %1687 = vmatpush.msra.mxu0 %v217
  %1688 = vmatpush.msra.mxu0 %v214
  %1689 = vmatpush.msra.mxu0 %v211
  %1690 = vmatpush.msra.mxu0 %v208
  %1691 = vmatpush.msra.mxu0 %v205
  %1692 = vmatpush.msra.mxu0 %v202
  %1693 = vmatpush.msra.mxu0 %v199
  %1694 = vmatmul.f32.gmra.mxu0 %v1677
  %v1695 = vpop.f32.mrf.mxu0
  %v1696 = vadd.f32 %v28, %v1695
  %1697 = vdwg.mxu0
  %1698 = vmatpush.msra.mxu0 %v245
  %1699 = vmatpush.msra.mxu0 %v242
  %1700 = vmatpush.msra.mxu0 %v239
  %1701 = vmatpush.msra.mxu0 %v236
  %1702 = vmatpush.msra.mxu0 %v233
  %1703 = vmatpush.msra.mxu0 %v230
  %1704 = vmatpush.msra.mxu0 %v227
  %1705 = vmatpush.msra.mxu0 %v224
  %1706 = vmatpush.msra.mxu0 %v221
  %1707 = vmatpush.msra.mxu0 %v218
  %1708 = vmatpush.msra.mxu0 %v215
  %1709 = vmatpush.msra.mxu0 %v212
  %1710 = vmatpush.msra.mxu0 %v209
  %1711 = vmatpush.msra.mxu0 %v206
  %1712 = vmatpush.msra.mxu0 %v203
  %1713 = vmatpush.msra.mxu0 %v200
  %1714 = vmatmul.f32.gmra.mxu0 %v1677
  %v1715 = vpop.f32.mrf.mxu0
  %v1716 = vadd.f32 %v29, %v1715
  %1717 = vdwg.mxu0
  %1718 = vmatpush.msra.mxu0 %v246
  %1719 = vmatpush.msra.mxu0 %v243
  %1720 = vmatpush.msra.mxu0 %v240
  %1721 = vmatpush.msra.mxu0 %v237
  %1722 = vmatpush.msra.mxu0 %v234
  %1723 = vmatpush.msra.mxu0 %v231
  %1724 = vmatpush.msra.mxu0 %v228
  %1725 = vmatpush.msra.mxu0 %v225
  %1726 = vmatpush.msra.mxu0 %v222
  %1727 = vmatpush.msra.mxu0 %v219
  %1728 = vmatpush.msra.mxu0 %v216
  %1729 = vmatpush.msra.mxu0 %v213
  %1730 = vmatpush.msra.mxu0 %v210
  %1731 = vmatpush.msra.mxu0 %v207
  %1732 = vmatpush.msra.mxu0 %v204
  %1733 = vmatpush.msra.mxu0 %v201
  %1734 = vmatmul.f32.gmra.mxu0 %v1677
  %v1735 = vpop.f32.mrf.mxu0
  %v1736 = vadd.f32 %v30, %v1735
  %1737 = vdwg.mxu0
  %v1738 = vadd.f32 %v132, %v1696
  %v1739 = vxor.u32 %v1738, 2147483648
  %v1740 = vmul.f32 %v1739, 1.442695
  %v1741 = vpow.pop %v1740
  %v1742 = vadd.f32 %v1741, 1.0
  %v1743 = vrcp.pop %v1742
  %v1744 = vmul.f32 %v1742, %v1743
  %v1745 = vsub.f32 1.0, %v1744
  %v1746 = vmul.f32 %v1743, %v1745
  %v1747 = vadd.f32 %v1743, %v1746
  %vm1748 = vweird.f32 %v1742
  %vm1749 = vweird.f32 %v1743
  %vm1750 = vmor %vm1748, %vm1749
  %v1751 = vsel %vm1750, %v1743, %v1747
  %v1752 = vand.u32 2147483647, %v1742
  %vm1753 = vcmp.eq.f32.partialorder %v1752, 8.507059e+37
  %v1754 = vand.u32 %v1742, 2147483648
  %v1755 = vor.u32 1.1754944e-38, %v1754
  %v1756 = vsel %vm1753, %v1755, %v1751
  %v1757 = vmul.f32 1.0, %v1756
  %v1758 = vmul.f32 %v1757, %v1716
  %v1759 = vadd.f32 %v185, %v1758
  %v1760 = vtanh.pop %v1759
  %v1761 = vsub.f32 1.0, %v1757
  %1763 = vrot.lane.b32.xlu0 %v1760, 64
  %v1764 = vpop.permute.xlu0 %1763
  %v1766 = vmul.f32 %v1761, %v1764
  %v1767 = vmul.f32 %v1757, %v1566
  %v1768 = vadd.f32 %v1766, %v1767
  %1770 = vrot.lane.b32.xlu0 %v1768, 64
  %v1771 = vpop.permute.xlu0 %1770
  %v1772 = vsel %vm357, %v1771, 0
  %1774 = vmatpush.msra.mxu0 0.0
  %1775 = vmatpush.msra.mxu0 0.0
  %1776 = vmatpush.msra.mxu0 0.0
  %1777 = vmatpush.msra.mxu0 0.0
  %1778 = vmatpush.msra.mxu0 0.0
  %1779 = vmatpush.msra.mxu0 0.0
  %1780 = vmatpush.msra.mxu0 0.0
  %1781 = vmatpush.msra.mxu0 0.0
  %1782 = vmatpush.msra.mxu0 %v261
  %1783 = vmatpush.msra.mxu0 %v259
  %1784 = vmatpush.msra.mxu0 %v257
  %1785 = vmatpush.msra.mxu0 %v255
  %1786 = vmatpush.msra.mxu0 %v253
  %1787 = vmatpush.msra.mxu0 %v251
  %1788 = vmatpush.msra.mxu0 %v249
  %1789 = vmatpush.msra.mxu0 %v247
  %1790 = vmatmul.f32.gmra.mxu0 %v1772
  %v1791 = vpop.f32.mrf.mxu0
  %v1792 = vadd.f32 %v33, %v1791
  %1793 = vdwg.mxu0
  %1794 = vmatpush.msra.mxu0 0.0
  %1795 = vmatpush.msra.mxu0 0.0
  %1796 = vmatpush.msra.mxu0 0.0
  %1797 = vmatpush.msra.mxu0 0.0
  %1798 = vmatpush.msra.mxu0 0.0
  %1799 = vmatpush.msra.mxu0 0.0
  %1800 = vmatpush.msra.mxu0 0.0
  %1801 = vmatpush.msra.mxu0 0.0
  %1802 = vmatpush.msra.mxu0 %v262
  %1803 = vmatpush.msra.mxu0 %v260
  %1804 = vmatpush.msra.mxu0 %v258
  %1805 = vmatpush.msra.mxu0 %v256
  %1806 = vmatpush.msra.mxu0 %v254
  %1807 = vmatpush.msra.mxu0 %v252
  %1808 = vmatpush.msra.mxu0 %v250
  %1809 = vmatpush.msra.mxu0 %v248
  %1810 = vmatmul.f32.gmra.mxu0 %v1772
  %v1811 = vpop.f32.mrf.mxu0
  %v1812 = vadd.f32 %v34, %v1811
  %1813 = vdwg.mxu0
  %1815 = vrot.lane.b32.xlu0 %v1716, 64
  %v1816 = vpop.permute.xlu0 %1815
  %v1818 = vadd.f32 %v1792, %v1816
  %v1819 = vxor.u32 %v1818, 2147483648
  %v1820 = vmul.f32 %v1819, 1.442695
  %v1821 = vpow.pop %v1820
  %v1822 = vadd.f32 %v1821, 1.0
  %v1823 = vrcp.pop %v1822
  %v1824 = vmul.f32 %v1822, %v1823
  %v1825 = vsub.f32 1.0, %v1824
  %v1826 = vmul.f32 %v1823, %v1825
  %v1827 = vadd.f32 %v1823, %v1826
  %vm1828 = vweird.f32 %v1822
  %vm1829 = vweird.f32 %v1823
  %vm1830 = vmor %vm1828, %vm1829
  %v1831 = vsel %vm1830, %v1823, %v1827
  %v1832 = vand.u32 2147483647, %v1822
  %vm1833 = vcmp.eq.f32.partialorder %v1832, 8.507059e+37
  %v1834 = vand.u32 %v1822, 2147483648
  %v1835 = vor.u32 1.1754944e-38, %v1834
  %v1836 = vsel %vm1833, %v1835, %v1831
  %v1837 = vmul.f32 1.0, %v1836
  %1839 = vrot.lane.b32.xlu0 %v1736, 64
  %v1840 = vpop.permute.xlu0 %1839
  %v1842 = vadd.f32 %v1792, %v1840
  %v1843 = vxor.u32 %v1842, 2147483648
  %v1844 = vmul.f32 %v1843, 1.442695
  %v1845 = vpow.pop %v1844
  %v1846 = vadd.f32 %v1845, 1.0
  %v1847 = vrcp.pop %v1846
  %v1848 = vmul.f32 %v1846, %v1847
  %v1849 = vsub.f32 1.0, %v1848
  %v1850 = vmul.f32 %v1847, %v1849
  %v1851 = vadd.f32 %v1847, %v1850
  %vm1852 = vweird.f32 %v1846
  %vm1853 = vweird.f32 %v1847
  %vm1854 = vmor %vm1852, %vm1853
  %v1855 = vsel %vm1854, %v1847, %v1851
  %v1856 = vand.u32 2147483647, %v1846
  %vm1857 = vcmp.eq.f32.partialorder %v1856, 8.507059e+37
  %v1858 = vand.u32 %v1846, 2147483648
  %v1859 = vor.u32 1.1754944e-38, %v1858
  %v1860 = vsel %vm1857, %v1859, %v1855
  %v1861 = vmul.f32 1.0, %v1860
  %v1862 = vmul.f32 %v1837, %v1840
  %v1863 = vadd.f32 %v1812, %v1862
  %v1864 = vtanh.pop %v1863
  %v1865 = vsub.f32 1.0, %v1861
  %1867 = vrot.lane.b32.xlu0 %v1864, 64
  %v1868 = vpop.permute.xlu0 %1867
  %v1870 = vmul.f32 %v1865, %v1868
  %v1871 = vmul.f32 %v1861, %v1670
  %v1872 = vadd.f32 %v1870, %v1871
  %1874 = vrot.lane.b32.xlu0 %v1872, 64
  %v1875 = vpop.permute.xlu0 %1874
  %1877 = vst.msk [vmem:[#allocation2 + $0x38] sm:$0xff] %vm357, %v1875
  %v1879 = vsel %vm357, %v1771, %v1872
  %1880 = vmatpush.msra.mxu0 %v244
  %1881 = vmatpush.msra.mxu0 %v241
  %1882 = vmatpush.msra.mxu0 %v238
  %1883 = vmatpush.msra.mxu0 %v235
  %1884 = vmatpush.msra.mxu0 %v232
  %1885 = vmatpush.msra.mxu0 %v229
  %1886 = vmatpush.msra.mxu0 %v226
  %1887 = vmatpush.msra.mxu0 %v223
  %1888 = vmatpush.msra.mxu0 %v220
  %1889 = vmatpush.msra.mxu0 %v217
  %1890 = vmatpush.msra.mxu0 %v214
  %1891 = vmatpush.msra.mxu0 %v211
  %1892 = vmatpush.msra.mxu0 %v208
  %1893 = vmatpush.msra.mxu0 %v205
  %1894 = vmatpush.msra.mxu0 %v202
  %1895 = vmatpush.msra.mxu0 %v199
  %1896 = vmatmul.f32.gmra.mxu0 %v1879
  %v1897 = vpop.f32.mrf.mxu0
  %v1898 = vadd.f32 %v28, %v1897
  %1899 = vdwg.mxu0
  %1900 = vmatpush.msra.mxu0 %v245
  %1901 = vmatpush.msra.mxu0 %v242
  %1902 = vmatpush.msra.mxu0 %v239
  %1903 = vmatpush.msra.mxu0 %v236
  %1904 = vmatpush.msra.mxu0 %v233
  %1905 = vmatpush.msra.mxu0 %v230
  %1906 = vmatpush.msra.mxu0 %v227
  %1907 = vmatpush.msra.mxu0 %v224
  %1908 = vmatpush.msra.mxu0 %v221
  %1909 = vmatpush.msra.mxu0 %v218
  %1910 = vmatpush.msra.mxu0 %v215
  %1911 = vmatpush.msra.mxu0 %v212
  %1912 = vmatpush.msra.mxu0 %v209
  %1913 = vmatpush.msra.mxu0 %v206
  %1914 = vmatpush.msra.mxu0 %v203
  %1915 = vmatpush.msra.mxu0 %v200
  %1916 = vmatmul.f32.gmra.mxu0 %v1879
  %v1917 = vpop.f32.mrf.mxu0
  %v1918 = vadd.f32 %v29, %v1917
  %1919 = vdwg.mxu0
  %1920 = vmatpush.msra.mxu0 %v246
  %1921 = vmatpush.msra.mxu0 %v243
  %1922 = vmatpush.msra.mxu0 %v240
  %1923 = vmatpush.msra.mxu0 %v237
  %1924 = vmatpush.msra.mxu0 %v234
  %1925 = vmatpush.msra.mxu0 %v231
  %1926 = vmatpush.msra.mxu0 %v228
  %1927 = vmatpush.msra.mxu0 %v225
  %1928 = vmatpush.msra.mxu0 %v222
  %1929 = vmatpush.msra.mxu0 %v219
  %1930 = vmatpush.msra.mxu0 %v216
  %1931 = vmatpush.msra.mxu0 %v213
  %1932 = vmatpush.msra.mxu0 %v210
  %1933 = vmatpush.msra.mxu0 %v207
  %1934 = vmatpush.msra.mxu0 %v204
  %1935 = vmatpush.msra.mxu0 %v201
  %1936 = vmatmul.f32.gmra.mxu0 %v1879
  %v1937 = vpop.f32.mrf.mxu0
  %v1938 = vadd.f32 %v30, %v1937
  %1939 = vdwg.mxu0
  %v1940 = vadd.f32 %v135, %v1898
  %v1941 = vxor.u32 %v1940, 2147483648
  %v1942 = vmul.f32 %v1941, 1.442695
  %v1943 = vpow.pop %v1942
  %v1944 = vadd.f32 %v1943, 1.0
  %v1945 = vrcp.pop %v1944
  %v1946 = vmul.f32 %v1944, %v1945
  %v1947 = vsub.f32 1.0, %v1946
  %v1948 = vmul.f32 %v1945, %v1947
  %v1949 = vadd.f32 %v1945, %v1948
  %vm1950 = vweird.f32 %v1944
  %vm1951 = vweird.f32 %v1945
  %vm1952 = vmor %vm1950, %vm1951
  %v1953 = vsel %vm1952, %v1945, %v1949
  %v1954 = vand.u32 2147483647, %v1944
  %vm1955 = vcmp.eq.f32.partialorder %v1954, 8.507059e+37
  %v1956 = vand.u32 %v1944, 2147483648
  %v1957 = vor.u32 1.1754944e-38, %v1956
  %v1958 = vsel %vm1955, %v1957, %v1953
  %v1959 = vmul.f32 1.0, %v1958
  %v1960 = vmul.f32 %v1959, %v1918
  %v1961 = vadd.f32 %v188, %v1960
  %v1962 = vtanh.pop %v1961
  %v1963 = vsub.f32 1.0, %v1959
  %1965 = vrot.lane.b32.xlu0 %v1962, 64
  %v1966 = vpop.permute.xlu0 %1965
  %v1968 = vmul.f32 %v1963, %v1966
  %v1969 = vmul.f32 %v1959, %v1768
  %v1970 = vadd.f32 %v1968, %v1969
  %1972 = vrot.lane.b32.xlu0 %v1970, 64
  %v1973 = vpop.permute.xlu0 %1972
  %v1974 = vsel %vm357, %v1973, 0
  %1976 = vmatpush.msra.mxu0 0.0
  %1977 = vmatpush.msra.mxu0 0.0
  %1978 = vmatpush.msra.mxu0 0.0
  %1979 = vmatpush.msra.mxu0 0.0
  %1980 = vmatpush.msra.mxu0 0.0
  %1981 = vmatpush.msra.mxu0 0.0
  %1982 = vmatpush.msra.mxu0 0.0
  %1983 = vmatpush.msra.mxu0 0.0
  %1984 = vmatpush.msra.mxu0 %v261
  %1985 = vmatpush.msra.mxu0 %v259
  %1986 = vmatpush.msra.mxu0 %v257
  %1987 = vmatpush.msra.mxu0 %v255
  %1988 = vmatpush.msra.mxu0 %v253
  %1989 = vmatpush.msra.mxu0 %v251
  %1990 = vmatpush.msra.mxu0 %v249
  %1991 = vmatpush.msra.mxu0 %v247
  %1992 = vmatmul.f32.gmra.mxu0 %v1974
  %v1993 = vpop.f32.mrf.mxu0
  %v1994 = vadd.f32 %v33, %v1993
  %1995 = vdwg.mxu0
  %1996 = vmatpush.msra.mxu0 0.0
  %1997 = vmatpush.msra.mxu0 0.0
  %1998 = vmatpush.msra.mxu0 0.0
  %1999 = vmatpush.msra.mxu0 0.0
  %2000 = vmatpush.msra.mxu0 0.0
  %2001 = vmatpush.msra.mxu0 0.0
  %2002 = vmatpush.msra.mxu0 0.0
  %2003 = vmatpush.msra.mxu0 0.0
  %2004 = vmatpush.msra.mxu0 %v262
  %2005 = vmatpush.msra.mxu0 %v260
  %2006 = vmatpush.msra.mxu0 %v258
  %2007 = vmatpush.msra.mxu0 %v256
  %2008 = vmatpush.msra.mxu0 %v254
  %2009 = vmatpush.msra.mxu0 %v252
  %2010 = vmatpush.msra.mxu0 %v250
  %2011 = vmatpush.msra.mxu0 %v248
  %2012 = vmatmul.f32.gmra.mxu0 %v1974
  %v2013 = vpop.f32.mrf.mxu0
  %v2014 = vadd.f32 %v34, %v2013
  %2015 = vdwg.mxu0
  %2017 = vrot.lane.b32.xlu0 %v1918, 64
  %v2018 = vpop.permute.xlu0 %2017
  %v2020 = vadd.f32 %v1994, %v2018
  %v2021 = vxor.u32 %v2020, 2147483648
  %v2022 = vmul.f32 %v2021, 1.442695
  %v2023 = vpow.pop %v2022
  %v2024 = vadd.f32 %v2023, 1.0
  %v2025 = vrcp.pop %v2024
  %v2026 = vmul.f32 %v2024, %v2025
  %v2027 = vsub.f32 1.0, %v2026
  %v2028 = vmul.f32 %v2025, %v2027
  %v2029 = vadd.f32 %v2025, %v2028
  %vm2030 = vweird.f32 %v2024
  %vm2031 = vweird.f32 %v2025
  %vm2032 = vmor %vm2030, %vm2031
  %v2033 = vsel %vm2032, %v2025, %v2029
  %v2034 = vand.u32 2147483647, %v2024
  %vm2035 = vcmp.eq.f32.partialorder %v2034, 8.507059e+37
  %v2036 = vand.u32 %v2024, 2147483648
  %v2037 = vor.u32 1.1754944e-38, %v2036
  %v2038 = vsel %vm2035, %v2037, %v2033
  %v2039 = vmul.f32 1.0, %v2038
  %2041 = vrot.lane.b32.xlu0 %v1938, 64
  %v2042 = vpop.permute.xlu0 %2041
  %v2044 = vadd.f32 %v1994, %v2042
  %v2045 = vxor.u32 %v2044, 2147483648
  %v2046 = vmul.f32 %v2045, 1.442695
  %v2047 = vpow.pop %v2046
  %v2048 = vadd.f32 %v2047, 1.0
  %v2049 = vrcp.pop %v2048
  %v2050 = vmul.f32 %v2048, %v2049
  %v2051 = vsub.f32 1.0, %v2050
  %v2052 = vmul.f32 %v2049, %v2051
  %v2053 = vadd.f32 %v2049, %v2052
  %vm2054 = vweird.f32 %v2048
  %vm2055 = vweird.f32 %v2049
  %vm2056 = vmor %vm2054, %vm2055
  %v2057 = vsel %vm2056, %v2049, %v2053
  %v2058 = vand.u32 2147483647, %v2048
  %vm2059 = vcmp.eq.f32.partialorder %v2058, 8.507059e+37
  %v2060 = vand.u32 %v2048, 2147483648
  %v2061 = vor.u32 1.1754944e-38, %v2060
  %v2062 = vsel %vm2059, %v2061, %v2057
  %v2063 = vmul.f32 1.0, %v2062
  %v2064 = vmul.f32 %v2039, %v2042
  %v2065 = vadd.f32 %v2014, %v2064
  %v2066 = vtanh.pop %v2065
  %v2067 = vsub.f32 1.0, %v2063
  %2069 = vrot.lane.b32.xlu0 %v2066, 64
  %v2070 = vpop.permute.xlu0 %2069
  %v2072 = vmul.f32 %v2067, %v2070
  %v2073 = vmul.f32 %v2063, %v1872
  %v2074 = vadd.f32 %v2072, %v2073
  %2076 = vrot.lane.b32.xlu0 %v2074, 64
  %v2077 = vpop.permute.xlu0 %2076
  %2079 = vst.msk [vmem:[#allocation2 + $0x40] sm:$0xff] %vm357, %v2077
  %v2081 = vsel %vm357, %v1973, %v2074
  %2082 = vmatpush.msra.mxu0 %v244
  %2083 = vmatpush.msra.mxu0 %v241
  %2084 = vmatpush.msra.mxu0 %v238
  %2085 = vmatpush.msra.mxu0 %v235
  %2086 = vmatpush.msra.mxu0 %v232
  %2087 = vmatpush.msra.mxu0 %v229
  %2088 = vmatpush.msra.mxu0 %v226
  %2089 = vmatpush.msra.mxu0 %v223
  %2090 = vmatpush.msra.mxu0 %v220
  %2091 = vmatpush.msra.mxu0 %v217
  %2092 = vmatpush.msra.mxu0 %v214
  %2093 = vmatpush.msra.mxu0 %v211
  %2094 = vmatpush.msra.mxu0 %v208
  %2095 = vmatpush.msra.mxu0 %v205
  %2096 = vmatpush.msra.mxu0 %v202
  %2097 = vmatpush.msra.mxu0 %v199
  %2098 = vmatmul.f32.gmra.mxu0 %v2081
  %v2099 = vpop.f32.mrf.mxu0
  %v2100 = vadd.f32 %v28, %v2099
  %2101 = vdwg.mxu0
  %2102 = vmatpush.msra.mxu0 %v245
  %2103 = vmatpush.msra.mxu0 %v242
  %2104 = vmatpush.msra.mxu0 %v239
  %2105 = vmatpush.msra.mxu0 %v236
  %2106 = vmatpush.msra.mxu0 %v233
  %2107 = vmatpush.msra.mxu0 %v230
  %2108 = vmatpush.msra.mxu0 %v227
  %2109 = vmatpush.msra.mxu0 %v224
  %2110 = vmatpush.msra.mxu0 %v221
  %2111 = vmatpush.msra.mxu0 %v218
  %2112 = vmatpush.msra.mxu0 %v215
  %2113 = vmatpush.msra.mxu0 %v212
  %2114 = vmatpush.msra.mxu0 %v209
  %2115 = vmatpush.msra.mxu0 %v206
  %2116 = vmatpush.msra.mxu0 %v203
  %2117 = vmatpush.msra.mxu0 %v200
  %2118 = vmatmul.f32.gmra.mxu0 %v2081
  %v2119 = vpop.f32.mrf.mxu0
  %v2120 = vadd.f32 %v29, %v2119
  %2121 = vdwg.mxu0
  %2122 = vmatpush.msra.mxu0 %v246
  %2123 = vmatpush.msra.mxu0 %v243
  %2124 = vmatpush.msra.mxu0 %v240
  %2125 = vmatpush.msra.mxu0 %v237
  %2126 = vmatpush.msra.mxu0 %v234
  %2127 = vmatpush.msra.mxu0 %v231
  %2128 = vmatpush.msra.mxu0 %v228
  %2129 = vmatpush.msra.mxu0 %v225
  %2130 = vmatpush.msra.mxu0 %v222
  %2131 = vmatpush.msra.mxu0 %v219
  %2132 = vmatpush.msra.mxu0 %v216
  %2133 = vmatpush.msra.mxu0 %v213
  %2134 = vmatpush.msra.mxu0 %v210
  %2135 = vmatpush.msra.mxu0 %v207
  %2136 = vmatpush.msra.mxu0 %v204
  %2137 = vmatpush.msra.mxu0 %v201
  %2138 = vmatmul.f32.gmra.mxu0 %v2081
  %v2139 = vpop.f32.mrf.mxu0
  %v2140 = vadd.f32 %v30, %v2139
  %2141 = vdwg.mxu0
  %v2142 = vadd.f32 %v138, %v2100
  %v2143 = vxor.u32 %v2142, 2147483648
  %v2144 = vmul.f32 %v2143, 1.442695
  %v2145 = vpow.pop %v2144
  %v2146 = vadd.f32 %v2145, 1.0
  %v2147 = vrcp.pop %v2146
  %v2148 = vmul.f32 %v2146, %v2147
  %v2149 = vsub.f32 1.0, %v2148
  %v2150 = vmul.f32 %v2147, %v2149
  %v2151 = vadd.f32 %v2147, %v2150
  %vm2152 = vweird.f32 %v2146
  %vm2153 = vweird.f32 %v2147
  %vm2154 = vmor %vm2152, %vm2153
  %v2155 = vsel %vm2154, %v2147, %v2151
  %v2156 = vand.u32 2147483647, %v2146
  %vm2157 = vcmp.eq.f32.partialorder %v2156, 8.507059e+37
  %v2158 = vand.u32 %v2146, 2147483648
  %v2159 = vor.u32 1.1754944e-38, %v2158
  %v2160 = vsel %vm2157, %v2159, %v2155
  %v2161 = vmul.f32 1.0, %v2160
  %v2162 = vmul.f32 %v2161, %v2120
  %v2163 = vadd.f32 %v191, %v2162
  %v2164 = vtanh.pop %v2163
  %v2165 = vsub.f32 1.0, %v2161
  %2167 = vrot.lane.b32.xlu0 %v2164, 64
  %v2168 = vpop.permute.xlu0 %2167
  %v2170 = vmul.f32 %v2165, %v2168
  %v2171 = vmul.f32 %v2161, %v1970
  %v2172 = vadd.f32 %v2170, %v2171
  %2174 = vrot.lane.b32.xlu0 %v2172, 64
  %v2175 = vpop.permute.xlu0 %2174
  %v2176 = vsel %vm357, %v2175, 0
  %2178 = vmatpush.msra.mxu0 0.0
  %2179 = vmatpush.msra.mxu0 0.0
  %2180 = vmatpush.msra.mxu0 0.0
  %2181 = vmatpush.msra.mxu0 0.0
  %2182 = vmatpush.msra.mxu0 0.0
  %2183 = vmatpush.msra.mxu0 0.0
  %2184 = vmatpush.msra.mxu0 0.0
  %2185 = vmatpush.msra.mxu0 0.0
  %2186 = vmatpush.msra.mxu0 %v261
  %2187 = vmatpush.msra.mxu0 %v259
  %2188 = vmatpush.msra.mxu0 %v257
  %2189 = vmatpush.msra.mxu0 %v255
  %2190 = vmatpush.msra.mxu0 %v253
  %2191 = vmatpush.msra.mxu0 %v251
  %2192 = vmatpush.msra.mxu0 %v249
  %2193 = vmatpush.msra.mxu0 %v247
  %2194 = vmatmul.f32.gmra.mxu0 %v2176
  %v2195 = vpop.f32.mrf.mxu0
  %v2196 = vadd.f32 %v33, %v2195
  %2197 = vdwg.mxu0
  %2198 = vmatpush.msra.mxu0 0.0
  %2199 = vmatpush.msra.mxu0 0.0
  %2200 = vmatpush.msra.mxu0 0.0
  %2201 = vmatpush.msra.mxu0 0.0
  %2202 = vmatpush.msra.mxu0 0.0
  %2203 = vmatpush.msra.mxu0 0.0
  %2204 = vmatpush.msra.mxu0 0.0
  %2205 = vmatpush.msra.mxu0 0.0
  %2206 = vmatpush.msra.mxu0 %v262
  %2207 = vmatpush.msra.mxu0 %v260
  %2208 = vmatpush.msra.mxu0 %v258
  %2209 = vmatpush.msra.mxu0 %v256
  %2210 = vmatpush.msra.mxu0 %v254
  %2211 = vmatpush.msra.mxu0 %v252
  %2212 = vmatpush.msra.mxu0 %v250
  %2213 = vmatpush.msra.mxu0 %v248
  %2214 = vmatmul.f32.gmra.mxu0 %v2176
  %v2215 = vpop.f32.mrf.mxu0
  %v2216 = vadd.f32 %v34, %v2215
  %2217 = vdwg.mxu0
  %2219 = vrot.lane.b32.xlu0 %v2120, 64
  %v2220 = vpop.permute.xlu0 %2219
  %v2222 = vadd.f32 %v2196, %v2220
  %v2223 = vxor.u32 %v2222, 2147483648
  %v2224 = vmul.f32 %v2223, 1.442695
  %v2225 = vpow.pop %v2224
  %v2226 = vadd.f32 %v2225, 1.0
  %v2227 = vrcp.pop %v2226
  %v2228 = vmul.f32 %v2226, %v2227
  %v2229 = vsub.f32 1.0, %v2228
  %v2230 = vmul.f32 %v2227, %v2229
  %v2231 = vadd.f32 %v2227, %v2230
  %vm2232 = vweird.f32 %v2226
  %vm2233 = vweird.f32 %v2227
  %vm2234 = vmor %vm2232, %vm2233
  %v2235 = vsel %vm2234, %v2227, %v2231
  %v2236 = vand.u32 2147483647, %v2226
  %vm2237 = vcmp.eq.f32.partialorder %v2236, 8.507059e+37
  %v2238 = vand.u32 %v2226, 2147483648
  %v2239 = vor.u32 1.1754944e-38, %v2238
  %v2240 = vsel %vm2237, %v2239, %v2235
  %v2241 = vmul.f32 1.0, %v2240
  %2243 = vrot.lane.b32.xlu0 %v2140, 64
  %v2244 = vpop.permute.xlu0 %2243
  %v2246 = vadd.f32 %v2196, %v2244
  %v2247 = vxor.u32 %v2246, 2147483648
  %v2248 = vmul.f32 %v2247, 1.442695
  %v2249 = vpow.pop %v2248
  %v2250 = vadd.f32 %v2249, 1.0
  %v2251 = vrcp.pop %v2250
  %v2252 = vmul.f32 %v2250, %v2251
  %v2253 = vsub.f32 1.0, %v2252
  %v2254 = vmul.f32 %v2251, %v2253
  %v2255 = vadd.f32 %v2251, %v2254
  %vm2256 = vweird.f32 %v2250
  %vm2257 = vweird.f32 %v2251
  %vm2258 = vmor %vm2256, %vm2257
  %v2259 = vsel %vm2258, %v2251, %v2255
  %v2260 = vand.u32 2147483647, %v2250
  %vm2261 = vcmp.eq.f32.partialorder %v2260, 8.507059e+37
  %v2262 = vand.u32 %v2250, 2147483648
  %v2263 = vor.u32 1.1754944e-38, %v2262
  %v2264 = vsel %vm2261, %v2263, %v2259
  %v2265 = vmul.f32 1.0, %v2264
  %v2266 = vmul.f32 %v2241, %v2244
  %v2267 = vadd.f32 %v2216, %v2266
  %v2268 = vtanh.pop %v2267
  %v2269 = vsub.f32 1.0, %v2265
  %2271 = vrot.lane.b32.xlu0 %v2268, 64
  %v2272 = vpop.permute.xlu0 %2271
  %v2274 = vmul.f32 %v2269, %v2272
  %v2275 = vmul.f32 %v2265, %v2074
  %v2276 = vadd.f32 %v2274, %v2275
  %2278 = vrot.lane.b32.xlu0 %v2276, 64
  %v2279 = vpop.permute.xlu0 %2278
  %2281 = vst.msk [vmem:[#allocation2 + $0x48] sm:$0xff] %vm357, %v2279
  %v2283 = vsel %vm357, %v2175, %v2276
  %2284 = vmatpush.msra.mxu0 %v244
  %2285 = vmatpush.msra.mxu0 %v241
  %2286 = vmatpush.msra.mxu0 %v238
  %2287 = vmatpush.msra.mxu0 %v235
  %2288 = vmatpush.msra.mxu0 %v232
  %2289 = vmatpush.msra.mxu0 %v229
  %2290 = vmatpush.msra.mxu0 %v226
  %2291 = vmatpush.msra.mxu0 %v223
  %2292 = vmatpush.msra.mxu0 %v220
  %2293 = vmatpush.msra.mxu0 %v217
  %2294 = vmatpush.msra.mxu0 %v214
  %2295 = vmatpush.msra.mxu0 %v211
  %2296 = vmatpush.msra.mxu0 %v208
  %2297 = vmatpush.msra.mxu0 %v205
  %2298 = vmatpush.msra.mxu0 %v202
  %2299 = vmatpush.msra.mxu0 %v199
  %2300 = vmatmul.f32.gmra.mxu0 %v2283
  %v2301 = vpop.f32.mrf.mxu0
  %v2302 = vadd.f32 %v28, %v2301
  %2303 = vdwg.mxu0
  %2304 = vmatpush.msra.mxu0 %v245
  %2305 = vmatpush.msra.mxu0 %v242
  %2306 = vmatpush.msra.mxu0 %v239
  %2307 = vmatpush.msra.mxu0 %v236
  %2308 = vmatpush.msra.mxu0 %v233
  %2309 = vmatpush.msra.mxu0 %v230
  %2310 = vmatpush.msra.mxu0 %v227
  %2311 = vmatpush.msra.mxu0 %v224
  %2312 = vmatpush.msra.mxu0 %v221
  %2313 = vmatpush.msra.mxu0 %v218
  %2314 = vmatpush.msra.mxu0 %v215
  %2315 = vmatpush.msra.mxu0 %v212
  %2316 = vmatpush.msra.mxu0 %v209
  %2317 = vmatpush.msra.mxu0 %v206
  %2318 = vmatpush.msra.mxu0 %v203
  %2319 = vmatpush.msra.mxu0 %v200
  %2320 = vmatmul.f32.gmra.mxu0 %v2283
  %v2321 = vpop.f32.mrf.mxu0
  %v2322 = vadd.f32 %v29, %v2321
  %2323 = vdwg.mxu0
  %2324 = vmatpush.msra.mxu0 %v246
  %2325 = vmatpush.msra.mxu0 %v243
  %2326 = vmatpush.msra.mxu0 %v240
  %2327 = vmatpush.msra.mxu0 %v237
  %2328 = vmatpush.msra.mxu0 %v234
  %2329 = vmatpush.msra.mxu0 %v231
  %2330 = vmatpush.msra.mxu0 %v228
  %2331 = vmatpush.msra.mxu0 %v225
  %2332 = vmatpush.msra.mxu0 %v222
  %2333 = vmatpush.msra.mxu0 %v219
  %2334 = vmatpush.msra.mxu0 %v216
  %2335 = vmatpush.msra.mxu0 %v213
  %2336 = vmatpush.msra.mxu0 %v210
  %2337 = vmatpush.msra.mxu0 %v207
  %2338 = vmatpush.msra.mxu0 %v204
  %2339 = vmatpush.msra.mxu0 %v201
  %2340 = vmatmul.f32.gmra.mxu0 %v2283
  %v2341 = vpop.f32.mrf.mxu0
  %v2342 = vadd.f32 %v30, %v2341
  %2343 = vdwg.mxu0
  %v2344 = vadd.f32 %v141, %v2302
  %v2345 = vxor.u32 %v2344, 2147483648
  %v2346 = vmul.f32 %v2345, 1.442695
  %v2347 = vpow.pop %v2346
  %v2348 = vadd.f32 %v2347, 1.0
  %v2349 = vrcp.pop %v2348
  %v2350 = vmul.f32 %v2348, %v2349
  %v2351 = vsub.f32 1.0, %v2350
  %v2352 = vmul.f32 %v2349, %v2351
  %v2353 = vadd.f32 %v2349, %v2352
  %vm2354 = vweird.f32 %v2348
  %vm2355 = vweird.f32 %v2349
  %vm2356 = vmor %vm2354, %vm2355
  %v2357 = vsel %vm2356, %v2349, %v2353
  %v2358 = vand.u32 2147483647, %v2348
  %vm2359 = vcmp.eq.f32.partialorder %v2358, 8.507059e+37
  %v2360 = vand.u32 %v2348, 2147483648
  %v2361 = vor.u32 1.1754944e-38, %v2360
  %v2362 = vsel %vm2359, %v2361, %v2357
  %v2363 = vmul.f32 1.0, %v2362
  %v2364 = vmul.f32 %v2363, %v2322
  %v2365 = vadd.f32 %v194, %v2364
  %v2366 = vtanh.pop %v2365
  %v2367 = vsub.f32 1.0, %v2363
  %2369 = vrot.lane.b32.xlu0 %v2366, 64
  %v2370 = vpop.permute.xlu0 %2369
  %v2372 = vmul.f32 %v2367, %v2370
  %v2373 = vmul.f32 %v2363, %v2172
  %v2374 = vadd.f32 %v2372, %v2373
  %2376 = vrot.lane.b32.xlu0 %v2374, 64
  %v2377 = vpop.permute.xlu0 %2376
  %v2378 = vsel %vm357, %v2377, 0
  %2380 = vmatpush.msra.mxu0 0.0
  %2381 = vmatpush.msra.mxu0 0.0
  %2382 = vmatpush.msra.mxu0 0.0
  %2383 = vmatpush.msra.mxu0 0.0
  %2384 = vmatpush.msra.mxu0 0.0
  %2385 = vmatpush.msra.mxu0 0.0
  %2386 = vmatpush.msra.mxu0 0.0
  %2387 = vmatpush.msra.mxu0 0.0
  %2388 = vmatpush.msra.mxu0 %v261
  %2389 = vmatpush.msra.mxu0 %v259
  %2390 = vmatpush.msra.mxu0 %v257
  %2391 = vmatpush.msra.mxu0 %v255
  %2392 = vmatpush.msra.mxu0 %v253
  %2393 = vmatpush.msra.mxu0 %v251
  %2394 = vmatpush.msra.mxu0 %v249
  %2395 = vmatpush.msra.mxu0 %v247
  %2396 = vmatmul.f32.gmra.mxu0 %v2378
  %v2397 = vpop.f32.mrf.mxu0
  %v2398 = vadd.f32 %v33, %v2397
  %2399 = vdwg.mxu0
  %2400 = vmatpush.msra.mxu0 0.0
  %2401 = vmatpush.msra.mxu0 0.0
  %2402 = vmatpush.msra.mxu0 0.0
  %2403 = vmatpush.msra.mxu0 0.0
  %2404 = vmatpush.msra.mxu0 0.0
  %2405 = vmatpush.msra.mxu0 0.0
  %2406 = vmatpush.msra.mxu0 0.0
  %2407 = vmatpush.msra.mxu0 0.0
  %2408 = vmatpush.msra.mxu0 %v262
  %2409 = vmatpush.msra.mxu0 %v260
  %2410 = vmatpush.msra.mxu0 %v258
  %2411 = vmatpush.msra.mxu0 %v256
  %2412 = vmatpush.msra.mxu0 %v254
  %2413 = vmatpush.msra.mxu0 %v252
  %2414 = vmatpush.msra.mxu0 %v250
  %2415 = vmatpush.msra.mxu0 %v248
  %2416 = vmatmul.f32.gmra.mxu0 %v2378
  %v2417 = vpop.f32.mrf.mxu0
  %v2418 = vadd.f32 %v34, %v2417
  %2419 = vdwg.mxu0
  %2421 = vrot.lane.b32.xlu0 %v2322, 64
  %v2422 = vpop.permute.xlu0 %2421
  %v2424 = vadd.f32 %v2398, %v2422
  %v2425 = vxor.u32 %v2424, 2147483648
  %v2426 = vmul.f32 %v2425, 1.442695
  %v2427 = vpow.pop %v2426
  %v2428 = vadd.f32 %v2427, 1.0
  %v2429 = vrcp.pop %v2428
  %v2430 = vmul.f32 %v2428, %v2429
  %v2431 = vsub.f32 1.0, %v2430
  %v2432 = vmul.f32 %v2429, %v2431
  %v2433 = vadd.f32 %v2429, %v2432
  %vm2434 = vweird.f32 %v2428
  %vm2435 = vweird.f32 %v2429
  %vm2436 = vmor %vm2434, %vm2435
  %v2437 = vsel %vm2436, %v2429, %v2433
  %v2438 = vand.u32 2147483647, %v2428
  %vm2439 = vcmp.eq.f32.partialorder %v2438, 8.507059e+37
  %v2440 = vand.u32 %v2428, 2147483648
  %v2441 = vor.u32 1.1754944e-38, %v2440
  %v2442 = vsel %vm2439, %v2441, %v2437
  %v2443 = vmul.f32 1.0, %v2442
  %2445 = vrot.lane.b32.xlu0 %v2342, 64
  %v2446 = vpop.permute.xlu0 %2445
  %v2448 = vadd.f32 %v2398, %v2446
  %v2449 = vxor.u32 %v2448, 2147483648
  %v2450 = vmul.f32 %v2449, 1.442695
  %v2451 = vpow.pop %v2450
  %v2452 = vadd.f32 %v2451, 1.0
  %v2453 = vrcp.pop %v2452
  %v2454 = vmul.f32 %v2452, %v2453
  %v2455 = vsub.f32 1.0, %v2454
  %v2456 = vmul.f32 %v2453, %v2455
  %v2457 = vadd.f32 %v2453, %v2456
  %vm2458 = vweird.f32 %v2452
  %vm2459 = vweird.f32 %v2453
  %vm2460 = vmor %vm2458, %vm2459
  %v2461 = vsel %vm2460, %v2453, %v2457
  %v2462 = vand.u32 2147483647, %v2452
  %vm2463 = vcmp.eq.f32.partialorder %v2462, 8.507059e+37
  %v2464 = vand.u32 %v2452, 2147483648
  %v2465 = vor.u32 1.1754944e-38, %v2464
  %v2466 = vsel %vm2463, %v2465, %v2461
  %v2467 = vmul.f32 1.0, %v2466
  %v2468 = vmul.f32 %v2443, %v2446
  %v2469 = vadd.f32 %v2418, %v2468
  %v2470 = vtanh.pop %v2469
  %v2471 = vsub.f32 1.0, %v2467
  %2473 = vrot.lane.b32.xlu0 %v2470, 64
  %v2474 = vpop.permute.xlu0 %2473
  %v2476 = vmul.f32 %v2471, %v2474
  %v2477 = vmul.f32 %v2467, %v2276
  %v2478 = vadd.f32 %v2476, %v2477
  %2480 = vrot.lane.b32.xlu0 %v2478, 64
  %v2481 = vpop.permute.xlu0 %2480
  %2483 = vst.msk [vmem:[#allocation2 + $0x50] sm:$0xff] %vm357, %v2481
  %v2485 = vsel %vm357, %v2377, %v2478
  %2486 = vmatpush.msra.mxu0 %v244
  %2487 = vmatpush.msra.mxu0 %v241
  %2488 = vmatpush.msra.mxu0 %v238
  %2489 = vmatpush.msra.mxu0 %v235
  %2490 = vmatpush.msra.mxu0 %v232
  %2491 = vmatpush.msra.mxu0 %v229
  %2492 = vmatpush.msra.mxu0 %v226
  %2493 = vmatpush.msra.mxu0 %v223
  %2494 = vmatpush.msra.mxu0 %v220
  %2495 = vmatpush.msra.mxu0 %v217
  %2496 = vmatpush.msra.mxu0 %v214
  %2497 = vmatpush.msra.mxu0 %v211
  %2498 = vmatpush.msra.mxu0 %v208
  %2499 = vmatpush.msra.mxu0 %v205
  %2500 = vmatpush.msra.mxu0 %v202
  %2501 = vmatpush.msra.mxu0 %v199
  %2502 = vmatmul.f32.gmra.mxu0 %v2485
  %v2503 = vpop.f32.mrf.mxu0
  %v2504 = vadd.f32 %v28, %v2503
  %2505 = vdwg.mxu0
  %2506 = vmatpush.msra.mxu0 %v245
  %2507 = vmatpush.msra.mxu0 %v242
  %2508 = vmatpush.msra.mxu0 %v239
  %2509 = vmatpush.msra.mxu0 %v236
  %2510 = vmatpush.msra.mxu0 %v233
  %2511 = vmatpush.msra.mxu0 %v230
  %2512 = vmatpush.msra.mxu0 %v227
  %2513 = vmatpush.msra.mxu0 %v224
  %2514 = vmatpush.msra.mxu0 %v221
  %2515 = vmatpush.msra.mxu0 %v218
  %2516 = vmatpush.msra.mxu0 %v215
  %2517 = vmatpush.msra.mxu0 %v212
  %2518 = vmatpush.msra.mxu0 %v209
  %2519 = vmatpush.msra.mxu0 %v206
  %2520 = vmatpush.msra.mxu0 %v203
  %2521 = vmatpush.msra.mxu0 %v200
  %2522 = vmatmul.f32.gmra.mxu0 %v2485
  %v2523 = vpop.f32.mrf.mxu0
  %v2524 = vadd.f32 %v29, %v2523
  %2525 = vdwg.mxu0
  %2526 = vmatpush.msra.mxu0 %v246
  %2527 = vmatpush.msra.mxu0 %v243
  %2528 = vmatpush.msra.mxu0 %v240
  %2529 = vmatpush.msra.mxu0 %v237
  %2530 = vmatpush.msra.mxu0 %v234
  %2531 = vmatpush.msra.mxu0 %v231
  %2532 = vmatpush.msra.mxu0 %v228
  %2533 = vmatpush.msra.mxu0 %v225
  %2534 = vmatpush.msra.mxu0 %v222
  %2535 = vmatpush.msra.mxu0 %v219
  %2536 = vmatpush.msra.mxu0 %v216
  %2537 = vmatpush.msra.mxu0 %v213
  %2538 = vmatpush.msra.mxu0 %v210
  %2539 = vmatpush.msra.mxu0 %v207
  %2540 = vmatpush.msra.mxu0 %v204
  %2541 = vmatpush.msra.mxu0 %v201
  %2542 = vmatmul.f32.gmra.mxu0 %v2485
  %v2543 = vpop.f32.mrf.mxu0
  %v2544 = vadd.f32 %v30, %v2543
  %2545 = vdwg.mxu0
  %v2546 = vadd.f32 %v144, %v2504
  %v2547 = vxor.u32 %v2546, 2147483648
  %v2548 = vmul.f32 %v2547, 1.442695
  %v2549 = vpow.pop %v2548
  %v2550 = vadd.f32 %v2549, 1.0
  %v2551 = vrcp.pop %v2550
  %v2552 = vmul.f32 %v2550, %v2551
  %v2553 = vsub.f32 1.0, %v2552
  %v2554 = vmul.f32 %v2551, %v2553
  %v2555 = vadd.f32 %v2551, %v2554
  %vm2556 = vweird.f32 %v2550
  %vm2557 = vweird.f32 %v2551
  %vm2558 = vmor %vm2556, %vm2557
  %v2559 = vsel %vm2558, %v2551, %v2555
  %v2560 = vand.u32 2147483647, %v2550
  %vm2561 = vcmp.eq.f32.partialorder %v2560, 8.507059e+37
  %v2562 = vand.u32 %v2550, 2147483648
  %v2563 = vor.u32 1.1754944e-38, %v2562
  %v2564 = vsel %vm2561, %v2563, %v2559
  %v2565 = vmul.f32 1.0, %v2564
  %v2566 = vmul.f32 %v2565, %v2524
  %v2567 = vadd.f32 %v197, %v2566
  %v2568 = vtanh.pop %v2567
  %v2569 = vsub.f32 1.0, %v2565
  %2571 = vrot.lane.b32.xlu0 %v2568, 64
  %v2572 = vpop.permute.xlu0 %2571
  %v2574 = vmul.f32 %v2569, %v2572
  %v2575 = vmul.f32 %v2565, %v2374
  %v2576 = vadd.f32 %v2574, %v2575
  %2578 = vrot.lane.b32.xlu0 %v2576, 64
  %v2579 = vpop.permute.xlu0 %2578
  %v2580 = vsel %vm357, %v2579, 0
  %2582 = vmatpush.msra.mxu0 0.0
  %2583 = vmatpush.msra.mxu0 0.0
  %2584 = vmatpush.msra.mxu0 0.0
  %2585 = vmatpush.msra.mxu0 0.0
  %2586 = vmatpush.msra.mxu0 0.0
  %2587 = vmatpush.msra.mxu0 0.0
  %2588 = vmatpush.msra.mxu0 0.0
  %2589 = vmatpush.msra.mxu0 0.0
  %2590 = vmatpush.msra.mxu0 %v261
  %2591 = vmatpush.msra.mxu0 %v259
  %2592 = vmatpush.msra.mxu0 %v257
  %2593 = vmatpush.msra.mxu0 %v255
  %2594 = vmatpush.msra.mxu0 %v253
  %2595 = vmatpush.msra.mxu0 %v251
  %2596 = vmatpush.msra.mxu0 %v249
  %2597 = vmatpush.msra.mxu0 %v247
  %2598 = vmatmul.f32.gmra.mxu0 %v2580
  %v2599 = vpop.f32.mrf.mxu0
  %v2600 = vadd.f32 %v33, %v2599
  %2601 = vdwg.mxu0
  %2602 = vmatpush.msra.mxu0 0.0
  %2603 = vmatpush.msra.mxu0 0.0
  %2604 = vmatpush.msra.mxu0 0.0
  %2605 = vmatpush.msra.mxu0 0.0
  %2606 = vmatpush.msra.mxu0 0.0
  %2607 = vmatpush.msra.mxu0 0.0
  %2608 = vmatpush.msra.mxu0 0.0
  %2609 = vmatpush.msra.mxu0 0.0
  %2610 = vmatpush.msra.mxu0 %v262
  %2611 = vmatpush.msra.mxu0 %v260
  %2612 = vmatpush.msra.mxu0 %v258
  %2613 = vmatpush.msra.mxu0 %v256
  %2614 = vmatpush.msra.mxu0 %v254
  %2615 = vmatpush.msra.mxu0 %v252
  %2616 = vmatpush.msra.mxu0 %v250
  %2617 = vmatpush.msra.mxu0 %v248
  %2618 = vmatmul.f32.gmra.mxu0 %v2580
  %v2619 = vpop.f32.mrf.mxu0
  %v2620 = vadd.f32 %v34, %v2619
  %2621 = vdwg.mxu0
  %2623 = vrot.lane.b32.xlu0 %v2524, 64
  %v2624 = vpop.permute.xlu0 %2623
  %v2626 = vadd.f32 %v2600, %v2624
  %v2627 = vxor.u32 %v2626, 2147483648
  %v2628 = vmul.f32 %v2627, 1.442695
  %v2629 = vpow.pop %v2628
  %v2630 = vadd.f32 %v2629, 1.0
  %v2631 = vrcp.pop %v2630
  %v2632 = vmul.f32 %v2630, %v2631
  %v2633 = vsub.f32 1.0, %v2632
  %v2634 = vmul.f32 %v2631, %v2633
  %v2635 = vadd.f32 %v2631, %v2634
  %vm2636 = vweird.f32 %v2630
  %vm2637 = vweird.f32 %v2631
  %vm2638 = vmor %vm2636, %vm2637
  %v2639 = vsel %vm2638, %v2631, %v2635
  %v2640 = vand.u32 2147483647, %v2630
  %vm2641 = vcmp.eq.f32.partialorder %v2640, 8.507059e+37
  %v2642 = vand.u32 %v2630, 2147483648
  %v2643 = vor.u32 1.1754944e-38, %v2642
  %v2644 = vsel %vm2641, %v2643, %v2639
  %v2645 = vmul.f32 1.0, %v2644
  %2647 = vrot.lane.b32.xlu0 %v2544, 64
  %v2648 = vpop.permute.xlu0 %2647
  %v2650 = vadd.f32 %v2600, %v2648
  %v2651 = vxor.u32 %v2650, 2147483648
  %v2652 = vmul.f32 %v2651, 1.442695
  %v2653 = vpow.pop %v2652
  %v2654 = vadd.f32 %v2653, 1.0
  %v2655 = vrcp.pop %v2654
  %v2656 = vmul.f32 %v2654, %v2655
  %v2657 = vsub.f32 1.0, %v2656
  %v2658 = vmul.f32 %v2655, %v2657
  %v2659 = vadd.f32 %v2655, %v2658
  %vm2660 = vweird.f32 %v2654
  %vm2661 = vweird.f32 %v2655
  %vm2662 = vmor %vm2660, %vm2661
  %v2663 = vsel %vm2662, %v2655, %v2659
  %v2664 = vand.u32 2147483647, %v2654
  %vm2665 = vcmp.eq.f32.partialorder %v2664, 8.507059e+37
  %v2666 = vand.u32 %v2654, 2147483648
  %v2667 = vor.u32 1.1754944e-38, %v2666
  %v2668 = vsel %vm2665, %v2667, %v2663
  %v2669 = vmul.f32 1.0, %v2668
  %v2670 = vmul.f32 %v2645, %v2648
  %v2671 = vadd.f32 %v2620, %v2670
  %v2672 = vtanh.pop %v2671
  %v2673 = vsub.f32 1.0, %v2669
  %2675 = vrot.lane.b32.xlu0 %v2672, 64
  %v2676 = vpop.permute.xlu0 %2675
  %v2678 = vmul.f32 %v2673, %v2676
  %v2679 = vmul.f32 %v2669, %v2478
  %v2680 = vadd.f32 %v2678, %v2679
  %2682 = vrot.lane.b32.xlu0 %v2680, 64
  %v2683 = vpop.permute.xlu0 %2682
  %2685 = vst.msk [vmem:[#allocation2 + $0x58] sm:$0xff] %vm357, %v2683
  %v2686 = vld [vmem:[#allocation2] sm:$0xff]
  %v2687 = vld [vmem:[#allocation2 + $0x8] sm:$0xff]
  %v2688 = vld [vmem:[#allocation2 + $0x10] sm:$0xff]
  %v2689 = vld [vmem:[#allocation2 + $0x18] sm:$0xff]
  %v2690 = vld [vmem:[#allocation2 + $0x20] sm:$0xff]
  %v2691 = vld [vmem:[#allocation2 + $0x28] sm:$0xff]
  %v2692 = vld [vmem:[#allocation2 + $0x30] sm:$0xff]
  %v2693 = vld [vmem:[#allocation2 + $0x38] sm:$0xff]
  %v2694 = vld [vmem:[#allocation2 + $0x40] sm:$0xff]
  %v2695 = vld [vmem:[#allocation2 + $0x48] sm:$0xff]
  %v2696 = vld [vmem:[#allocation2 + $0x50] sm:$0xff]
  %v2697 = vld [vmem:[#allocation2 + $0x58] sm:$0xff]
  %v2698 = vld [vmem:[%s4] sm:$0xff]
  %v2699 = vld [vmem:[%s4 + $0x8] sm:$0xff]
  %v2700 = vld [vmem:[%s4 + $0x10] sm:$0xff]
  %v2701 = vld [vmem:[%s4 + $0x18] sm:$0xff]
  %v2702 = vld [vmem:[%s4 + $0x20] sm:$0xff]
  %v2703 = vld [vmem:[%s4 + $0x28] sm:$0xff]
  %v2704 = vld [vmem:[%s4 + $0x30] sm:$0xff]
  %v2705 = vld [vmem:[%s4 + $0x38] sm:$0xff]
  %v2706 = vld [vmem:[%s4 + $0x40] sm:$0xff]
  %v2707 = vld [vmem:[%s4 + $0x48] sm:$0xff]
  %v2708 = vld [vmem:[%s4 + $0x50] sm:$0xff]
  %v2709 = vld [vmem:[%s4 + $0x58] sm:$0xff]
  %v2710 = vld [vmem:[%s4 + $0x60] sm:$0xff]
  %v2711 = vld [vmem:[%s4 + $0x68] sm:$0xff]
  %v2712 = vld [vmem:[%s4 + $0x70] sm:$0xff]
  %v2713 = vld [vmem:[%s4 + $0x78] sm:$0xff]
  %v2715 = vsel %vm357, %v2686, 0
  %v2718 = vsel %vm357, %v2687, 0
  %v2721 = vsel %vm357, %v2688, 0
  %v2724 = vsel %vm357, %v2689, 0
  %v2727 = vsel %vm357, %v2690, 0
  %v2730 = vsel %vm357, %v2691, 0
  %v2733 = vsel %vm357, %v2692, 0
  %v2736 = vsel %vm357, %v2693, 0
  %v2739 = vsel %vm357, %v2694, 0
  %v2742 = vsel %vm357, %v2695, 0
  %v2745 = vsel %vm357, %v2696, 0
  %v2748 = vsel %vm357, %v2697, 0
  %2750 = vmatpush.msra.mxu0 0.0
  %2751 = vmatpush.msra.mxu0 0.0
  %2752 = vmatpush.msra.mxu0 0.0
  %2753 = vmatpush.msra.mxu0 0.0
  %2754 = vmatpush.msra.mxu0 0.0
  %2755 = vmatpush.msra.mxu0 0.0
  %2756 = vmatpush.msra.mxu0 0.0
  %2757 = vmatpush.msra.mxu0 0.0
  %2758 = vmatpush.msra.mxu0 %v2712
  %2759 = vmatpush.msra.mxu0 %v2710
  %2760 = vmatpush.msra.mxu0 %v2708
  %2761 = vmatpush.msra.mxu0 %v2706
  %2762 = vmatpush.msra.mxu0 %v2704
  %2763 = vmatpush.msra.mxu0 %v2702
  %2764 = vmatpush.msra.mxu0 %v2700
  %2765 = vmatpush.msra.mxu0 %v2698
  %2766 = vmatmul.f32.gmra.mxu0 %v2715
  %v2767 = vpop.f32.mrf.mxu0
  %v2768 = vadd.f32 0.0, %v2767
  %2769 = vmatmul.f32.gmra.mxu0 %v2718
  %v2770 = vpop.f32.mrf.mxu0
  %v2771 = vadd.f32 0.0, %v2770
  %2772 = vmatmul.f32.gmra.mxu0 %v2721
  %v2773 = vpop.f32.mrf.mxu0
  %v2774 = vadd.f32 0.0, %v2773
  %2775 = vmatmul.f32.gmra.mxu0 %v2724
  %v2776 = vpop.f32.mrf.mxu0
  %v2777 = vadd.f32 0.0, %v2776
  %2778 = vmatmul.f32.gmra.mxu0 %v2727
  %v2779 = vpop.f32.mrf.mxu0
  %v2780 = vadd.f32 0.0, %v2779
  %2781 = vmatmul.f32.gmra.mxu0 %v2730
  %v2782 = vpop.f32.mrf.mxu0
  %v2783 = vadd.f32 0.0, %v2782
  %2784 = vmatmul.f32.gmra.mxu0 %v2733
  %v2785 = vpop.f32.mrf.mxu0
  %v2786 = vadd.f32 0.0, %v2785
  %2787 = vmatmul.f32.gmra.mxu0 %v2736
  %v2788 = vpop.f32.mrf.mxu0
  %v2789 = vadd.f32 0.0, %v2788
  %2790 = vmatmul.f32.gmra.mxu0 %v2739
  %v2791 = vpop.f32.mrf.mxu0
  %v2792 = vadd.f32 0.0, %v2791
  %2793 = vmatmul.f32.gmra.mxu0 %v2742
  %v2794 = vpop.f32.mrf.mxu0
  %v2795 = vadd.f32 0.0, %v2794
  %2796 = vmatmul.f32.gmra.mxu0 %v2745
  %v2797 = vpop.f32.mrf.mxu0
  %v2798 = vadd.f32 0.0, %v2797
  %2799 = vmatmul.f32.gmra.mxu0 %v2748
  %v2800 = vpop.f32.mrf.mxu0
  %v2801 = vadd.f32 0.0, %v2800
  %2802 = vdwg.mxu0
  %2803 = vmatpush.msra.mxu0 0.0
  %2804 = vmatpush.msra.mxu0 0.0
  %2805 = vmatpush.msra.mxu0 0.0
  %2806 = vmatpush.msra.mxu0 0.0
  %2807 = vmatpush.msra.mxu0 0.0
  %2808 = vmatpush.msra.mxu0 0.0
  %2809 = vmatpush.msra.mxu0 0.0
  %2810 = vmatpush.msra.mxu0 0.0
  %2811 = vmatpush.msra.mxu0 %v2713
  %2812 = vmatpush.msra.mxu0 %v2711
  %2813 = vmatpush.msra.mxu0 %v2709
  %2814 = vmatpush.msra.mxu0 %v2707
  %2815 = vmatpush.msra.mxu0 %v2705
  %2816 = vmatpush.msra.mxu0 %v2703
  %2817 = vmatpush.msra.mxu0 %v2701
  %2818 = vmatpush.msra.mxu0 %v2699
  %2819 = vmatmul.f32.gmra.mxu0 %v2715
  %v2820 = vpop.f32.mrf.mxu0
  %v2821 = vadd.f32 0.0, %v2820
  %2822 = vmatmul.f32.gmra.mxu0 %v2718
  %v2823 = vpop.f32.mrf.mxu0
  %v2824 = vadd.f32 0.0, %v2823
  %2825 = vmatmul.f32.gmra.mxu0 %v2721
  %v2826 = vpop.f32.mrf.mxu0
  %v2827 = vadd.f32 0.0, %v2826
  %2828 = vmatmul.f32.gmra.mxu0 %v2724
  %v2829 = vpop.f32.mrf.mxu0
  %v2830 = vadd.f32 0.0, %v2829
  %2831 = vmatmul.f32.gmra.mxu0 %v2727
  %v2832 = vpop.f32.mrf.mxu0
  %v2833 = vadd.f32 0.0, %v2832
  %2834 = vmatmul.f32.gmra.mxu0 %v2730
  %v2835 = vpop.f32.mrf.mxu0
  %v2836 = vadd.f32 0.0, %v2835
  %2837 = vmatmul.f32.gmra.mxu0 %v2733
  %v2838 = vpop.f32.mrf.mxu0
  %v2839 = vadd.f32 0.0, %v2838
  %2840 = vmatmul.f32.gmra.mxu0 %v2736
  %v2841 = vpop.f32.mrf.mxu0
  %v2842 = vadd.f32 0.0, %v2841
  %2843 = vmatmul.f32.gmra.mxu0 %v2739
  %v2844 = vpop.f32.mrf.mxu0
  %v2845 = vadd.f32 0.0, %v2844
  %2846 = vmatmul.f32.gmra.mxu0 %v2742
  %v2847 = vpop.f32.mrf.mxu0
  %v2848 = vadd.f32 0.0, %v2847
  %2849 = vmatmul.f32.gmra.mxu0 %v2745
  %v2850 = vpop.f32.mrf.mxu0
  %v2851 = vadd.f32 0.0, %v2850
  %2852 = vmatmul.f32.gmra.mxu0 %v2748
  %v2853 = vpop.f32.mrf.mxu0
  %v2854 = vadd.f32 0.0, %v2853
  %2855 = vdwg.mxu0
  %v2856 = vperm.slane %v20, 3
  %2858 = vrot.lane.b32.xlu0 %v2856, 64
  %v2859 = vpop.permute.xlu0 %2858
  %v2861 = vadd.f32 %v2768, %v2859
  %v2862 = vadd.f32 %v2771, %v2859
  %v2863 = vadd.f32 %v2774, %v2859
  %v2864 = vadd.f32 %v2777, %v2859
  %v2865 = vadd.f32 %v2780, %v2859
  %v2866 = vadd.f32 %v2783, %v2859
  %v2867 = vadd.f32 %v2786, %v2859
  %v2868 = vadd.f32 %v2789, %v2859
  %v2869 = vadd.f32 %v2792, %v2859
  %v2870 = vadd.f32 %v2795, %v2859
  %v2871 = vadd.f32 %v2798, %v2859
  %v2872 = vadd.f32 %v2801, %v2859
  %2885 = vrot.lane.b32.xlu0 %v2821, 126
  %v2886 = vpop.permute.xlu0 %2885
  %2887 = vrot.lane.b32.xlu0 %v2824, 126
  %v2888 = vpop.permute.xlu0 %2887
  %2889 = vrot.lane.b32.xlu0 %v2827, 126
  %v2890 = vpop.permute.xlu0 %2889
  %2891 = vrot.lane.b32.xlu0 %v2830, 126
  %v2892 = vpop.permute.xlu0 %2891
  %2893 = vrot.lane.b32.xlu0 %v2833, 126
  %v2894 = vpop.permute.xlu0 %2893
  %2895 = vrot.lane.b32.xlu0 %v2836, 126
  %v2896 = vpop.permute.xlu0 %2895
  %2897 = vrot.lane.b32.xlu0 %v2839, 126
  %v2898 = vpop.permute.xlu0 %2897
  %2899 = vrot.lane.b32.xlu0 %v2842, 126
  %v2900 = vpop.permute.xlu0 %2899
  %2901 = vrot.lane.b32.xlu0 %v2845, 126
  %v2902 = vpop.permute.xlu0 %2901
  %2903 = vrot.lane.b32.xlu0 %v2848, 126
  %v2904 = vpop.permute.xlu0 %2903
  %2905 = vrot.lane.b32.xlu0 %v2851, 126
  %v2906 = vpop.permute.xlu0 %2905
  %2907 = vrot.lane.b32.xlu0 %v2854, 126
  %v2908 = vpop.permute.xlu0 %2907
  %v2921 = vadd.f32 %v2886, 0.0
  %v2922 = vadd.f32 %v2888, 0.0
  %v2923 = vadd.f32 %v2890, 0.0
  %v2924 = vadd.f32 %v2892, 0.0
  %v2925 = vadd.f32 %v2894, 0.0
  %v2926 = vadd.f32 %v2821, %v2896
  %v2927 = vadd.f32 %v2824, %v2898
  %v2928 = vadd.f32 %v2827, %v2900
  %v2929 = vadd.f32 %v2830, %v2902
  %v2930 = vadd.f32 %v2833, %v2904
  %v2931 = vadd.f32 %v2836, %v2906
  %v2932 = vadd.f32 %v2839, %v2908
  %v2933 = vadd.f32 %v2821, %v2894
  %v2934 = vadd.f32 %v2824, %v2896
  %v2935 = vadd.f32 %v2827, %v2898
  %v2936 = vadd.f32 %v2830, %v2900
  %v2937 = vadd.f32 %v2833, %v2902
  %v2938 = vadd.f32 %v2836, %v2904
  %v2939 = vadd.f32 %v2839, %v2906
  %v2940 = vadd.f32 %v2842, %v2908
  %v2941 = vadd.f32 %v2821, %v2892
  %v2942 = vadd.f32 %v2824, %v2894
  %v2943 = vadd.f32 %v2827, %v2896
  %v2944 = vadd.f32 %v2830, %v2898
  %v2945 = vadd.f32 %v2833, %v2900
  %v2946 = vadd.f32 %v2836, %v2902
  %v2947 = vadd.f32 %v2839, %v2904
  %v2948 = vadd.f32 %v2842, %v2906
  %v2949 = vadd.f32 %v2845, %v2908
  %v2950 = vadd.f32 %v2821, %v2890
  %v2951 = vadd.f32 %v2824, %v2892
  %v2952 = vadd.f32 %v2827, %v2894
  %v2953 = vadd.f32 %v2830, %v2896
  %v2954 = vadd.f32 %v2833, %v2898
  %v2955 = vadd.f32 %v2836, %v2900
  %v2956 = vadd.f32 %v2839, %v2902
  %v2957 = vadd.f32 %v2842, %v2904
  %v2958 = vadd.f32 %v2845, %v2906
  %v2959 = vadd.f32 %v2848, %v2908
  %v2960 = vadd.f32 %v2821, %v2888
  %v2961 = vadd.f32 %v2824, %v2890
  %v2962 = vadd.f32 %v2827, %v2892
  %v2963 = vadd.f32 %v2830, %v2894
  %v2964 = vadd.f32 %v2833, %v2896
  %v2965 = vadd.f32 %v2836, %v2898
  %v2966 = vadd.f32 %v2839, %v2900
  %v2967 = vadd.f32 %v2842, %v2902
  %v2968 = vadd.f32 %v2845, %v2904
  %v2969 = vadd.f32 %v2848, %v2906
  %v2970 = vadd.f32 %v2851, %v2908
  %v2971 = vmax.f32 %v2925, %v2933
  %v2972 = vmax.f32 %v2926, %v2934
  %v2973 = vmax.f32 %v2927, %v2935
  %v2974 = vmax.f32 %v2928, %v2936
  %v2975 = vmax.f32 %v2929, %v2937
  %v2976 = vmax.f32 %v2930, %v2938
  %v2977 = vmax.f32 %v2931, %v2939
  %v2978 = vmax.f32 %v2932, %v2940
  %v2979 = vmax.f32 %v2921, %v2921
  %v2980 = vmax.f32 %v2922, %v2922
  %v2981 = vmax.f32 %v2923, %v2923
  %v2982 = vmax.f32 %v2924, %v2941
  %v2983 = vmax.f32 %v2971, %v2942
  %v2984 = vmax.f32 %v2972, %v2943
  %v2985 = vmax.f32 %v2973, %v2944
  %v2986 = vmax.f32 %v2974, %v2945
  %v2987 = vmax.f32 %v2975, %v2946
  %v2988 = vmax.f32 %v2976, %v2947
  %v2989 = vmax.f32 %v2977, %v2948
  %v2990 = vmax.f32 %v2978, %v2949
  %v2991 = vmax.f32 %v2979, %v2921
  %v2992 = vmax.f32 %v2980, %v2922
  %v2993 = vmax.f32 %v2981, %v2950
  %v2994 = vmax.f32 %v2982, %v2951
  %v2995 = vmax.f32 %v2983, %v2952
  %v2996 = vmax.f32 %v2984, %v2953
  %v2997 = vmax.f32 %v2985, %v2954
  %v2998 = vmax.f32 %v2986, %v2955
  %v2999 = vmax.f32 %v2987, %v2956
  %v3000 = vmax.f32 %v2988, %v2957
  %v3001 = vmax.f32 %v2989, %v2958
  %v3002 = vmax.f32 %v2990, %v2959
  %v3003 = vmax.f32 %v2991, %v2921
  %v3004 = vmax.f32 %v2992, %v2960
  %v3005 = vmax.f32 %v2993, %v2961
  %v3006 = vmax.f32 %v2994, %v2962
  %v3007 = vmax.f32 %v2995, %v2963
  %v3008 = vmax.f32 %v2996, %v2964
  %v3009 = vmax.f32 %v2997, %v2965
  %v3010 = vmax.f32 %v2998, %v2966
  %v3011 = vmax.f32 %v2999, %v2967
  %v3012 = vmax.f32 %v3000, %v2968
  %v3013 = vmax.f32 %v3001, %v2969
  %v3014 = vmax.f32 %v3002, %v2970
  %v3015 = vsub.f32 %v2921, %v3003
  %v3016 = vsub.f32 %v2922, %v3004
  %v3017 = vsub.f32 %v2923, %v3005
  %v3018 = vsub.f32 %v2924, %v3006
  %v3019 = vsub.f32 %v2925, %v3007
  %v3020 = vsub.f32 %v2926, %v3008
  %v3021 = vsub.f32 %v2927, %v3009
  %v3022 = vsub.f32 %v2928, %v3010
  %v3023 = vsub.f32 %v2929, %v3011
  %v3024 = vsub.f32 %v2930, %v3012
  %v3025 = vsub.f32 %v2931, %v3013
  %v3026 = vsub.f32 %v2932, %v3014
  %v3027 = vmul.f32 %v3015, 1.442695
  %v3028 = vpow.pop %v3027
  %v3029 = vmul.f32 %v3016, 1.442695
  %v3030 = vpow.pop %v3029
  %v3031 = vmul.f32 %v3017, 1.442695
  %v3032 = vpow.pop %v3031
  %v3033 = vmul.f32 %v3018, 1.442695
  %v3034 = vpow.pop %v3033
  %v3035 = vmul.f32 %v3019, 1.442695
  %v3036 = vpow.pop %v3035
  %v3037 = vmul.f32 %v3020, 1.442695
  %v3038 = vpow.pop %v3037
  %v3039 = vmul.f32 %v3021, 1.442695
  %v3040 = vpow.pop %v3039
  %v3041 = vmul.f32 %v3022, 1.442695
  %v3042 = vpow.pop %v3041
  %v3043 = vmul.f32 %v3023, 1.442695
  %v3044 = vpow.pop %v3043
  %v3045 = vmul.f32 %v3024, 1.442695
  %v3046 = vpow.pop %v3045
  %v3047 = vmul.f32 %v3025, 1.442695
  %v3048 = vpow.pop %v3047
  %v3049 = vmul.f32 %v3026, 1.442695
  %v3050 = vpow.pop %v3049
  %v3051 = vsub.f32 %v2933, %v3007
  %v3052 = vsub.f32 %v2934, %v3008
  %v3053 = vsub.f32 %v2935, %v3009
  %v3054 = vsub.f32 %v2936, %v3010
  %v3055 = vsub.f32 %v2937, %v3011
  %v3056 = vsub.f32 %v2938, %v3012
  %v3057 = vsub.f32 %v2939, %v3013
  %v3058 = vsub.f32 %v2940, %v3014
  %v3059 = vmul.f32 %v3051, 1.442695
  %v3060 = vpow.pop %v3059
  %v3061 = vmul.f32 %v3052, 1.442695
  %v3062 = vpow.pop %v3061
  %v3063 = vmul.f32 %v3053, 1.442695
  %v3064 = vpow.pop %v3063
  %v3065 = vmul.f32 %v3054, 1.442695
  %v3066 = vpow.pop %v3065
  %v3067 = vmul.f32 %v3055, 1.442695
  %v3068 = vpow.pop %v3067
  %v3069 = vmul.f32 %v3056, 1.442695
  %v3070 = vpow.pop %v3069
  %v3071 = vmul.f32 %v3057, 1.442695
  %v3072 = vpow.pop %v3071
  %v3073 = vmul.f32 %v3058, 1.442695
  %v3074 = vpow.pop %v3073
  %v3075 = vsub.f32 %v2941, %v3006
  %v3076 = vsub.f32 %v2942, %v3007
  %v3077 = vsub.f32 %v2943, %v3008
  %v3078 = vsub.f32 %v2944, %v3009
  %v3079 = vsub.f32 %v2945, %v3010
  %v3080 = vsub.f32 %v2946, %v3011
  %v3081 = vsub.f32 %v2947, %v3012
  %v3082 = vsub.f32 %v2948, %v3013
  %v3083 = vsub.f32 %v2949, %v3014
  %v3084 = vmul.f32 %v3075, 1.442695
  %v3085 = vpow.pop %v3084
  %v3086 = vmul.f32 %v3076, 1.442695
  %v3087 = vpow.pop %v3086
  %v3088 = vmul.f32 %v3077, 1.442695
  %v3089 = vpow.pop %v3088
  %v3090 = vmul.f32 %v3078, 1.442695
  %v3091 = vpow.pop %v3090
  %v3092 = vmul.f32 %v3079, 1.442695
  %v3093 = vpow.pop %v3092
  %v3094 = vmul.f32 %v3080, 1.442695
  %v3095 = vpow.pop %v3094
  %v3096 = vmul.f32 %v3081, 1.442695
  %v3097 = vpow.pop %v3096
  %v3098 = vmul.f32 %v3082, 1.442695
  %v3099 = vpow.pop %v3098
  %v3100 = vmul.f32 %v3083, 1.442695
  %v3101 = vpow.pop %v3100
  %v3102 = vsub.f32 %v2950, %v3005
  %v3103 = vsub.f32 %v2951, %v3006
  %v3104 = vsub.f32 %v2952, %v3007
  %v3105 = vsub.f32 %v2953, %v3008
  %v3106 = vsub.f32 %v2954, %v3009
  %v3107 = vsub.f32 %v2955, %v3010
  %v3108 = vsub.f32 %v2956, %v3011
  %v3109 = vsub.f32 %v2957, %v3012
  %v3110 = vsub.f32 %v2958, %v3013
  %v3111 = vsub.f32 %v2959, %v3014
  %v3112 = vmul.f32 %v3102, 1.442695
  %v3113 = vpow.pop %v3112
  %v3114 = vmul.f32 %v3103, 1.442695
  %v3115 = vpow.pop %v3114
  %v3116 = vmul.f32 %v3104, 1.442695
  %v3117 = vpow.pop %v3116
  %v3118 = vmul.f32 %v3105, 1.442695
  %v3119 = vpow.pop %v3118
  %v3120 = vmul.f32 %v3106, 1.442695
  %v3121 = vpow.pop %v3120
  %v3122 = vmul.f32 %v3107, 1.442695
  %v3123 = vpow.pop %v3122
  %v3124 = vmul.f32 %v3108, 1.442695
  %v3125 = vpow.pop %v3124
  %v3126 = vmul.f32 %v3109, 1.442695
  %v3127 = vpow.pop %v3126
  %v3128 = vmul.f32 %v3110, 1.442695
  %v3129 = vpow.pop %v3128
  %v3130 = vmul.f32 %v3111, 1.442695
  %v3131 = vpow.pop %v3130
  %v3132 = vsub.f32 %v2960, %v3004
  %v3133 = vsub.f32 %v2961, %v3005
  %v3134 = vsub.f32 %v2962, %v3006
  %v3135 = vsub.f32 %v2963, %v3007
  %v3136 = vsub.f32 %v2964, %v3008
  %v3137 = vsub.f32 %v2965, %v3009
  %v3138 = vsub.f32 %v2966, %v3010
  %v3139 = vsub.f32 %v2967, %v3011
  %v3140 = vsub.f32 %v2968, %v3012
  %v3141 = vsub.f32 %v2969, %v3013
  %v3142 = vsub.f32 %v2970, %v3014
  %v3143 = vmul.f32 %v3132, 1.442695
  %v3144 = vpow.pop %v3143
  %v3145 = vmul.f32 %v3133, 1.442695
  %v3146 = vpow.pop %v3145
  %v3147 = vmul.f32 %v3134, 1.442695
  %v3148 = vpow.pop %v3147
  %v3149 = vmul.f32 %v3135, 1.442695
  %v3150 = vpow.pop %v3149
  %v3151 = vmul.f32 %v3136, 1.442695
  %v3152 = vpow.pop %v3151
  %v3153 = vmul.f32 %v3137, 1.442695
  %v3154 = vpow.pop %v3153
  %v3155 = vmul.f32 %v3138, 1.442695
  %v3156 = vpow.pop %v3155
  %v3157 = vmul.f32 %v3139, 1.442695
  %v3158 = vpow.pop %v3157
  %v3159 = vmul.f32 %v3140, 1.442695
  %v3160 = vpow.pop %v3159
  %v3161 = vmul.f32 %v3141, 1.442695
  %v3162 = vpow.pop %v3161
  %v3163 = vmul.f32 %v3142, 1.442695
  %v3164 = vpow.pop %v3163
  %v3165 = vadd.f32 %v3028, %v3028
  %v3166 = vadd.f32 %v3030, %v3030
  %v3167 = vadd.f32 %v3032, %v3032
  %v3168 = vadd.f32 %v3034, %v3034
  %v3169 = vadd.f32 %v3036, %v3060
  %v3170 = vadd.f32 %v3038, %v3062
  %v3171 = vadd.f32 %v3040, %v3064
  %v3172 = vadd.f32 %v3042, %v3066
  %v3173 = vadd.f32 %v3044, %v3068
  %v3174 = vadd.f32 %v3046, %v3070
  %v3175 = vadd.f32 %v3048, %v3072
  %v3176 = vadd.f32 %v3050, %v3074
  %v3177 = vadd.f32 %v3165, %v3028
  %v3178 = vadd.f32 %v3166, %v3030
  %v3179 = vadd.f32 %v3167, %v3032
  %v3180 = vadd.f32 %v3168, %v3085
  %v3181 = vadd.f32 %v3169, %v3087
  %v3182 = vadd.f32 %v3170, %v3089
  %v3183 = vadd.f32 %v3171, %v3091
  %v3184 = vadd.f32 %v3172, %v3093
  %v3185 = vadd.f32 %v3173, %v3095
  %v3186 = vadd.f32 %v3174, %v3097
  %v3187 = vadd.f32 %v3175, %v3099
  %v3188 = vadd.f32 %v3176, %v3101
  %v3189 = vadd.f32 %v3177, %v3028
  %v3190 = vadd.f32 %v3178, %v3030
  %v3191 = vadd.f32 %v3179, %v3113
  %v3192 = vadd.f32 %v3180, %v3115
  %v3193 = vadd.f32 %v3181, %v3117
  %v3194 = vadd.f32 %v3182, %v3119
  %v3195 = vadd.f32 %v3183, %v3121
  %v3196 = vadd.f32 %v3184, %v3123
  %v3197 = vadd.f32 %v3185, %v3125
  %v3198 = vadd.f32 %v3186, %v3127
  %v3199 = vadd.f32 %v3187, %v3129
  %v3200 = vadd.f32 %v3188, %v3131
  %v3201 = vadd.f32 %v3189, %v3028
  %v3202 = vadd.f32 %v3190, %v3144
  %v3203 = vadd.f32 %v3191, %v3146
  %v3204 = vadd.f32 %v3192, %v3148
  %v3205 = vadd.f32 %v3193, %v3150
  %v3206 = vadd.f32 %v3194, %v3152
  %v3207 = vadd.f32 %v3195, %v3154
  %v3208 = vadd.f32 %v3196, %v3156
  %v3209 = vadd.f32 %v3197, %v3158
  %v3210 = vadd.f32 %v3198, %v3160
  %v3211 = vadd.f32 %v3199, %v3162
  %v3212 = vadd.f32 %v3200, %v3164
  %v3213 = vrcp.pop %v3201
  %v3214 = vrcp.pop %v3202
  %v3215 = vrcp.pop %v3203
  %v3216 = vrcp.pop %v3204
  %v3217 = vrcp.pop %v3205
  %v3218 = vrcp.pop %v3206
  %v3219 = vrcp.pop %v3207
  %v3220 = vrcp.pop %v3208
  %v3221 = vrcp.pop %v3209
  %v3222 = vrcp.pop %v3210
  %v3223 = vrcp.pop %v3211
  %v3224 = vrcp.pop %v3212
  %v3225 = vmul.f32 %v3028, %v3213
  %v3226 = vmul.f32 %v3030, %v3214
  %v3227 = vmul.f32 %v3032, %v3215
  %v3228 = vmul.f32 %v3034, %v3216
  %v3229 = vmul.f32 %v3036, %v3217
  %v3230 = vmul.f32 %v3038, %v3218
  %v3231 = vmul.f32 %v3040, %v3219
  %v3232 = vmul.f32 %v3042, %v3220
  %v3233 = vmul.f32 %v3044, %v3221
  %v3234 = vmul.f32 %v3046, %v3222
  %v3235 = vmul.f32 %v3048, %v3223
  %v3236 = vmul.f32 %v3050, %v3224
  %3238 = vset.pattern.permute.xlu0 0
  %3239 = vperm.xlu0 %3238, %v3225
  %v3240 = vpop.permute.xlu0 %3239
  %3243 = vset.pattern.permute.xlu0 0
  %3244 = vperm.xlu0 %3243, %v3226
  %v3245 = vpop.permute.xlu0 %3244
  %3248 = vset.pattern.permute.xlu0 0
  %3249 = vperm.xlu0 %3248, %v3227
  %v3250 = vpop.permute.xlu0 %3249
  %3253 = vset.pattern.permute.xlu0 0
  %3254 = vperm.xlu0 %3253, %v3228
  %v3255 = vpop.permute.xlu0 %3254
  %3258 = vset.pattern.permute.xlu0 0
  %3259 = vperm.xlu0 %3258, %v3229
  %v3260 = vpop.permute.xlu0 %3259
  %3263 = vset.pattern.permute.xlu0 0
  %3264 = vperm.xlu0 %3263, %v3230
  %v3265 = vpop.permute.xlu0 %3264
  %3268 = vset.pattern.permute.xlu0 0
  %3269 = vperm.xlu0 %3268, %v3231
  %v3270 = vpop.permute.xlu0 %3269
  %3273 = vset.pattern.permute.xlu0 0
  %3274 = vperm.xlu0 %3273, %v3232
  %v3275 = vpop.permute.xlu0 %3274
  %3278 = vset.pattern.permute.xlu0 0
  %3279 = vperm.xlu0 %3278, %v3233
  %v3280 = vpop.permute.xlu0 %3279
  %3283 = vset.pattern.permute.xlu0 0
  %3284 = vperm.xlu0 %3283, %v3234
  %v3285 = vpop.permute.xlu0 %3284
  %3288 = vset.pattern.permute.xlu0 0
  %3289 = vperm.xlu0 %3288, %v3235
  %v3290 = vpop.permute.xlu0 %3289
  %3293 = vset.pattern.permute.xlu0 0
  %3294 = vperm.xlu0 %3293, %v3236
  %v3295 = vpop.permute.xlu0 %3294
  %3297 = vset.pattern.permute.xlu0 1
  %3298 = vperm.xlu0 %3297, %v3225
  %v3299 = vpop.permute.xlu0 %3298
  %3301 = vset.pattern.permute.xlu0 1
  %3302 = vperm.xlu0 %3301, %v3226
  %v3303 = vpop.permute.xlu0 %3302
  %3305 = vset.pattern.permute.xlu0 1
  %3306 = vperm.xlu0 %3305, %v3227
  %v3307 = vpop.permute.xlu0 %3306
  %3309 = vset.pattern.permute.xlu0 1
  %3310 = vperm.xlu0 %3309, %v3228
  %v3311 = vpop.permute.xlu0 %3310
  %3313 = vset.pattern.permute.xlu0 1
  %3314 = vperm.xlu0 %3313, %v3229
  %v3315 = vpop.permute.xlu0 %3314
  %3317 = vset.pattern.permute.xlu0 1
  %3318 = vperm.xlu0 %3317, %v3230
  %v3319 = vpop.permute.xlu0 %3318
  %3321 = vset.pattern.permute.xlu0 1
  %3322 = vperm.xlu0 %3321, %v3231
  %v3323 = vpop.permute.xlu0 %3322
  %3325 = vset.pattern.permute.xlu0 1
  %3326 = vperm.xlu0 %3325, %v3232
  %v3327 = vpop.permute.xlu0 %3326
  %3329 = vset.pattern.permute.xlu0 1
  %3330 = vperm.xlu0 %3329, %v3233
  %v3331 = vpop.permute.xlu0 %3330
  %3333 = vset.pattern.permute.xlu0 1
  %3334 = vperm.xlu0 %3333, %v3234
  %v3335 = vpop.permute.xlu0 %3334
  %3337 = vset.pattern.permute.xlu0 1
  %3338 = vperm.xlu0 %3337, %v3235
  %v3339 = vpop.permute.xlu0 %3338
  %3341 = vset.pattern.permute.xlu0 1
  %3342 = vperm.xlu0 %3341, %v3236
  %v3343 = vpop.permute.xlu0 %3342
  %vm3345 = vcmask 261120
  %v3346 = vsel %vm3345, %v3240, %v3299
  %v3347 = vsel %vm3345, %v3245, %v3303
  %v3348 = vsel %vm3345, %v3250, %v3307
  %v3349 = vsel %vm3345, %v3255, %v3311
  %v3350 = vsel %vm3345, %v3260, %v3315
  %v3351 = vsel %vm3345, %v3265, %v3319
  %v3352 = vsel %vm3345, %v3270, %v3323
  %v3353 = vsel %vm3345, %v3275, %v3327
  %v3354 = vsel %vm3345, %v3280, %v3331
  %v3355 = vsel %vm3345, %v3285, %v3335
  %v3356 = vsel %vm3345, %v3290, %v3339
  %v3357 = vsel %vm3345, %v3295, %v3343
  %v3358 = vmul.f32 %v3346, 0.0
  %v3359 = vmul.f32 %v3347, 0.0
  %v3360 = vmul.f32 %v3348, 0.0
  %v3361 = vmul.f32 %v3349, 0.0
  %v3362 = vmul.f32 %v3350, 0.0
  %v3363 = vmul.f32 %v3351, %v2768
  %v3364 = vmul.f32 %v3352, %v2771
  %v3365 = vmul.f32 %v3353, %v2774
  %v3366 = vmul.f32 %v3354, %v2777
  %v3367 = vmul.f32 %v3355, %v2780
  %v3368 = vmul.f32 %v3356, %v2783
  %v3369 = vmul.f32 %v3357, %v2786
  %v3370 = vadd.f32 %v3358, 0.0
  %v3371 = vadd.f32 %v3359, 0.0
  %v3372 = vadd.f32 %v3360, 0.0
  %v3373 = vadd.f32 %v3361, 0.0
  %v3374 = vadd.f32 %v3362, 0.0
  %v3375 = vadd.f32 %v3363, 0.0
  %v3376 = vadd.f32 %v3364, 0.0
  %v3377 = vadd.f32 %v3365, 0.0
  %v3378 = vadd.f32 %v3366, 0.0
  %v3379 = vadd.f32 %v3367, 0.0
  %v3380 = vadd.f32 %v3368, 0.0
  %v3381 = vadd.f32 %v3369, 0.0
  %v3382 = vmul.f32 %v3060, %v3217
  %v3383 = vmul.f32 %v3062, %v3218
  %v3384 = vmul.f32 %v3064, %v3219
  %v3385 = vmul.f32 %v3066, %v3220
  %v3386 = vmul.f32 %v3068, %v3221
  %v3387 = vmul.f32 %v3070, %v3222
  %v3388 = vmul.f32 %v3072, %v3223
  %v3389 = vmul.f32 %v3074, %v3224
  %3391 = vset.pattern.permute.xlu0 0
  %3392 = vperm.xlu0 %3391, %v3382
  %v3393 = vpop.permute.xlu0 %3392
  %3396 = vset.pattern.permute.xlu0 0
  %3397 = vperm.xlu0 %3396, %v3383
  %v3398 = vpop.permute.xlu0 %3397
  %3401 = vset.pattern.permute.xlu0 0
  %3402 = vperm.xlu0 %3401, %v3384
  %v3403 = vpop.permute.xlu0 %3402
  %3406 = vset.pattern.permute.xlu0 0
  %3407 = vperm.xlu0 %3406, %v3385
  %v3408 = vpop.permute.xlu0 %3407
  %3411 = vset.pattern.permute.xlu0 0
  %3412 = vperm.xlu0 %3411, %v3386
  %v3413 = vpop.permute.xlu0 %3412
  %3416 = vset.pattern.permute.xlu0 0
  %3417 = vperm.xlu0 %3416, %v3387
  %v3418 = vpop.permute.xlu0 %3417
  %3421 = vset.pattern.permute.xlu0 0
  %3422 = vperm.xlu0 %3421, %v3388
  %v3423 = vpop.permute.xlu0 %3422
  %3426 = vset.pattern.permute.xlu0 0
  %3427 = vperm.xlu0 %3426, %v3389
  %v3428 = vpop.permute.xlu0 %3427
  %3430 = vset.pattern.permute.xlu0 1
  %3431 = vperm.xlu0 %3430, %v3382
  %v3432 = vpop.permute.xlu0 %3431
  %3434 = vset.pattern.permute.xlu0 1
  %3435 = vperm.xlu0 %3434, %v3383
  %v3436 = vpop.permute.xlu0 %3435
  %3438 = vset.pattern.permute.xlu0 1
  %3439 = vperm.xlu0 %3438, %v3384
  %v3440 = vpop.permute.xlu0 %3439
  %3442 = vset.pattern.permute.xlu0 1
  %3443 = vperm.xlu0 %3442, %v3385
  %v3444 = vpop.permute.xlu0 %3443
  %3446 = vset.pattern.permute.xlu0 1
  %3447 = vperm.xlu0 %3446, %v3386
  %v3448 = vpop.permute.xlu0 %3447
  %3450 = vset.pattern.permute.xlu0 1
  %3451 = vperm.xlu0 %3450, %v3387
  %v3452 = vpop.permute.xlu0 %3451
  %3454 = vset.pattern.permute.xlu0 1
  %3455 = vperm.xlu0 %3454, %v3388
  %v3456 = vpop.permute.xlu0 %3455
  %3458 = vset.pattern.permute.xlu0 1
  %3459 = vperm.xlu0 %3458, %v3389
  %v3460 = vpop.permute.xlu0 %3459
  %v3462 = vsel %vm3345, %v3393, %v3432
  %v3463 = vsel %vm3345, %v3398, %v3436
  %v3464 = vsel %vm3345, %v3403, %v3440
  %v3465 = vsel %vm3345, %v3408, %v3444
  %v3466 = vsel %vm3345, %v3413, %v3448
  %v3467 = vsel %vm3345, %v3418, %v3452
  %v3468 = vsel %vm3345, %v3423, %v3456
  %v3469 = vsel %vm3345, %v3428, %v3460
  %v3470 = vmul.f32 %v3462, %v2768
  %v3471 = vmul.f32 %v3463, %v2771
  %v3472 = vmul.f32 %v3464, %v2774
  %v3473 = vmul.f32 %v3465, %v2777
  %v3474 = vmul.f32 %v3466, %v2780
  %v3475 = vmul.f32 %v3467, %v2783
  %v3476 = vmul.f32 %v3468, %v2786
  %v3477 = vmul.f32 %v3469, %v2789
  %v3478 = vadd.f32 %v3370, %v3358
  %v3479 = vadd.f32 %v3371, %v3359
  %v3480 = vadd.f32 %v3372, %v3360
  %v3481 = vadd.f32 %v3373, %v3361
  %v3482 = vadd.f32 %v3374, %v3470
  %v3483 = vadd.f32 %v3375, %v3471
  %v3484 = vadd.f32 %v3376, %v3472
  %v3485 = vadd.f32 %v3377, %v3473
  %v3486 = vadd.f32 %v3378, %v3474
  %v3487 = vadd.f32 %v3379, %v3475
  %v3488 = vadd.f32 %v3380, %v3476
  %v3489 = vadd.f32 %v3381, %v3477
  %v3490 = vmul.f32 %v3085, %v3216
  %v3491 = vmul.f32 %v3087, %v3217
  %v3492 = vmul.f32 %v3089, %v3218
  %v3493 = vmul.f32 %v3091, %v3219
  %v3494 = vmul.f32 %v3093, %v3220
  %v3495 = vmul.f32 %v3095, %v3221
  %v3496 = vmul.f32 %v3097, %v3222
  %v3497 = vmul.f32 %v3099, %v3223
  %v3498 = vmul.f32 %v3101, %v3224
  %3500 = vset.pattern.permute.xlu0 0
  %3501 = vperm.xlu0 %3500, %v3490
  %v3502 = vpop.permute.xlu0 %3501
  %3505 = vset.pattern.permute.xlu0 0
  %3506 = vperm.xlu0 %3505, %v3491
  %v3507 = vpop.permute.xlu0 %3506
  %3510 = vset.pattern.permute.xlu0 0
  %3511 = vperm.xlu0 %3510, %v3492
  %v3512 = vpop.permute.xlu0 %3511
  %3515 = vset.pattern.permute.xlu0 0
  %3516 = vperm.xlu0 %3515, %v3493
  %v3517 = vpop.permute.xlu0 %3516
  %3520 = vset.pattern.permute.xlu0 0
  %3521 = vperm.xlu0 %3520, %v3494
  %v3522 = vpop.permute.xlu0 %3521
  %3525 = vset.pattern.permute.xlu0 0
  %3526 = vperm.xlu0 %3525, %v3495
  %v3527 = vpop.permute.xlu0 %3526
  %3530 = vset.pattern.permute.xlu0 0
  %3531 = vperm.xlu0 %3530, %v3496
  %v3532 = vpop.permute.xlu0 %3531
  %3535 = vset.pattern.permute.xlu0 0
  %3536 = vperm.xlu0 %3535, %v3497
  %v3537 = vpop.permute.xlu0 %3536
  %3540 = vset.pattern.permute.xlu0 0
  %3541 = vperm.xlu0 %3540, %v3498
  %v3542 = vpop.permute.xlu0 %3541
  %3544 = vset.pattern.permute.xlu0 1
  %3545 = vperm.xlu0 %3544, %v3490
  %v3546 = vpop.permute.xlu0 %3545
  %3548 = vset.pattern.permute.xlu0 1
  %3549 = vperm.xlu0 %3548, %v3491
  %v3550 = vpop.permute.xlu0 %3549
  %3552 = vset.pattern.permute.xlu0 1
  %3553 = vperm.xlu0 %3552, %v3492
  %v3554 = vpop.permute.xlu0 %3553
  %3556 = vset.pattern.permute.xlu0 1
  %3557 = vperm.xlu0 %3556, %v3493
  %v3558 = vpop.permute.xlu0 %3557
  %3560 = vset.pattern.permute.xlu0 1
  %3561 = vperm.xlu0 %3560, %v3494
  %v3562 = vpop.permute.xlu0 %3561
  %3564 = vset.pattern.permute.xlu0 1
  %3565 = vperm.xlu0 %3564, %v3495
  %v3566 = vpop.permute.xlu0 %3565
  %3568 = vset.pattern.permute.xlu0 1
  %3569 = vperm.xlu0 %3568, %v3496
  %v3570 = vpop.permute.xlu0 %3569
  %3572 = vset.pattern.permute.xlu0 1
  %3573 = vperm.xlu0 %3572, %v3497
  %v3574 = vpop.permute.xlu0 %3573
  %3576 = vset.pattern.permute.xlu0 1
  %3577 = vperm.xlu0 %3576, %v3498
  %v3578 = vpop.permute.xlu0 %3577
  %v3580 = vsel %vm3345, %v3502, %v3546
  %v3581 = vsel %vm3345, %v3507, %v3550
  %v3582 = vsel %vm3345, %v3512, %v3554
  %v3583 = vsel %vm3345, %v3517, %v3558
  %v3584 = vsel %vm3345, %v3522, %v3562
  %v3585 = vsel %vm3345, %v3527, %v3566
  %v3586 = vsel %vm3345, %v3532, %v3570
  %v3587 = vsel %vm3345, %v3537, %v3574
  %v3588 = vsel %vm3345, %v3542, %v3578
  %v3589 = vmul.f32 %v3580, %v2768
  %v3590 = vmul.f32 %v3581, %v2771
  %v3591 = vmul.f32 %v3582, %v2774
  %v3592 = vmul.f32 %v3583, %v2777
  %v3593 = vmul.f32 %v3584, %v2780
  %v3594 = vmul.f32 %v3585, %v2783
  %v3595 = vmul.f32 %v3586, %v2786
  %v3596 = vmul.f32 %v3587, %v2789
  %v3597 = vmul.f32 %v3588, %v2792
  %v3598 = vadd.f32 %v3478, %v3358
  %v3599 = vadd.f32 %v3479, %v3359
  %v3600 = vadd.f32 %v3480, %v3360
  %v3601 = vadd.f32 %v3481, %v3589
  %v3602 = vadd.f32 %v3482, %v3590
  %v3603 = vadd.f32 %v3483, %v3591
  %v3604 = vadd.f32 %v3484, %v3592
  %v3605 = vadd.f32 %v3485, %v3593
  %v3606 = vadd.f32 %v3486, %v3594
  %v3607 = vadd.f32 %v3487, %v3595
  %v3608 = vadd.f32 %v3488, %v3596
  %v3609 = vadd.f32 %v3489, %v3597
  %v3610 = vmul.f32 %v3113, %v3215
  %v3611 = vmul.f32 %v3115, %v3216
  %v3612 = vmul.f32 %v3117, %v3217
  %v3613 = vmul.f32 %v3119, %v3218
  %v3614 = vmul.f32 %v3121, %v3219
  %v3615 = vmul.f32 %v3123, %v3220
  %v3616 = vmul.f32 %v3125, %v3221
  %v3617 = vmul.f32 %v3127, %v3222
  %v3618 = vmul.f32 %v3129, %v3223
  %v3619 = vmul.f32 %v3131, %v3224
  %3621 = vset.pattern.permute.xlu0 0
  %3622 = vperm.xlu0 %3621, %v3610
  %v3623 = vpop.permute.xlu0 %3622
  %3626 = vset.pattern.permute.xlu0 0
  %3627 = vperm.xlu0 %3626, %v3611
  %v3628 = vpop.permute.xlu0 %3627
  %3631 = vset.pattern.permute.xlu0 0
  %3632 = vperm.xlu0 %3631, %v3612
  %v3633 = vpop.permute.xlu0 %3632
  %3636 = vset.pattern.permute.xlu0 0
  %3637 = vperm.xlu0 %3636, %v3613
  %v3638 = vpop.permute.xlu0 %3637
  %3641 = vset.pattern.permute.xlu0 0
  %3642 = vperm.xlu0 %3641, %v3614
  %v3643 = vpop.permute.xlu0 %3642
  %3646 = vset.pattern.permute.xlu0 0
  %3647 = vperm.xlu0 %3646, %v3615
  %v3648 = vpop.permute.xlu0 %3647
  %3651 = vset.pattern.permute.xlu0 0
  %3652 = vperm.xlu0 %3651, %v3616
  %v3653 = vpop.permute.xlu0 %3652
  %3656 = vset.pattern.permute.xlu0 0
  %3657 = vperm.xlu0 %3656, %v3617
  %v3658 = vpop.permute.xlu0 %3657
  %3661 = vset.pattern.permute.xlu0 0
  %3662 = vperm.xlu0 %3661, %v3618
  %v3663 = vpop.permute.xlu0 %3662
  %3666 = vset.pattern.permute.xlu0 0
  %3667 = vperm.xlu0 %3666, %v3619
  %v3668 = vpop.permute.xlu0 %3667
  %3670 = vset.pattern.permute.xlu0 1
  %3671 = vperm.xlu0 %3670, %v3610
  %v3672 = vpop.permute.xlu0 %3671
  %3674 = vset.pattern.permute.xlu0 1
  %3675 = vperm.xlu0 %3674, %v3611
  %v3676 = vpop.permute.xlu0 %3675
  %3678 = vset.pattern.permute.xlu0 1
  %3679 = vperm.xlu0 %3678, %v3612
  %v3680 = vpop.permute.xlu0 %3679
  %3682 = vset.pattern.permute.xlu0 1
  %3683 = vperm.xlu0 %3682, %v3613
  %v3684 = vpop.permute.xlu0 %3683
  %3686 = vset.pattern.permute.xlu0 1
  %3687 = vperm.xlu0 %3686, %v3614
  %v3688 = vpop.permute.xlu0 %3687
  %3690 = vset.pattern.permute.xlu0 1
  %3691 = vperm.xlu0 %3690, %v3615
  %v3692 = vpop.permute.xlu0 %3691
  %3694 = vset.pattern.permute.xlu0 1
  %3695 = vperm.xlu0 %3694, %v3616
  %v3696 = vpop.permute.xlu0 %3695
  %3698 = vset.pattern.permute.xlu0 1
  %3699 = vperm.xlu0 %3698, %v3617
  %v3700 = vpop.permute.xlu0 %3699
  %3702 = vset.pattern.permute.xlu0 1
  %3703 = vperm.xlu0 %3702, %v3618
  %v3704 = vpop.permute.xlu0 %3703
  %3706 = vset.pattern.permute.xlu0 1
  %3707 = vperm.xlu0 %3706, %v3619
  %v3708 = vpop.permute.xlu0 %3707
  %v3710 = vsel %vm3345, %v3623, %v3672
  %v3711 = vsel %vm3345, %v3628, %v3676
  %v3712 = vsel %vm3345, %v3633, %v3680
  %v3713 = vsel %vm3345, %v3638, %v3684
  %v3714 = vsel %vm3345, %v3643, %v3688
  %v3715 = vsel %vm3345, %v3648, %v3692
  %v3716 = vsel %vm3345, %v3653, %v3696
  %v3717 = vsel %vm3345, %v3658, %v3700
  %v3718 = vsel %vm3345, %v3663, %v3704
  %v3719 = vsel %vm3345, %v3668, %v3708
  %v3720 = vmul.f32 %v3710, %v2768
  %v3721 = vmul.f32 %v3711, %v2771
  %v3722 = vmul.f32 %v3712, %v2774
  %v3723 = vmul.f32 %v3713, %v2777
  %v3724 = vmul.f32 %v3714, %v2780
  %v3725 = vmul.f32 %v3715, %v2783
  %v3726 = vmul.f32 %v3716, %v2786
  %v3727 = vmul.f32 %v3717, %v2789
  %v3728 = vmul.f32 %v3718, %v2792
  %v3729 = vmul.f32 %v3719, %v2795
  %v3730 = vadd.f32 %v3598, %v3358
  %v3731 = vadd.f32 %v3599, %v3359
  %v3732 = vadd.f32 %v3600, %v3720
  %v3733 = vadd.f32 %v3601, %v3721
  %v3734 = vadd.f32 %v3602, %v3722
  %v3735 = vadd.f32 %v3603, %v3723
  %v3736 = vadd.f32 %v3604, %v3724
  %v3737 = vadd.f32 %v3605, %v3725
  %v3738 = vadd.f32 %v3606, %v3726
  %v3739 = vadd.f32 %v3607, %v3727
  %v3740 = vadd.f32 %v3608, %v3728
  %v3741 = vadd.f32 %v3609, %v3729
  %v3742 = vmul.f32 %v3144, %v3214
  %v3743 = vmul.f32 %v3146, %v3215
  %v3744 = vmul.f32 %v3148, %v3216
  %v3745 = vmul.f32 %v3150, %v3217
  %v3746 = vmul.f32 %v3152, %v3218
  %v3747 = vmul.f32 %v3154, %v3219
  %v3748 = vmul.f32 %v3156, %v3220
  %v3749 = vmul.f32 %v3158, %v3221
  %v3750 = vmul.f32 %v3160, %v3222
  %v3751 = vmul.f32 %v3162, %v3223
  %v3752 = vmul.f32 %v3164, %v3224
  %3754 = vset.pattern.permute.xlu0 0
  %3755 = vperm.xlu0 %3754, %v3742
  %v3756 = vpop.permute.xlu0 %3755
  %3759 = vset.pattern.permute.xlu0 0
  %3760 = vperm.xlu0 %3759, %v3743
  %v3761 = vpop.permute.xlu0 %3760
  %3764 = vset.pattern.permute.xlu0 0
  %3765 = vperm.xlu0 %3764, %v3744
  %v3766 = vpop.permute.xlu0 %3765
  %3769 = vset.pattern.permute.xlu0 0
  %3770 = vperm.xlu0 %3769, %v3745
  %v3771 = vpop.permute.xlu0 %3770
  %3774 = vset.pattern.permute.xlu0 0
  %3775 = vperm.xlu0 %3774, %v3746
  %v3776 = vpop.permute.xlu0 %3775
  %3779 = vset.pattern.permute.xlu0 0
  %3780 = vperm.xlu0 %3779, %v3747
  %v3781 = vpop.permute.xlu0 %3780
  %3784 = vset.pattern.permute.xlu0 0
  %3785 = vperm.xlu0 %3784, %v3748
  %v3786 = vpop.permute.xlu0 %3785
  %3789 = vset.pattern.permute.xlu0 0
  %3790 = vperm.xlu0 %3789, %v3749
  %v3791 = vpop.permute.xlu0 %3790
  %3794 = vset.pattern.permute.xlu0 0
  %3795 = vperm.xlu0 %3794, %v3750
  %v3796 = vpop.permute.xlu0 %3795
  %3799 = vset.pattern.permute.xlu0 0
  %3800 = vperm.xlu0 %3799, %v3751
  %v3801 = vpop.permute.xlu0 %3800
  %3804 = vset.pattern.permute.xlu0 0
  %3805 = vperm.xlu0 %3804, %v3752
  %v3806 = vpop.permute.xlu0 %3805
  %3808 = vset.pattern.permute.xlu0 1
  %3809 = vperm.xlu0 %3808, %v3742
  %v3810 = vpop.permute.xlu0 %3809
  %3812 = vset.pattern.permute.xlu0 1
  %3813 = vperm.xlu0 %3812, %v3743
  %v3814 = vpop.permute.xlu0 %3813
  %3816 = vset.pattern.permute.xlu0 1
  %3817 = vperm.xlu0 %3816, %v3744
  %v3818 = vpop.permute.xlu0 %3817
  %3820 = vset.pattern.permute.xlu0 1
  %3821 = vperm.xlu0 %3820, %v3745
  %v3822 = vpop.permute.xlu0 %3821
  %3824 = vset.pattern.permute.xlu0 1
  %3825 = vperm.xlu0 %3824, %v3746
  %v3826 = vpop.permute.xlu0 %3825
  %3828 = vset.pattern.permute.xlu0 1
  %3829 = vperm.xlu0 %3828, %v3747
  %v3830 = vpop.permute.xlu0 %3829
  %3832 = vset.pattern.permute.xlu0 1
  %3833 = vperm.xlu0 %3832, %v3748
  %v3834 = vpop.permute.xlu0 %3833
  %3836 = vset.pattern.permute.xlu0 1
  %3837 = vperm.xlu0 %3836, %v3749
  %v3838 = vpop.permute.xlu0 %3837
  %3840 = vset.pattern.permute.xlu0 1
  %3841 = vperm.xlu0 %3840, %v3750
  %v3842 = vpop.permute.xlu0 %3841
  %3844 = vset.pattern.permute.xlu0 1
  %3845 = vperm.xlu0 %3844, %v3751
  %v3846 = vpop.permute.xlu0 %3845
  %3848 = vset.pattern.permute.xlu0 1
  %3849 = vperm.xlu0 %3848, %v3752
  %v3850 = vpop.permute.xlu0 %3849
  %v3852 = vsel %vm3345, %v3756, %v3810
  %v3853 = vsel %vm3345, %v3761, %v3814
  %v3854 = vsel %vm3345, %v3766, %v3818
  %v3855 = vsel %vm3345, %v3771, %v3822
  %v3856 = vsel %vm3345, %v3776, %v3826
  %v3857 = vsel %vm3345, %v3781, %v3830
  %v3858 = vsel %vm3345, %v3786, %v3834
  %v3859 = vsel %vm3345, %v3791, %v3838
  %v3860 = vsel %vm3345, %v3796, %v3842
  %v3861 = vsel %vm3345, %v3801, %v3846
  %v3862 = vsel %vm3345, %v3806, %v3850
  %v3863 = vmul.f32 %v3852, %v2768
  %v3864 = vmul.f32 %v3853, %v2771
  %v3865 = vmul.f32 %v3854, %v2774
  %v3866 = vmul.f32 %v3855, %v2777
  %v3867 = vmul.f32 %v3856, %v2780
  %v3868 = vmul.f32 %v3857, %v2783
  %v3869 = vmul.f32 %v3858, %v2786
  %v3870 = vmul.f32 %v3859, %v2789
  %v3871 = vmul.f32 %v3860, %v2792
  %v3872 = vmul.f32 %v3861, %v2795
  %v3873 = vmul.f32 %v3862, %v2798
  %v3874 = vadd.f32 %v3730, %v3358
  %v3875 = vadd.f32 %v3731, %v3863
  %v3876 = vadd.f32 %v3732, %v3864
  %v3877 = vadd.f32 %v3733, %v3865
  %v3878 = vadd.f32 %v3734, %v3866
  %v3879 = vadd.f32 %v3735, %v3867
  %v3880 = vadd.f32 %v3736, %v3868
  %v3881 = vadd.f32 %v3737, %v3869
  %v3882 = vadd.f32 %v3738, %v3870
  %v3883 = vadd.f32 %v3739, %v3871
  %v3884 = vadd.f32 %v3740, %v3872
  %v3885 = vadd.f32 %v3741, %v3873
  %3898 = vrot.lane.b32.xlu0 %v2861, 64
  %v3899 = vpop.permute.xlu0 %3898
  %3900 = vrot.lane.b32.xlu0 %v2862, 64
  %v3901 = vpop.permute.xlu0 %3900
  %3902 = vrot.lane.b32.xlu0 %v2863, 64
  %v3903 = vpop.permute.xlu0 %3902
  %3904 = vrot.lane.b32.xlu0 %v2864, 64
  %v3905 = vpop.permute.xlu0 %3904
  %3906 = vrot.lane.b32.xlu0 %v2865, 64
  %v3907 = vpop.permute.xlu0 %3906
  %3908 = vrot.lane.b32.xlu0 %v2866, 64
  %v3909 = vpop.permute.xlu0 %3908
  %3910 = vrot.lane.b32.xlu0 %v2867, 64
  %v3911 = vpop.permute.xlu0 %3910
  %3912 = vrot.lane.b32.xlu0 %v2868, 64
  %v3913 = vpop.permute.xlu0 %3912
  %3914 = vrot.lane.b32.xlu0 %v2869, 64
  %v3915 = vpop.permute.xlu0 %3914
  %3916 = vrot.lane.b32.xlu0 %v2870, 64
  %v3917 = vpop.permute.xlu0 %3916
  %3918 = vrot.lane.b32.xlu0 %v2871, 64
  %v3919 = vpop.permute.xlu0 %3918
  %3920 = vrot.lane.b32.xlu0 %v2872, 64
  %v3921 = vpop.permute.xlu0 %3920
  %v3934 = vadd.f32 %v3874, %v3899
  %v3935 = vadd.f32 %v3875, %v3901
  %v3936 = vadd.f32 %v3876, %v3903
  %v3937 = vadd.f32 %v3877, %v3905
  %v3938 = vadd.f32 %v3878, %v3907
  %v3939 = vadd.f32 %v3879, %v3909
  %v3940 = vadd.f32 %v3880, %v3911
  %v3941 = vadd.f32 %v3881, %v3913
  %v3942 = vadd.f32 %v3882, %v3915
  %v3943 = vadd.f32 %v3883, %v3917
  %v3944 = vadd.f32 %v3884, %v3919
  %v3945 = vadd.f32 %v3885, %v3921
  %v3946 = vlaneseq
  %v3947 = vshrl.u32 %v3946, 7
  %v3948 = vadd.s32 %v3947, 8
  %v3949 = vadd.s32 %v3947, 16
  %v3950 = vadd.s32 %v3947, 24
  %v3951 = vadd.s32 %v3947, 32
  %v3952 = vadd.s32 %v3947, 40
  %v3953 = vadd.s32 %v3947, 48
  %v3954 = vadd.s32 %v3947, 56
  %v3955 = vadd.s32 %v3947, 64
  %v3956 = vadd.s32 %v3947, 72
  %v3957 = vadd.s32 %v3947, 80
  %v3958 = vadd.s32 %v3947, 88
  %vm3959 = vcmp.lt.s32.totalorder %v3947, 40
  %vm3960 = vcmp.lt.s32.totalorder %v3948, 40
  %vm3961 = vcmp.lt.s32.totalorder %v3949, 40
  %vm3962 = vcmp.lt.s32.totalorder %v3950, 40
  %vm3963 = vcmp.lt.s32.totalorder %v3951, 40
  %vm3964 = vcmp.lt.s32.totalorder %v3952, 40
  %vm3965 = vcmp.lt.s32.totalorder %v3953, 40
  %vm3966 = vcmp.lt.s32.totalorder %v3954, 40
  %vm3967 = vcmp.lt.s32.totalorder %v3955, 40
  %vm3968 = vcmp.lt.s32.totalorder %v3956, 40
  %vm3969 = vcmp.lt.s32.totalorder %v3957, 40
  %vm3970 = vcmp.lt.s32.totalorder %v3958, 40
  %v3971 = vsel %vm3959, %v2686, %v3934
  %v3972 = vsel %vm3960, %v2687, %v3935
  %v3973 = vsel %vm3961, %v2688, %v3936
  %v3974 = vsel %vm3962, %v2689, %v3937
  %v3975 = vsel %vm3963, %v2690, %v3938
  %v3976 = vsel %vm3964, %v2691, %v3939
  %v3977 = vsel %vm3965, %v2692, %v3940
  %v3978 = vsel %vm3966, %v2693, %v3941
  %v3979 = vsel %vm3967, %v2694, %v3942
  %v3980 = vsel %vm3968, %v2695, %v3943
  %v3981 = vsel %vm3969, %v2696, %v3944
  %v3982 = vsel %vm3970, %v2697, %v3945
  %3991 = vrot.lane.b32.xlu0 %v2699, 123
  %v3992 = vpop.permute.xlu0 %3991
  %3993 = vrot.lane.b32.xlu0 %v2701, 123
  %v3994 = vpop.permute.xlu0 %3993
  %3995 = vrot.lane.b32.xlu0 %v2703, 123
  %v3996 = vpop.permute.xlu0 %3995
  %3997 = vrot.lane.b32.xlu0 %v2705, 123
  %v3998 = vpop.permute.xlu0 %3997
  %3999 = vrot.lane.b32.xlu0 %v2707, 123
  %v4000 = vpop.permute.xlu0 %3999
  %4001 = vrot.lane.b32.xlu0 %v2709, 123
  %v4002 = vpop.permute.xlu0 %4001
  %4003 = vrot.lane.b32.xlu0 %v2711, 123
  %v4004 = vpop.permute.xlu0 %4003
  %4005 = vrot.lane.b32.xlu0 %v2713, 123
  %v4006 = vpop.permute.xlu0 %4005
  %v4016 = vsel %vm357, %v3973, 0
  %v4019 = vsel %vm357, %v3974, 0
  %v4022 = vsel %vm357, %v3975, 0
  %v4025 = vsel %vm357, %v3976, 0
  %v4028 = vsel %vm357, %v3977, 0
  %v4031 = vsel %vm357, %v3978, 0
  %v4034 = vsel %vm357, %v3979, 0
  %v4037 = vsel %vm357, %v3980, 0
  %v4040 = vsel %vm357, %v3981, 0
  %v4043 = vsel %vm357, %v3982, 0
  %4045 = vmatpush.msra.mxu0 0.0
  %4046 = vmatpush.msra.mxu0 0.0
  %4047 = vmatpush.msra.mxu0 0.0
  %4048 = vmatpush.msra.mxu0 0.0
  %4049 = vmatpush.msra.mxu0 0.0
  %4050 = vmatpush.msra.mxu0 0.0
  %4051 = vmatpush.msra.mxu0 0.0
  %4052 = vmatpush.msra.mxu0 0.0
  %4053 = vmatpush.msra.mxu0 %v4006
  %4054 = vmatpush.msra.mxu0 %v4004
  %4055 = vmatpush.msra.mxu0 %v4002
  %4056 = vmatpush.msra.mxu0 %v4000
  %4057 = vmatpush.msra.mxu0 %v3998
  %4058 = vmatpush.msra.mxu0 %v3996
  %4059 = vmatpush.msra.mxu0 %v3994
  %4060 = vmatpush.msra.mxu0 %v3992
  %4061 = vmatmul.f32.gmra.mxu0 %v4016
  %v4062 = vpop.f32.mrf.mxu0
  %v4063 = vadd.f32 0.0, %v4062
  %4064 = vmatmul.f32.gmra.mxu0 %v4019
  %v4065 = vpop.f32.mrf.mxu0
  %v4066 = vadd.f32 0.0, %v4065
  %4067 = vmatmul.f32.gmra.mxu0 %v4022
  %v4068 = vpop.f32.mrf.mxu0
  %v4069 = vadd.f32 0.0, %v4068
  %4070 = vmatmul.f32.gmra.mxu0 %v4025
  %v4071 = vpop.f32.mrf.mxu0
  %v4072 = vadd.f32 0.0, %v4071
  %4073 = vmatmul.f32.gmra.mxu0 %v4028
  %v4074 = vpop.f32.mrf.mxu0
  %v4075 = vadd.f32 0.0, %v4074
  %4076 = vmatmul.f32.gmra.mxu0 %v4031
  %v4077 = vpop.f32.mrf.mxu0
  %v4078 = vadd.f32 0.0, %v4077
  %4079 = vmatmul.f32.gmra.mxu0 %v4034
  %v4080 = vpop.f32.mrf.mxu0
  %v4081 = vadd.f32 0.0, %v4080
  %4082 = vmatmul.f32.gmra.mxu0 %v4037
  %v4083 = vpop.f32.mrf.mxu0
  %v4084 = vadd.f32 0.0, %v4083
  %4085 = vmatmul.f32.gmra.mxu0 %v4040
  %v4086 = vpop.f32.mrf.mxu0
  %v4087 = vadd.f32 0.0, %v4086
  %4088 = vmatmul.f32.gmra.mxu0 %v4043
  %v4089 = vpop.f32.mrf.mxu0
  %v4090 = vadd.f32 0.0, %v4089
  %4091 = vmatmul.f32.gmra.mxu0 %v4043
  %v4092 = vpop.f32.mrf.mxu0
  %v4093 = vadd.f32 0.0, %v4092
  %4094 = vmatmul.f32.gmra.mxu0 %v4043
  %v4095 = vpop.f32.mrf.mxu0
  %v4096 = vadd.f32 0.0, %v4095
  %4097 = vdwg.mxu0
  %4098 = vrot.lane.b32.xlu0 %v2699, 124
  %v4099 = vpop.permute.xlu0 %4098
  %4100 = vrot.lane.b32.xlu0 %v2701, 124
  %v4101 = vpop.permute.xlu0 %4100
  %4102 = vrot.lane.b32.xlu0 %v2703, 124
  %v4103 = vpop.permute.xlu0 %4102
  %4104 = vrot.lane.b32.xlu0 %v2705, 124
  %v4105 = vpop.permute.xlu0 %4104
  %4106 = vrot.lane.b32.xlu0 %v2707, 124
  %v4107 = vpop.permute.xlu0 %4106
  %4108 = vrot.lane.b32.xlu0 %v2709, 124
  %v4109 = vpop.permute.xlu0 %4108
  %4110 = vrot.lane.b32.xlu0 %v2711, 124
  %v4111 = vpop.permute.xlu0 %4110
  %4112 = vrot.lane.b32.xlu0 %v2713, 124
  %v4113 = vpop.permute.xlu0 %4112
  %v4123 = vsel %vm357, %v3971, 0
  %v4126 = vsel %vm357, %v3972, 0
  %4128 = vmatpush.msra.mxu0 0.0
  %4129 = vmatpush.msra.mxu0 0.0
  %4130 = vmatpush.msra.mxu0 0.0
  %4131 = vmatpush.msra.mxu0 0.0
  %4132 = vmatpush.msra.mxu0 0.0
  %4133 = vmatpush.msra.mxu0 0.0
  %4134 = vmatpush.msra.mxu0 0.0
  %4135 = vmatpush.msra.mxu0 0.0
  %4136 = vmatpush.msra.mxu0 %v4113
  %4137 = vmatpush.msra.mxu0 %v4111
  %4138 = vmatpush.msra.mxu0 %v4109
  %4139 = vmatpush.msra.mxu0 %v4107
  %4140 = vmatpush.msra.mxu0 %v4105
  %4141 = vmatpush.msra.mxu0 %v4103
  %4142 = vmatpush.msra.mxu0 %v4101
  %4143 = vmatpush.msra.mxu0 %v4099
  %4144 = vmatmul.f32.gmra.mxu0 %v4123
  %v4145 = vpop.f32.mrf.mxu0
  %v4146 = vadd.f32 %v4063, %v4145
  %4147 = vmatmul.f32.gmra.mxu0 %v4126
  %v4148 = vpop.f32.mrf.mxu0
  %v4149 = vadd.f32 %v4066, %v4148
  %4150 = vmatmul.f32.gmra.mxu0 %v4016
  %v4151 = vpop.f32.mrf.mxu0
  %v4152 = vadd.f32 %v4069, %v4151
  %4153 = vmatmul.f32.gmra.mxu0 %v4019
  %v4154 = vpop.f32.mrf.mxu0
  %v4155 = vadd.f32 %v4072, %v4154
  %4156 = vmatmul.f32.gmra.mxu0 %v4022
  %v4157 = vpop.f32.mrf.mxu0
  %v4158 = vadd.f32 %v4075, %v4157
  %4159 = vmatmul.f32.gmra.mxu0 %v4025
  %v4160 = vpop.f32.mrf.mxu0
  %v4161 = vadd.f32 %v4078, %v4160
  %4162 = vmatmul.f32.gmra.mxu0 %v4028
  %v4163 = vpop.f32.mrf.mxu0
  %v4164 = vadd.f32 %v4081, %v4163
  %4165 = vmatmul.f32.gmra.mxu0 %v4031
  %v4166 = vpop.f32.mrf.mxu0
  %v4167 = vadd.f32 %v4084, %v4166
  %4168 = vmatmul.f32.gmra.mxu0 %v4034
  %v4169 = vpop.f32.mrf.mxu0
  %v4170 = vadd.f32 %v4087, %v4169
  %4171 = vmatmul.f32.gmra.mxu0 %v4037
  %v4172 = vpop.f32.mrf.mxu0
  %v4173 = vadd.f32 %v4090, %v4172
  %4174 = vmatmul.f32.gmra.mxu0 %v4040
  %v4175 = vpop.f32.mrf.mxu0
  %v4176 = vadd.f32 %v4093, %v4175
  %4177 = vmatmul.f32.gmra.mxu0 %v4043
  %v4178 = vpop.f32.mrf.mxu0
  %v4179 = vadd.f32 %v4096, %v4178
  %4180 = vdwg.mxu0
  %v4181 = vadd.f32 %v4146, %v2859
  %v4182 = vadd.f32 %v4149, %v2859
  %v4183 = vadd.f32 %v4152, %v2859
  %v4184 = vadd.f32 %v4155, %v2859
  %v4185 = vadd.f32 %v4158, %v2859
  %v4186 = vadd.f32 %v4161, %v2859
  %v4187 = vadd.f32 %v4164, %v2859
  %v4188 = vadd.f32 %v4167, %v2859
  %v4189 = vadd.f32 %v4170, %v2859
  %v4190 = vadd.f32 %v4173, %v2859
  %v4191 = vadd.f32 %v4176, %v2859
  %v4192 = vadd.f32 %v4179, %v2859
  %v4193 = vxor.u32 %v4181, 2147483648
  %v4194 = vxor.u32 %v4182, 2147483648
  %v4195 = vxor.u32 %v4183, 2147483648
  %v4196 = vxor.u32 %v4184, 2147483648
  %v4197 = vxor.u32 %v4185, 2147483648
  %v4198 = vxor.u32 %v4186, 2147483648
  %v4199 = vxor.u32 %v4187, 2147483648
  %v4200 = vxor.u32 %v4188, 2147483648
  %v4201 = vxor.u32 %v4189, 2147483648
  %v4202 = vxor.u32 %v4190, 2147483648
  %v4203 = vxor.u32 %v4191, 2147483648
  %v4204 = vxor.u32 %v4192, 2147483648
  %v4205 = vmul.f32 %v4193, 1.442695
  %v4206 = vpow.pop %v4205
  %v4207 = vmul.f32 %v4194, 1.442695
  %v4208 = vpow.pop %v4207
  %v4209 = vmul.f32 %v4195, 1.442695
  %v4210 = vpow.pop %v4209
  %v4211 = vmul.f32 %v4196, 1.442695
  %v4212 = vpow.pop %v4211
  %v4213 = vmul.f32 %v4197, 1.442695
  %v4214 = vpow.pop %v4213
  %v4215 = vmul.f32 %v4198, 1.442695
  %v4216 = vpow.pop %v4215
  %v4217 = vmul.f32 %v4199, 1.442695
  %v4218 = vpow.pop %v4217
  %v4219 = vmul.f32 %v4200, 1.442695
  %v4220 = vpow.pop %v4219
  %v4221 = vmul.f32 %v4201, 1.442695
  %v4222 = vpow.pop %v4221
  %v4223 = vmul.f32 %v4202, 1.442695
  %v4224 = vpow.pop %v4223
  %v4225 = vmul.f32 %v4203, 1.442695
  %v4226 = vpow.pop %v4225
  %v4227 = vmul.f32 %v4204, 1.442695
  %v4228 = vpow.pop %v4227
  %v4229 = vadd.f32 %v4206, 1.0
  %v4230 = vadd.f32 %v4208, 1.0
  %v4231 = vadd.f32 %v4210, 1.0
  %v4232 = vadd.f32 %v4212, 1.0
  %v4233 = vadd.f32 %v4214, 1.0
  %v4234 = vadd.f32 %v4216, 1.0
  %v4235 = vadd.f32 %v4218, 1.0
  %v4236 = vadd.f32 %v4220, 1.0
  %v4237 = vadd.f32 %v4222, 1.0
  %v4238 = vadd.f32 %v4224, 1.0
  %v4239 = vadd.f32 %v4226, 1.0
  %v4240 = vadd.f32 %v4228, 1.0
  %v4241 = vrcp.pop %v4229
  %v4242 = vmul.f32 %v4229, %v4241
  %v4243 = vsub.f32 1.0, %v4242
  %v4244 = vmul.f32 %v4241, %v4243
  %v4245 = vadd.f32 %v4241, %v4244
  %vm4246 = vweird.f32 %v4229
  %vm4247 = vweird.f32 %v4241
  %vm4248 = vmor %vm4246, %vm4247
  %v4249 = vsel %vm4248, %v4241, %v4245
  %v4250 = vand.u32 2147483647, %v4229
  %vm4251 = vcmp.eq.f32.partialorder %v4250, 8.507059e+37
  %v4252 = vand.u32 %v4229, 2147483648
  %v4253 = vor.u32 1.1754944e-38, %v4252
  %v4254 = vsel %vm4251, %v4253, %v4249
  %v4255 = vmul.f32 1.0, %v4254
  %v4256 = vrcp.pop %v4230
  %v4257 = vmul.f32 %v4230, %v4256
  %v4258 = vsub.f32 1.0, %v4257
  %v4259 = vmul.f32 %v4256, %v4258
  %v4260 = vadd.f32 %v4256, %v4259
  %vm4261 = vweird.f32 %v4230
  %vm4262 = vweird.f32 %v4256
  %vm4263 = vmor %vm4261, %vm4262
  %v4264 = vsel %vm4263, %v4256, %v4260
  %v4265 = vand.u32 2147483647, %v4230
  %vm4266 = vcmp.eq.f32.partialorder %v4265, 8.507059e+37
  %v4267 = vand.u32 %v4230, 2147483648
  %v4268 = vor.u32 1.1754944e-38, %v4267
  %v4269 = vsel %vm4266, %v4268, %v4264
  %v4270 = vmul.f32 1.0, %v4269
  %v4271 = vrcp.pop %v4231
  %v4272 = vmul.f32 %v4231, %v4271
  %v4273 = vsub.f32 1.0, %v4272
  %v4274 = vmul.f32 %v4271, %v4273
  %v4275 = vadd.f32 %v4271, %v4274
  %vm4276 = vweird.f32 %v4231
  %vm4277 = vweird.f32 %v4271
  %vm4278 = vmor %vm4276, %vm4277
  %v4279 = vsel %vm4278, %v4271, %v4275
  %v4280 = vand.u32 2147483647, %v4231
  %vm4281 = vcmp.eq.f32.partialorder %v4280, 8.507059e+37
  %v4282 = vand.u32 %v4231, 2147483648
  %v4283 = vor.u32 1.1754944e-38, %v4282
  %v4284 = vsel %vm4281, %v4283, %v4279
  %v4285 = vmul.f32 1.0, %v4284
  %v4286 = vrcp.pop %v4232
  %v4287 = vmul.f32 %v4232, %v4286
  %v4288 = vsub.f32 1.0, %v4287
  %v4289 = vmul.f32 %v4286, %v4288
  %v4290 = vadd.f32 %v4286, %v4289
  %vm4291 = vweird.f32 %v4232
  %vm4292 = vweird.f32 %v4286
  %vm4293 = vmor %vm4291, %vm4292
  %v4294 = vsel %vm4293, %v4286, %v4290
  %v4295 = vand.u32 2147483647, %v4232
  %vm4296 = vcmp.eq.f32.partialorder %v4295, 8.507059e+37
  %v4297 = vand.u32 %v4232, 2147483648
  %v4298 = vor.u32 1.1754944e-38, %v4297
  %v4299 = vsel %vm4296, %v4298, %v4294
  %v4300 = vmul.f32 1.0, %v4299
  %v4301 = vrcp.pop %v4233
  %v4302 = vmul.f32 %v4233, %v4301
  %v4303 = vsub.f32 1.0, %v4302
  %v4304 = vmul.f32 %v4301, %v4303
  %v4305 = vadd.f32 %v4301, %v4304
  %vm4306 = vweird.f32 %v4233
  %vm4307 = vweird.f32 %v4301
  %vm4308 = vmor %vm4306, %vm4307
  %v4309 = vsel %vm4308, %v4301, %v4305
  %v4310 = vand.u32 2147483647, %v4233
  %vm4311 = vcmp.eq.f32.partialorder %v4310, 8.507059e+37
  %v4312 = vand.u32 %v4233, 2147483648
  %v4313 = vor.u32 1.1754944e-38, %v4312
  %v4314 = vsel %vm4311, %v4313, %v4309
  %v4315 = vmul.f32 1.0, %v4314
  %v4316 = vrcp.pop %v4234
  %v4317 = vmul.f32 %v4234, %v4316
  %v4318 = vsub.f32 1.0, %v4317
  %v4319 = vmul.f32 %v4316, %v4318
  %v4320 = vadd.f32 %v4316, %v4319
  %vm4321 = vweird.f32 %v4234
  %vm4322 = vweird.f32 %v4316
  %vm4323 = vmor %vm4321, %vm4322
  %v4324 = vsel %vm4323, %v4316, %v4320
  %v4325 = vand.u32 2147483647, %v4234
  %vm4326 = vcmp.eq.f32.partialorder %v4325, 8.507059e+37
  %v4327 = vand.u32 %v4234, 2147483648
  %v4328 = vor.u32 1.1754944e-38, %v4327
  %v4329 = vsel %vm4326, %v4328, %v4324
  %v4330 = vmul.f32 1.0, %v4329
  %v4331 = vrcp.pop %v4235
  %v4332 = vmul.f32 %v4235, %v4331
  %v4333 = vsub.f32 1.0, %v4332
  %v4334 = vmul.f32 %v4331, %v4333
  %v4335 = vadd.f32 %v4331, %v4334
  %vm4336 = vweird.f32 %v4235
  %vm4337 = vweird.f32 %v4331
  %vm4338 = vmor %vm4336, %vm4337
  %v4339 = vsel %vm4338, %v4331, %v4335
  %v4340 = vand.u32 2147483647, %v4235
  %vm4341 = vcmp.eq.f32.partialorder %v4340, 8.507059e+37
  %v4342 = vand.u32 %v4235, 2147483648
  %v4343 = vor.u32 1.1754944e-38, %v4342
  %v4344 = vsel %vm4341, %v4343, %v4339
  %v4345 = vmul.f32 1.0, %v4344
  %v4346 = vrcp.pop %v4236
  %v4347 = vmul.f32 %v4236, %v4346
  %v4348 = vsub.f32 1.0, %v4347
  %v4349 = vmul.f32 %v4346, %v4348
  %v4350 = vadd.f32 %v4346, %v4349
  %vm4351 = vweird.f32 %v4236
  %vm4352 = vweird.f32 %v4346
  %vm4353 = vmor %vm4351, %vm4352
  %v4354 = vsel %vm4353, %v4346, %v4350
  %v4355 = vand.u32 2147483647, %v4236
  %vm4356 = vcmp.eq.f32.partialorder %v4355, 8.507059e+37
  %v4357 = vand.u32 %v4236, 2147483648
  %v4358 = vor.u32 1.1754944e-38, %v4357
  %v4359 = vsel %vm4356, %v4358, %v4354
  %v4360 = vmul.f32 1.0, %v4359
  %v4361 = vrcp.pop %v4237
  %v4362 = vmul.f32 %v4237, %v4361
  %v4363 = vsub.f32 1.0, %v4362
  %v4364 = vmul.f32 %v4361, %v4363
  %v4365 = vadd.f32 %v4361, %v4364
  %vm4366 = vweird.f32 %v4237
  %vm4367 = vweird.f32 %v4361
  %vm4368 = vmor %vm4366, %vm4367
  %v4369 = vsel %vm4368, %v4361, %v4365
  %v4370 = vand.u32 2147483647, %v4237
  %vm4371 = vcmp.eq.f32.partialorder %v4370, 8.507059e+37
  %v4372 = vand.u32 %v4237, 2147483648
  %v4373 = vor.u32 1.1754944e-38, %v4372
  %v4374 = vsel %vm4371, %v4373, %v4369
  %v4375 = vmul.f32 1.0, %v4374
  %v4376 = vrcp.pop %v4238
  %v4377 = vmul.f32 %v4238, %v4376
  %v4378 = vsub.f32 1.0, %v4377
  %v4379 = vmul.f32 %v4376, %v4378
  %v4380 = vadd.f32 %v4376, %v4379
  %vm4381 = vweird.f32 %v4238
  %vm4382 = vweird.f32 %v4376
  %vm4383 = vmor %vm4381, %vm4382
  %v4384 = vsel %vm4383, %v4376, %v4380
  %v4385 = vand.u32 2147483647, %v4238
  %vm4386 = vcmp.eq.f32.partialorder %v4385, 8.507059e+37
  %v4387 = vand.u32 %v4238, 2147483648
  %v4388 = vor.u32 1.1754944e-38, %v4387
  %v4389 = vsel %vm4386, %v4388, %v4384
  %v4390 = vmul.f32 1.0, %v4389
  %v4391 = vrcp.pop %v4239
  %v4392 = vmul.f32 %v4239, %v4391
  %v4393 = vsub.f32 1.0, %v4392
  %v4394 = vmul.f32 %v4391, %v4393
  %v4395 = vadd.f32 %v4391, %v4394
  %vm4396 = vweird.f32 %v4239
  %vm4397 = vweird.f32 %v4391
  %vm4398 = vmor %vm4396, %vm4397
  %v4399 = vsel %vm4398, %v4391, %v4395
  %v4400 = vand.u32 2147483647, %v4239
  %vm4401 = vcmp.eq.f32.partialorder %v4400, 8.507059e+37
  %v4402 = vand.u32 %v4239, 2147483648
  %v4403 = vor.u32 1.1754944e-38, %v4402
  %v4404 = vsel %vm4401, %v4403, %v4399
  %v4405 = vmul.f32 1.0, %v4404
  %v4406 = vrcp.pop %v4240
  %v4407 = vmul.f32 %v4240, %v4406
  %v4408 = vsub.f32 1.0, %v4407
  %v4409 = vmul.f32 %v4406, %v4408
  %v4410 = vadd.f32 %v4406, %v4409
  %vm4411 = vweird.f32 %v4240
  %vm4412 = vweird.f32 %v4406
  %vm4413 = vmor %vm4411, %vm4412
  %v4414 = vsel %vm4413, %v4406, %v4410
  %v4415 = vand.u32 2147483647, %v4240
  %vm4416 = vcmp.eq.f32.partialorder %v4415, 8.507059e+37
  %v4417 = vand.u32 %v4240, 2147483648
  %v4418 = vor.u32 1.1754944e-38, %v4417
  %v4419 = vsel %vm4416, %v4418, %v4414
  %v4420 = vmul.f32 1.0, %v4419
  %vm4421 = vcmask 7168
  %4422 = vst.msk [vmem:[%s5] sm:$0xff] %vm4421, %v4255
  %4423 = vst.msk [vmem:[%s5 + $0x8] sm:$0xff] %vm4421, %v4270
  %4424 = vst.msk [vmem:[%s5 + $0x10] sm:$0xff] %vm4421, %v4285
  %4425 = vst.msk [vmem:[%s5 + $0x18] sm:$0xff] %vm4421, %v4300
  %4426 = vst.msk [vmem:[%s5 + $0x20] sm:$0xff] %vm4421, %v4315
  %4427 = vst.msk [vmem:[%s5 + $0x28] sm:$0xff] %vm4421, %v4330
  %4428 = vst.msk [vmem:[%s5 + $0x30] sm:$0xff] %vm4421, %v4345
  %4429 = vst.msk [vmem:[%s5 + $0x38] sm:$0xff] %vm4421, %v4360
  %4430 = vst.msk [vmem:[%s5 + $0x40] sm:$0xff] %vm4421, %v4375
  %4431 = vst.msk [vmem:[%s5 + $0x48] sm:$0xff] %vm4421, %v4390
  %4432 = vst.msk [vmem:[%s5 + $0x50] sm:$0xff] %vm4421, %v4405
  %4433 = vst.msk [vmem:[%s5 + $0x58] sm:$0xff] %vm4421, %v4420
  // Predicated region
  $region22: #{dec_forward.1} parent=0 // pred_check
    _
  $region23: #{dec_forward.1} parent=0 // pred_check_branch
    %4435 = sbr.rel (0) target = $region25
  $region24: #{dec_forward.1} parent=0 // pred_region
    _
  $region25: #{dec_forward.1} parent=0 // pred_fallthru
    _
  // Predicated region
  $region26: #{dec_forward.1} parent=0 // pred_check
    _
  $region27: #{dec_forward.1} parent=0 // pred_check_branch
    %4437 = sbr.rel (0) target = $region29
  $region28: #{dec_forward.1} parent=0 // pred_region
    _
  $region29: #{dec_forward.1} parent=0 // pred_fallthru
    _

</llo_original>
